<compile_context>
chip_gen: v6e
topology: v6e:2x2x1
jax: 0.10.0
libtpu: 0.0.40
codegen_flags: <defaults>
</compile_context>

<pallas_src>
import functools
import math

import jax
import jax.numpy as jnp
from jax import lax
from jax.experimental import pallas as pl
from jax.experimental.pallas import tpu as pltpu


# bf16 Gram matmul is MXU-native on v5e/v6e/v7x; switch to jnp.float32 if exact
# torch.cdist argmin/top_k parity is required on near-duplicate tokens.
_GRAM_DTYPE = jnp.bfloat16


def _row_tile(n):
    """Largest row tile that keeps lane-dense (1, TN) output blocks legal."""
    if n % 256 == 0:
        return 256
    if n % 128 == 0:
        return 128
    return n  # small / irregular N: whole-row block


def _pairwise_sq(xr, xf):
    """(TN, N) squared distances of pre-scaled rows xr against full xf (f32)."""
    g = lax.dot_general(
        xr.astype(_GRAM_DTYPE), xf.astype(_GRAM_DTYPE),
        (((1,), (1,)), ((), ())), preferred_element_type=jnp.float32)
    sq_r = jnp.sum(xr * xr, axis=-1, keepdims=True)          # (TN, 1)
    sq_f = jnp.sum(xf * xf, axis=-1, keepdims=True)          # (N, 1)
    return jnp.maximum(sq_r + jnp.transpose(sq_f) - 2.0 * g, 0.0)


# ----------------------------------------------------------------------------
# Kernel A: per row-tile — token_weight, k-NN local density, per-row dist^2 max.
# Distances stay in VMEM; outputs are lane-dense (1, TN) blocks of (B, 1, N).
# ----------------------------------------------------------------------------
def _stats_kernel(xr_ref, xf_ref, w_ref, b_ref, noise_ref,
                  wgt_ref, dens_ref, rowmax_ref, *, k, inv_sqrt_c):
    xr_raw = xr_ref[...].astype(jnp.float32)                  # (TN, C)
    xf_raw = xf_ref[...].astype(jnp.float32)                  # (N, C)

    # token_weight = exp(Linear(x)) — VPU reduction, bias from SMEM, lane-dense store.
    s = jnp.sum(xr_raw * w_ref[...], axis=-1, keepdims=True) + b_ref[0]   # (TN, 1)
    wgt_ref[...] = jnp.exp(jnp.transpose(s))                              # (1, TN)

    # squared (cdist / sqrt(C)): pre-scale x once instead of scaling the N^2 tile.
    xr = xr_raw * inv_sqrt_c
    xf = xf_raw * inv_sqrt_c
    e = _pairwise_sq(xr, xf)                                  # (TN, N) = dist^2

    rowmax_ref[...] = jnp.transpose(jnp.max(e, axis=-1, keepdims=True))   # (1, TN)

    # k-NN local density: k masked-min extraction passes (ties removed one at a
    # time via first-index mask, matching torch.topk(largest=False) semantics).
    tn, n = e.shape
    col = lax.broadcasted_iota(jnp.int32, (tn, n), 1)
    work = e
    ksum = jnp.zeros((tn, 1), jnp.float32)
    for _ in range(k):
        m = jnp.min(work, axis=-1, keepdims=True)             # (TN, 1)
        ksum = ksum + m
        hit = jnp.min(jnp.where(work <= m, col, n), axis=-1, keepdims=True)
        work = jnp.where(col == hit, jnp.float32(3e38), work)
    dens = jnp.exp(-(ksum * (1.0 / k)))                       # (TN, 1)
    dens_ref[...] = jnp.transpose(dens) + noise_ref[...] * 1e-6           # (1, TN)


def token_stats(x, score_w, score_b, noise, *, k, row_tile):
    B, N, C = x.shape
    nrt = N // row_tile
    kernel = functools.partial(_stats_kernel, k=k, inv_sqrt_c=1.0 / math.sqrt(C))
    lane = pl.BlockSpec((None, 1, row_tile), lambda b, r: (b, 0, r))
    return pl.pallas_call(
        kernel,
        out_shape=(
            jax.ShapeDtypeStruct((B, 1, N), jnp.float32),   # token_weight
            jax.ShapeDtypeStruct((B, 1, N), jnp.float32),   # density (+ noise)
            jax.ShapeDtypeStruct((B, 1, N), jnp.float32),   # per-row max of dist^2
        ),
        grid=(B, nrt),
        in_specs=[
            pl.BlockSpec((None, row_tile, C), lambda b, r: (b, r, 0)),
            pl.BlockSpec((None, N, C), lambda b, r: (b, 0, 0)),
            pl.BlockSpec((1, C), lambda b, r: (0, 0)),
            pl.BlockSpec(memory_space=pltpu.MemorySpace.SMEM),
            lane,
        ],
        out_specs=(lane, lane, lane),
        compiler_params=pltpu.CompilerParams(
            dimension_semantics=("parallel", "arbitrary")),
        # TODO(synk): for very large N also tile the column axis / raise
        # vmem_limit_bytes per generation (64 MiB physical on v7x).
    )(x, x, score_w, score_b, noise)


# ----------------------------------------------------------------------------
# Kernel B: DPC "distance-to-higher-density" score, row-tiled, squared distances
# recomputed in VMEM; fill value is the *global* per-batch max (SMEM scalar).
# ----------------------------------------------------------------------------
def _dpc_score_kernel(xr_ref, xf_ref, dens_full_ref, dens_tile_ref, e_max_ref,
                      score_ref, *, inv_sqrt_c):
    b = pl.program_id(0)
    xr = xr_ref[...].astype(jnp.float32) * inv_sqrt_c
    xf = xf_ref[...].astype(jnp.float32) * inv_sqrt_c
    e = _pairwise_sq(xr, xf)                                  # (TN, N)

    dens_row = dens_full_ref[...]                             # (1, N)
    dens_col = jnp.transpose(dens_tile_ref[...])              # (TN, 1)
    fill = e_max_ref[b]                                       # global max of dist^2
    masked = jnp.where(dens_row > dens_col, e, fill)
    e_min = jnp.min(masked, axis=-1, keepdims=True)           # (TN, 1)
    score_ref[...] = jnp.transpose(jnp.sqrt(e_min) * dens_col)            # (1, TN)


def dpc_score(x, density, e_max, *, row_tile):
    B, N, C = x.shape
    nrt = N // row_tile
    kernel = functools.partial(_dpc_score_kernel, inv_sqrt_c=1.0 / math.sqrt(C))
    return pl.pallas_call(
        kernel,
        out_shape=jax.ShapeDtypeStruct((B, 1, N), jnp.float32),
        grid=(B, nrt),
        in_specs=[
            pl.BlockSpec((None, row_tile, C), lambda b, r: (b, r, 0)),
            pl.BlockSpec((None, N, C), lambda b, r: (b, 0, 0)),
            pl.BlockSpec((None, 1, N), lambda b, r: (b, 0, 0)),
            pl.BlockSpec((None, 1, row_tile), lambda b, r: (b, 0, r)),
            pl.BlockSpec(memory_space=pltpu.MemorySpace.SMEM),
        ],
        out_specs=pl.BlockSpec((None, 1, row_tile), lambda b, r: (b, 0, r)),
        compiler_params=pltpu.CompilerParams(
            dimension_semantics=("parallel", "arbitrary")),
    )(x, x, density, density, e_max)


# ----------------------------------------------------------------------------
# Kernel C: token -> nearest-center assignment, recomputed fresh on gathered
# centers (no pass over the N^2 matrix); argmin done on-chip via min + iota.
# ----------------------------------------------------------------------------
def _assign_kernel(x_ref, c_ref, idx_ref):
    x = x_ref[...].astype(jnp.float32)                        # (N, C)
    c = c_ref[...].astype(jnp.float32)                        # (M, C)
    d2 = _pairwise_sq(x, c)                                   # (N, M)
    n, m = d2.shape
    mn = jnp.min(d2, axis=-1, keepdims=True)
    col = lax.broadcasted_iota(jnp.int32, (n, m), 1).astype(jnp.float32)
    idx = jnp.min(jnp.where(d2 <= mn, col, jnp.float32(m)), axis=-1, keepdims=True)
    idx_ref[...] = jnp.transpose(idx).astype(jnp.int32)       # (1, N) lane-dense


def assign_tokens(x, centers):
    B, N, C = x.shape
    M = centers.shape[1]
    return pl.pallas_call(
        _assign_kernel,
        out_shape=jax.ShapeDtypeStruct((B, 1, N), jnp.int32),
        grid=(B,),
        in_specs=[
            pl.BlockSpec((None, N, C), lambda b: (b, 0, 0)),
            pl.BlockSpec((None, M, C), lambda b: (b, 0, 0)),
        ],
        out_specs=pl.BlockSpec((None, 1, N), lambda b: (b, 0, 0)),
        compiler_params=pltpu.CompilerParams(dimension_semantics=("parallel",)),
    )(x, centers)


# ----------------------------------------------------------------------------
# Kernel D: merge_tokens (index_add) as a one-hot matmul; normalization applied
# to the small (M, C) result via an EUP reciprocal of the (M, 1) cluster weights.
# ----------------------------------------------------------------------------
def _merge_kernel(x_ref, idx_ref, w_ref, out_ref, *, cluster_num):
    x = x_ref[...].astype(jnp.float32)                        # (N, C)
    idx = idx_ref[...]                                        # (1, N) int32
    w = w_ref[...]                                            # (1, N) f32
    n = x.shape[0]
    m_iota = lax.broadcasted_iota(jnp.int32, (cluster_num, n), 0)
    aw = (m_iota == idx).astype(jnp.float32) * w              # (M, N) weighted one-hot
    all_w = jnp.sum(aw, axis=-1, keepdims=True) + 1e-6        # (M, 1)
    num = jnp.dot(aw, x, preferred_element_type=jnp.float32)  # (M, C)
    out_ref[...] = (num * pl.reciprocal(all_w, approx=True)).astype(out_ref.dtype)


def merge_tokens_pallas(x, idx_cluster, token_weight, cluster_num):
    B, N, C = x.shape
    kernel = functools.partial(_merge_kernel, cluster_num=cluster_num)
    return pl.pallas_call(
        kernel,
        out_shape=jax.ShapeDtypeStruct((B, cluster_num, C), x.dtype),
        grid=(B,),
        in_specs=[
            pl.BlockSpec((None, N, C), lambda b: (b, 0, 0)),
            pl.BlockSpec((None, 1, N), lambda b: (b, 0, 0)),
            pl.BlockSpec((None, 1, N), lambda b: (b, 0, 0)),
        ],
        out_specs=pl.BlockSpec((None, cluster_num, C), lambda b: (b, 0, 0)),
        compiler_params=pltpu.CompilerParams(dimension_semantics=("parallel",)),
    )(x, idx_cluster, token_weight)


# ----------------------------------------------------------------------------
# CTM forward (shape_embed=None path)
# ----------------------------------------------------------------------------
def ctm_forward(x, score_w, score_b, noise, *, cluster_num, k):
    B, N, C = x.shape
    tn = _row_tile(N)

    # token_weight, k-NN density (+noise), per-row max of dist^2   [Pallas A]
    token_weight, density, rowmax = token_stats(
        x, score_w, score_b, noise, k=k, row_tile=tn)
    e_max = jnp.max(rowmax, axis=(1, 2))                       # (B,) global dist^2 max

    # distance-to-higher-density * density                         [Pallas B]
    score = dpc_score(x, density, e_max, row_tile=tn)          # (B, 1, N)

    # cluster centers: top_k over score stays in JAX glue (irregular op).
    # TODO(synk): lax.top_k tie ordering may differ from torch.topk.
    _, index_down = lax.top_k(score[:, 0, :], cluster_num)     # (B, M)
    centers = jnp.take_along_axis(x, index_down[..., None], axis=1)   # (B, M, C)

    # nearest-center assignment (fresh distances, on-chip argmin)  [Pallas C]
    idx_cluster = assign_tokens(x, centers)[:, 0, :]           # (B, N) int32

    # centers get their own cluster id (scatter fixup — JAX glue).
    b_idx = jnp.broadcast_to(jnp.arange(B)[:, None], (B, cluster_num))
    m_idx = jnp.broadcast_to(
        jnp.arange(cluster_num, dtype=jnp.int32)[None, :], (B, cluster_num))
    idx_cluster = idx_cluster.at[b_idx, index_down].set(m_idx)

    # shape_embed is None -> x unchanged.  merge_tokens             [Pallas D]
    return merge_tokens_pallas(
        x, idx_cluster[:, None, :], token_weight, cluster_num)


if __name__ == "__main__":
    # Small shapes consistent with CTM.forward(x, T, H, W): N = T*H*W
    B, T, H, W = 2, 2, 4, 4
    N = T * H * W            # 32 tokens
    C = 32                   # embed_dim
    CLUSTER_NUM = 8
    K = 5

    key = jax.random.PRNGKey(0)
    kx, kw, kn = jax.random.split(key, 3)

    x = jax.random.normal(kx, (B, N, C), dtype=jnp.float32)

    # nn.Linear(embed_dim, 1): trunc_normal(std=0.02) weight, zero bias
    score_w = (jax.random.normal(kw, (1, C), dtype=jnp.float32) * 0.02).clip(-0.04, 0.04)
    score_b = jnp.zeros((1,), dtype=jnp.float32)

    # deterministic stand-in for torch.rand noise on the density (lane-dense layout)
    noise = jax.random.uniform(kn, (B, 1, N), dtype=jnp.float32)

    fwd = jax.jit(functools.partial(ctm_forward, cluster_num=CLUSTER_NUM, k=K))
    out = fwd(x, score_w, score_b, noise)
    jax.block_until_ready(out)

    assert out.shape == (B, CLUSTER_NUM, C), out.shape
    assert jnp.all(jnp.isfinite(out))
    print("KERNEL_OK")
</pallas_src>

<mosaic_0001>
module attributes {stable_mosaic.version = 11 : i64} {
  func.func @_dpc_score_kernel(%arg0: i32, %arg1: i32, %arg2: memref<1x32x32xf32, #tpu.memory_space<vmem>>, %arg3: memref<1x32x32xf32, #tpu.memory_space<vmem>>, %arg4: memref<1x1x32xf32, #tpu.memory_space<vmem>>, %arg5: memref<1x1x32xf32, #tpu.memory_space<vmem>>, %arg6: memref<2xf32, #tpu.memory_space<smem>>, %arg7: memref<1x1x32xf32, #tpu.memory_space<vmem>>) attributes {dimension_semantics = [#tpu.dimension_semantics<parallel>, #tpu.dimension_semantics<arbitrary>], iteration_bounds = array<i64: 2, 1>, scalar_prefetch = 0 : i64, scratch_operands = 0 : i64, tpu.core_type = #tpu.core_type<tc>, window_params = [{transform_indices = @transform_0, window_bounds = array<i64: 1, 32, 32>}, {transform_indices = @transform_1, window_bounds = array<i64: 1, 32, 32>}, {transform_indices = @transform_2, window_bounds = array<i64: 1, 1, 32>}, {transform_indices = @transform_3, window_bounds = array<i64: 1, 1, 32>}, {transform_indices = @transform_4, window_bounds = array<i64: 2>}, {transform_indices = @transform_5, window_bounds = array<i64: 1, 1, 32>}]} {
    %c0 = arith.constant 0 : index
    %c0_0 = arith.constant 0 : index
    %c0_1 = arith.constant 0 : index
    %0 = vector.load %arg2[%c0, %c0_0, %c0_1] : memref<1x32x32xf32, #tpu.memory_space<vmem>>, vector<1x32x32xf32>
    %1 = vector.shape_cast %0 : vector<1x32x32xf32> to vector<32x32xf32>
    %cst = arith.constant 0.176776692 : f32
    %2 = vector.broadcast %cst : f32 to vector<32x32xf32>
    %3 = arith.mulf %1, %2 : vector<32x32xf32>
    %c0_2 = arith.constant 0 : index
    %c0_3 = arith.constant 0 : index
    %c0_4 = arith.constant 0 : index
    %4 = vector.load %arg3[%c0_2, %c0_3, %c0_4] : memref<1x32x32xf32, #tpu.memory_space<vmem>>, vector<1x32x32xf32>
    %5 = vector.shape_cast %4 : vector<1x32x32xf32> to vector<32x32xf32>
    %cst_5 = arith.constant 0.176776692 : f32
    %6 = vector.broadcast %cst_5 : f32 to vector<32x32xf32>
    %7 = arith.mulf %5, %6 : vector<32x32xf32>
    %8 = arith.truncf %3 : vector<32x32xf32> to vector<32x32xbf16>
    %9 = arith.truncf %7 : vector<32x32xf32> to vector<32x32xbf16>
    %cst_6 = arith.constant dense<0.000000e+00> : vector<32x32xf32>
    %10 = tpu.matmul %8, %9, %cst_6 {dimension_numbers = #tpu.dot_dimension_numbers<[1], [1], [0], [0], [0, 0, 1, 0], [], []>} : vector<32x32xbf16>, vector<32x32xbf16>, vector<32x32xf32> -> vector<32x32xf32>
    %11 = arith.mulf %3, %3 : vector<32x32xf32>
    %cst_7 = arith.constant dense<0.000000e+00> : vector<32xf32>
    %12 = vector.multi_reduction <add>, %11, %cst_7 [1] : vector<32x32xf32> to vector<32xf32>
    %13 = vector.shape_cast %12 : vector<32xf32> to vector<32x1xf32>
    %14 = arith.mulf %7, %7 : vector<32x32xf32>
    %cst_8 = arith.constant dense<0.000000e+00> : vector<32xf32>
    %15 = vector.multi_reduction <add>, %14, %cst_8 [1] : vector<32x32xf32> to vector<32xf32>
    %16 = vector.shape_cast %15 : vector<32xf32> to vector<32x1xf32>
    %17 = tpu.transpose %16, [1, 0] : vector<32x1xf32> -> vector<1x32xf32>
    %18 = vector.broadcast %13 : vector<32x1xf32> to vector<32x32xf32>
    %19 = vector.broadcast %17 : vector<1x32xf32> to vector<32x32xf32>
    %20 = arith.addf %18, %19 : vector<32x32xf32>
    %cst_9 = arith.constant 2.000000e+00 : f32
    %21 = vector.broadcast %cst_9 : f32 to vector<32x32xf32>
    %22 = arith.mulf %21, %10 : vector<32x32xf32>
    %23 = arith.subf %20, %22 : vector<32x32xf32>
    %cst_10 = arith.constant 0.000000e+00 : f32
    %24 = vector.broadcast %cst_10 : f32 to vector<32x32xf32>
    %25 = arith.maximumf %23, %24 : vector<32x32xf32>
    %c0_11 = arith.constant 0 : index
    %c0_12 = arith.constant 0 : index
    %c0_13 = arith.constant 0 : index
    %26 = vector.load %arg4[%c0_11, %c0_12, %c0_13] : memref<1x1x32xf32, #tpu.memory_space<vmem>>, vector<1x1x32xf32>
    %27 = vector.shape_cast %26 : vector<1x1x32xf32> to vector<1x32xf32>
    %c0_14 = arith.constant 0 : index
    %c0_15 = arith.constant 0 : index
    %c0_16 = arith.constant 0 : index
    %28 = vector.load %arg5[%c0_14, %c0_15, %c0_16] : memref<1x1x32xf32, #tpu.memory_space<vmem>>, vector<1x1x32xf32>
    %29 = vector.shape_cast %28 : vector<1x1x32xf32> to vector<1x32xf32>
    %30 = tpu.transpose %29, [1, 0] : vector<1x32xf32> -> vector<32x1xf32>
    %31 = arith.index_cast %arg0 : i32 to index
    %32 = memref.load %arg6[%31] : memref<2xf32, #tpu.memory_space<smem>>
    %33 = vector.broadcast %27 : vector<1x32xf32> to vector<32x32xf32>
    %34 = vector.broadcast %30 : vector<32x1xf32> to vector<32x32xf32>
    %35 = arith.cmpf ogt, %33, %34 : vector<32x32xf32>
    %36 = vector.broadcast %32 : f32 to vector<32x32xf32>
    %37 = arith.select %35, %25, %36 : vector<32x32xi1>, vector<32x32xf32>
    %cst_17 = arith.constant dense<0x7F800000> : vector<32xf32>
    %38 = vector.multi_reduction <minimumf>, %37, %cst_17 [1] : vector<32x32xf32> to vector<32xf32>
    %39 = vector.shape_cast %38 : vector<32xf32> to vector<32x1xf32>
    %40 = math.sqrt %39 : vector<32x1xf32>
    %41 = arith.mulf %40, %30 : vector<32x1xf32>
    %42 = tpu.transpose %41, [1, 0] : vector<32x1xf32> -> vector<1x32xf32>
    %c0_18 = arith.constant 0 : index
    %c0_19 = arith.constant 0 : index
    %c0_20 = arith.constant 0 : index
    %43 = vector.load %arg7[%c0_18, %c0_19, %c0_20] : memref<1x1x32xf32, #tpu.memory_space<vmem>>, vector<1x1x32xf32>
    %44 = vector.shape_cast %43 : vector<1x1x32xf32> to vector<1x32xf32>
    %45 = vector.shape_cast %42 : vector<1x32xf32> to vector<1x1x32xf32>
    tpu.vector_store %arg7[%c0_18, %c0_19, %c0_20], %45 {strides = array<i32>} : memref<1x1x32xf32, #tpu.memory_space<vmem>>, vector<1x1x32xf32>,
    return
  }
  func.func @transform_0(%arg0: i32, %arg1: i32) -> (i32, i32, i32) {
    %c0_i32 = arith.constant 0 : i32
    %c0_i32_0 = arith.constant 0 : i32
    return %arg0, %arg1, %c0_i32 : i32, i32, i32
  }
  func.func @transform_1(%arg0: i32, %arg1: i32) -> (i32, i32, i32) {
    %c0_i32 = arith.constant 0 : i32
    %c0_i32_0 = arith.constant 0 : i32
    %c0_i32_1 = arith.constant 0 : i32
    return %arg0, %c0_i32, %c0_i32_0 : i32, i32, i32
  }
  func.func @transform_2(%arg0: i32, %arg1: i32) -> (i32, i32, i32) {
    %c0_i32 = arith.constant 0 : i32
    %c0_i32_0 = arith.constant 0 : i32
    %c0_i32_1 = arith.constant 0 : i32
    return %arg0, %c0_i32, %c0_i32_0 : i32, i32, i32
  }
  func.func @transform_3(%arg0: i32, %arg1: i32) -> (i32, i32, i32) {
    %c0_i32 = arith.constant 0 : i32
    %c0_i32_0 = arith.constant 0 : i32
    return %arg0, %c0_i32, %arg1 : i32, i32, i32
  }
  func.func @transform_4(%arg0: i32, %arg1: i32) -> i32 {
    %c0_i32 = arith.constant 0 : i32
    %c0_i32_0 = arith.constant 0 : i32
    return %c0_i32 : i32
  }
  func.func @transform_5(%arg0: i32, %arg1: i32) -> (i32, i32, i32) {
    %c0_i32 = arith.constant 0 : i32
    %c0_i32_0 = arith.constant 0 : i32
    return %arg0, %c0_i32, %arg1 : i32, i32, i32
  }
}

module attributes {stable_mosaic.version = 11 : i64} {
  func.func @_stats_kernel(%arg0: i32, %arg1: i32, %arg2: memref<1x32x32xf32, #tpu.memory_space<vmem>>, %arg3: memref<1x32x32xf32, #tpu.memory_space<vmem>>, %arg4: memref<1x32xf32, #tpu.memory_space<vmem>>, %arg5: memref<1xf32, #tpu.memory_space<smem>>, %arg6: memref<1x1x32xf32, #tpu.memory_space<vmem>>, %arg7: memref<1x1x32xf32, #tpu.memory_space<vmem>>, %arg8: memref<1x1x32xf32, #tpu.memory_space<vmem>>, %arg9: memref<1x1x32xf32, #tpu.memory_space<vmem>>) attributes {dimension_semantics = [#tpu.dimension_semantics<parallel>, #tpu.dimension_semantics<arbitrary>], iteration_bounds = array<i64: 2, 1>, scalar_prefetch = 0 : i64, scratch_operands = 0 : i64, tpu.core_type = #tpu.core_type<tc>, window_params = [{transform_indices = @transform_0, window_bounds = array<i64: 1, 32, 32>}, {transform_indices = @transform_1, window_bounds = array<i64: 1, 32, 32>}, {pipeline_mode = #tpu.pipeline_mode<synchronous>, transform_indices = @transform_2, window_bounds = array<i64: 1, 32>}, {transform_indices = @transform_3, window_bounds = array<i64: 1>}, {transform_indices = @transform_4, window_bounds = array<i64: 1, 1, 32>}, {transform_indices = @transform_5, window_bounds = array<i64: 1, 1, 32>}, {transform_indices = @transform_6, window_bounds = array<i64: 1, 1, 32>}, {transform_indices = @transform_7, window_bounds = array<i64: 1, 1, 32>}]} {
    %c0 = arith.constant 0 : index
    %c0_0 = arith.constant 0 : index
    %c0_1 = arith.constant 0 : index
    %0 = vector.load %arg2[%c0, %c0_0, %c0_1] : memref<1x32x32xf32, #tpu.memory_space<vmem>>, vector<1x32x32xf32>
    %1 = vector.shape_cast %0 : vector<1x32x32xf32> to vector<32x32xf32>
    %c0_2 = arith.constant 0 : index
    %c0_3 = arith.constant 0 : index
    %c0_4 = arith.constant 0 : index
    %2 = vector.load %arg3[%c0_2, %c0_3, %c0_4] : memref<1x32x32xf32, #tpu.memory_space<vmem>>, vector<1x32x32xf32>
    %3 = vector.shape_cast %2 : vector<1x32x32xf32> to vector<32x32xf32>
    %c0_5 = arith.constant 0 : index
    %c0_6 = arith.constant 0 : index
    %4 = vector.load %arg4[%c0_5, %c0_6] : memref<1x32xf32, #tpu.memory_space<vmem>>, vector<1x32xf32>
    %5 = vector.broadcast %4 : vector<1x32xf32> to vector<32x32xf32>
    %6 = arith.mulf %1, %5 : vector<32x32xf32>
    %cst = arith.constant dense<0.000000e+00> : vector<32xf32>
    %7 = vector.multi_reduction <add>, %6, %cst [1] : vector<32x32xf32> to vector<32xf32>
    %8 = vector.shape_cast %7 : vector<32xf32> to vector<32x1xf32>
    %c0_7 = arith.constant 0 : index
    %9 = memref.load %arg5[%c0_7] : memref<1xf32, #tpu.memory_space<smem>>
    %10 = vector.broadcast %9 : f32 to vector<32x1xf32>
    %11 = arith.addf %8, %10 : vector<32x1xf32>
    %12 = tpu.transpose %11, [1, 0] : vector<32x1xf32> -> vector<1x32xf32>
    %13 = math.exp %12 : vector<1x32xf32>
    %c0_8 = arith.constant 0 : index
    %c0_9 = arith.constant 0 : index
    %c0_10 = arith.constant 0 : index
    %14 = vector.load %arg7[%c0_8, %c0_9, %c0_10] : memref<1x1x32xf32, #tpu.memory_space<vmem>>, vector<1x1x32xf32>
    %15 = vector.shape_cast %14 : vector<1x1x32xf32> to vector<1x32xf32>
    %16 = vector.shape_cast %13 : vector<1x32xf32> to vector<1x1x32xf32>
    tpu.vector_store %arg7[%c0_8, %c0_9, %c0_10], %16 {strides = array<i32>} : memref<1x1x32xf32, #tpu.memory_space<vmem>>, vector<1x1x32xf32>,
    %cst_11 = arith.constant 0.176776692 : f32
    %17 = vector.broadcast %cst_11 : f32 to vector<32x32xf32>
    %18 = arith.mulf %1, %17 : vector<32x32xf32>
    %cst_12 = arith.constant 0.176776692 : f32
    %19 = vector.broadcast %cst_12 : f32 to vector<32x32xf32>
    %20 = arith.mulf %3, %19 : vector<32x32xf32>
    %21 = arith.truncf %18 : vector<32x32xf32> to vector<32x32xbf16>
    %22 = arith.truncf %20 : vector<32x32xf32> to vector<32x32xbf16>
    %cst_13 = arith.constant dense<0.000000e+00> : vector<32x32xf32>
    %23 = tpu.matmul %21, %22, %cst_13 {dimension_numbers = #tpu.dot_dimension_numbers<[1], [1], [0], [0], [0, 0, 1, 0], [], []>} : vector<32x32xbf16>, vector<32x32xbf16>, vector<32x32xf32> -> vector<32x32xf32>
    %24 = arith.mulf %18, %18 : vector<32x32xf32>
    %cst_14 = arith.constant dense<0.000000e+00> : vector<32xf32>
    %25 = vector.multi_reduction <add>, %24, %cst_14 [1] : vector<32x32xf32> to vector<32xf32>
    %26 = vector.shape_cast %25 : vector<32xf32> to vector<32x1xf32>
    %27 = arith.mulf %20, %20 : vector<32x32xf32>
    %cst_15 = arith.constant dense<0.000000e+00> : vector<32xf32>
    %28 = vector.multi_reduction <add>, %27, %cst_15 [1] : vector<32x32xf32> to vector<32xf32>
    %29 = vector.shape_cast %28 : vector<32xf32> to vector<32x1xf32>
    %30 = tpu.transpose %29, [1, 0] : vector<32x1xf32> -> vector<1x32xf32>
    %31 = vector.broadcast %26 : vector<32x1xf32> to vector<32x32xf32>
    %32 = vector.broadcast %30 : vector<1x32xf32> to vector<32x32xf32>
    %33 = arith.addf %31, %32 : vector<32x32xf32>
    %cst_16 = arith.constant 2.000000e+00 : f32
    %34 = vector.broadcast %cst_16 : f32 to vector<32x32xf32>
    %35 = arith.mulf %34, %23 : vector<32x32xf32>
    %36 = arith.subf %33, %35 : vector<32x32xf32>
    %cst_17 = arith.constant 0.000000e+00 : f32
    %37 = vector.broadcast %cst_17 : f32 to vector<32x32xf32>
    %38 = arith.maximumf %36, %37 : vector<32x32xf32>
    %cst_18 = arith.constant dense<0xFF800000> : vector<32xf32>
    %39 = vector.multi_reduction <maximumf>, %38, %cst_18 [1] : vector<32x32xf32> to vector<32xf32>
    %40 = vector.shape_cast %39 : vector<32xf32> to vector<32x1xf32>
    %41 = tpu.transpose %40, [1, 0] : vector<32x1xf32> -> vector<1x32xf32>
    %c0_19 = arith.constant 0 : index
    %c0_20 = arith.constant 0 : index
    %c0_21 = arith.constant 0 : index
    %42 = vector.load %arg9[%c0_19, %c0_20, %c0_21] : memref<1x1x32xf32, #tpu.memory_space<vmem>>, vector<1x1x32xf32>
    %43 = vector.shape_cast %42 : vector<1x1x32xf32> to vector<1x32xf32>
    %44 = vector.shape_cast %41 : vector<1x32xf32> to vector<1x1x32xf32>
    tpu.vector_store %arg9[%c0_19, %c0_20, %c0_21], %44 {strides = array<i32>} : memref<1x1x32xf32, #tpu.memory_space<vmem>>, vector<1x1x32xf32>,
    %45 = tpu.iota {dimensions = array<i32: 1>} : vector<32x32xi32>
    %cst_22 = arith.constant 0.000000e+00 : f32
    %46 = vector.broadcast %cst_22 : f32 to vector<32x1xf32>
    %cst_23 = arith.constant dense<0x7F800000> : vector<32xf32>
    %47 = vector.multi_reduction <minimumf>, %38, %cst_23 [1] : vector<32x32xf32> to vector<32xf32>
    %48 = vector.shape_cast %47 : vector<32xf32> to vector<32x1xf32>
    %49 = arith.addf %46, %48 : vector<32x1xf32>
    %50 = vector.broadcast %48 : vector<32x1xf32> to vector<32x32xf32>
    %51 = arith.cmpf ole, %38, %50 : vector<32x32xf32>
    %c32_i32 = arith.constant 32 : i32
    %52 = vector.broadcast %c32_i32 : i32 to vector<32x32xi32>
    %53 = arith.select %51, %45, %52 : vector<32x32xi1>, vector<32x32xi32>
    %cst_24 = arith.constant dense<2147483647> : vector<32xi32>
    %54 = vector.multi_reduction <minsi>, %53, %cst_24 [1] : vector<32x32xi32> to vector<32xi32>
    %55 = vector.shape_cast %54 : vector<32xi32> to vector<32x1xi32>
    %56 = vector.broadcast %55 : vector<32x1xi32> to vector<32x32xi32>
    %57 = arith.cmpi eq, %45, %56 : vector<32x32xi32>
    %cst_25 = arith.constant 3.000000e+38 : f32
    %58 = vector.broadcast %cst_25 : f32 to vector<32x32xf32>
    %59 = arith.select %57, %58, %38 : vector<32x32xi1>, vector<32x32xf32>
    %cst_26 = arith.constant dense<0x7F800000> : vector<32xf32>
    %60 = vector.multi_reduction <minimumf>, %59, %cst_26 [1] : vector<32x32xf32> to vector<32xf32>
    %61 = vector.shape_cast %60 : vector<32xf32> to vector<32x1xf32>
    %62 = arith.addf %49, %61 : vector<32x1xf32>
    %63 = vector.broadcast %61 : vector<32x1xf32> to vector<32x32xf32>
    %64 = arith.cmpf ole, %59, %63 : vector<32x32xf32>
    %c32_i32_27 = arith.constant 32 : i32
    %65 = vector.broadcast %c32_i32_27 : i32 to vector<32x32xi32>
    %66 = arith.select %64, %45, %65 : vector<32x32xi1>, vector<32x32xi32>
    %cst_28 = arith.constant dense<2147483647> : vector<32xi32>
    %67 = vector.multi_reduction <minsi>, %66, %cst_28 [1] : vector<32x32xi32> to vector<32xi32>
    %68 = vector.shape_cast %67 : vector<32xi32> to vector<32x1xi32>
    %69 = vector.broadcast %68 : vector<32x1xi32> to vector<32x32xi32>
    %70 = arith.cmpi eq, %45, %69 : vector<32x32xi32>
    %cst_29 = arith.constant 3.000000e+38 : f32
    %71 = vector.broadcast %cst_29 : f32 to vector<32x32xf32>
    %72 = arith.select %70, %71, %59 : vector<32x32xi1>, vector<32x32xf32>
    %cst_30 = arith.constant dense<0x7F800000> : vector<32xf32>
    %73 = vector.multi_reduction <minimumf>, %72, %cst_30 [1] : vector<32x32xf32> to vector<32xf32>
    %74 = vector.shape_cast %73 : vector<32xf32> to vector<32x1xf32>
    %75 = arith.addf %62, %74 : vector<32x1xf32>
    %76 = vector.broadcast %74 : vector<32x1xf32> to vector<32x32xf32>
    %77 = arith.cmpf ole, %72, %76 : vector<32x32xf32>
    %c32_i32_31 = arith.constant 32 : i32
    %78 = vector.broadcast %c32_i32_31 : i32 to vector<32x32xi32>
    %79 = arith.select %77, %45, %78 : vector<32x32xi1>, vector<32x32xi32>
    %cst_32 = arith.constant dense<2147483647> : vector<32xi32>
    %80 = vector.multi_reduction <minsi>, %79, %cst_32 [1] : vector<32x32xi32> to vector<32xi32>
    %81 = vector.shape_cast %80 : vector<32xi32> to vector<32x1xi32>
    %82 = vector.broadcast %81 : vector<32x1xi32> to vector<32x32xi32>
    %83 = arith.cmpi eq, %45, %82 : vector<32x32xi32>
    %cst_33 = arith.constant 3.000000e+38 : f32
    %84 = vector.broadcast %cst_33 : f32 to vector<32x32xf32>
    %85 = arith.select %83, %84, %72 : vector<32x32xi1>, vector<32x32xf32>
    %cst_34 = arith.constant dense<0x7F800000> : vector<32xf32>
    %86 = vector.multi_reduction <minimumf>, %85, %cst_34 [1] : vector<32x32xf32> to vector<32xf32>
    %87 = vector.shape_cast %86 : vector<32xf32> to vector<32x1xf32>
    %88 = arith.addf %75, %87 : vector<32x1xf32>
    %89 = vector.broadcast %87 : vector<32x1xf32> to vector<32x32xf32>
    %90 = arith.cmpf ole, %85, %89 : vector<32x32xf32>
    %c32_i32_35 = arith.constant 32 : i32
    %91 = vector.broadcast %c32_i32_35 : i32 to vector<32x32xi32>
    %92 = arith.select %90, %45, %91 : vector<32x32xi1>, vector<32x32xi32>
    %cst_36 = arith.constant dense<2147483647> : vector<32xi32>
    %93 = vector.multi_reduction <minsi>, %92, %cst_36 [1] : vector<32x32xi32> to vector<32xi32>
    %94 = vector.shape_cast %93 : vector<32xi32> to vector<32x1xi32>
    %95 = vector.broadcast %94 : vector<32x1xi32> to vector<32x32xi32>
    %96 = arith.cmpi eq, %45, %95 : vector<32x32xi32>
    %cst_37 = arith.constant 3.000000e+38 : f32
    %97 = vector.broadcast %cst_37 : f32 to vector<32x32xf32>
    %98 = arith.select %96, %97, %85 : vector<32x32xi1>, vector<32x32xf32>
    %cst_38 = arith.constant dense<0x7F800000> : vector<32xf32>
    %99 = vector.multi_reduction <minimumf>, %98, %cst_38 [1] : vector<32x32xf32> to vector<32xf32>
    %100 = vector.shape_cast %99 : vector<32xf32> to vector<32x1xf32>
    %101 = arith.addf %88, %100 : vector<32x1xf32>
    %cst_39 = arith.constant 2.000000e-01 : f32
    %102 = vector.broadcast %cst_39 : f32 to vector<32x1xf32>
    %103 = arith.mulf %101, %102 : vector<32x1xf32>
    %cst_40 = arith.constant 0.000000e+00 : f32
    %104 = vector.broadcast %cst_40 : f32 to vector<32x1xf32>
    %105 = arith.subf %104, %103 : vector<32x1xf32>
    %106 = math.exp %105 : vector<32x1xf32>
    %107 = tpu.transpose %106, [1, 0] : vector<32x1xf32> -> vector<1x32xf32>
    %c0_41 = arith.constant 0 : index
    %c0_42 = arith.constant 0 : index
    %c0_43 = arith.constant 0 : index
    %108 = vector.load %arg6[%c0_41, %c0_42, %c0_43] : memref<1x1x32xf32, #tpu.memory_space<vmem>>, vector<1x1x32xf32>
    %109 = vector.shape_cast %108 : vector<1x1x32xf32> to vector<1x32xf32>
    %cst_44 = arith.constant 9.99999997E-7 : f32
    %110 = vector.broadcast %cst_44 : f32 to vector<1x32xf32>
    %111 = arith.mulf %109, %110 : vector<1x32xf32>
    %112 = arith.addf %107, %111 : vector<1x32xf32>
    %c0_45 = arith.constant 0 : index
    %c0_46 = arith.constant 0 : index
    %c0_47 = arith.constant 0 : index
    %113 = vector.load %arg8[%c0_45, %c0_46, %c0_47] : memref<1x1x32xf32, #tpu.memory_space<vmem>>, vector<1x1x32xf32>
    %114 = vector.shape_cast %113 : vector<1x1x32xf32> to vector<1x32xf32>
    %115 = vector.shape_cast %112 : vector<1x32xf32> to vector<1x1x32xf32>
    tpu.vector_store %arg8[%c0_45, %c0_46, %c0_47], %115 {strides = array<i32>} : memref<1x1x32xf32, #tpu.memory_space<vmem>>, vector<1x1x32xf32>,
    return
  }
  func.func @transform_0(%arg0: i32, %arg1: i32) -> (i32, i32, i32) {
    %c0_i32 = arith.constant 0 : i32
    %c0_i32_0 = arith.constant 0 : i32
    return %arg0, %arg1, %c0_i32 : i32, i32, i32
  }
  func.func @transform_1(%arg0: i32, %arg1: i32) -> (i32, i32, i32) {
    %c0_i32 = arith.constant 0 : i32
    %c0_i32_0 = arith.constant 0 : i32
    %c0_i32_1 = arith.constant 0 : i32
    return %arg0, %c0_i32, %c0_i32_0 : i32, i32, i32
  }
  func.func @transform_2(%arg0: i32, %arg1: i32) -> (i32, i32) {
    %c0_i32 = arith.constant 0 : i32
    %c0_i32_0 = arith.constant 0 : i32
    %c0_i32_1 = arith.constant 0 : i32
    return %c0_i32, %c0_i32_0 : i32, i32
  }
  func.func @transform_3(%arg0: i32, %arg1: i32) -> i32 {
    %c0_i32 = arith.constant 0 : i32
    %c0_i32_0 = arith.constant 0 : i32
    return %c0_i32 : i32
  }
  func.func @transform_4(%arg0: i32, %arg1: i32) -> (i32, i32, i32) {
    %c0_i32 = arith.constant 0 : i32
    %c0_i32_0 = arith.constant 0 : i32
    return %arg0, %c0_i32, %arg1 : i32, i32, i32
  }
  func.func @transform_5(%arg0: i32, %arg1: i32) -> (i32, i32, i32) {
    %c0_i32 = arith.constant 0 : i32
    %c0_i32_0 = arith.constant 0 : i32
    return %arg0, %c0_i32, %arg1 : i32, i32, i32
  }
  func.func @transform_6(%arg0: i32, %arg1: i32) -> (i32, i32, i32) {
    %c0_i32 = arith.constant 0 : i32
    %c0_i32_0 = arith.constant 0 : i32
    return %arg0, %c0_i32, %arg1 : i32, i32, i32
  }
  func.func @transform_7(%arg0: i32, %arg1: i32) -> (i32, i32, i32) {
    %c0_i32 = arith.constant 0 : i32
    %c0_i32_0 = arith.constant 0 : i32
    return %arg0, %c0_i32, %arg1 : i32, i32, i32
  }
}

module attributes {stable_mosaic.version = 11 : i64} {
  func.func @_assign_kernel(%arg0: i32, %arg1: memref<1x32x32xf32, #tpu.memory_space<vmem>>, %arg2: memref<1x8x32xf32, #tpu.memory_space<vmem>>, %arg3: memref<1x1x32xi32, #tpu.memory_space<vmem>>) attributes {dimension_semantics = [#tpu.dimension_semantics<parallel>], iteration_bounds = array<i64: 2>, scalar_prefetch = 0 : i64, scratch_operands = 0 : i64, tpu.core_type = #tpu.core_type<tc>, window_params = [{transform_indices = @transform_0, window_bounds = array<i64: 1, 32, 32>}, {transform_indices = @transform_1, window_bounds = array<i64: 1, 8, 32>}, {transform_indices = @transform_2, window_bounds = array<i64: 1, 1, 32>}]} {
    %c0 = arith.constant 0 : index
    %c0_0 = arith.constant 0 : index
    %c0_1 = arith.constant 0 : index
    %0 = vector.load %arg1[%c0, %c0_0, %c0_1] : memref<1x32x32xf32, #tpu.memory_space<vmem>>, vector<1x32x32xf32>
    %1 = vector.shape_cast %0 : vector<1x32x32xf32> to vector<32x32xf32>
    %c0_2 = arith.constant 0 : index
    %c0_3 = arith.constant 0 : index
    %c0_4 = arith.constant 0 : index
    %2 = vector.load %arg2[%c0_2, %c0_3, %c0_4] : memref<1x8x32xf32, #tpu.memory_space<vmem>>, vector<1x8x32xf32>
    %3 = vector.shape_cast %2 : vector<1x8x32xf32> to vector<8x32xf32>
    %4 = arith.truncf %1 : vector<32x32xf32> to vector<32x32xbf16>
    %5 = arith.truncf %3 : vector<8x32xf32> to vector<8x32xbf16>
    %cst = arith.constant dense<0.000000e+00> : vector<32x8xf32>
    %6 = tpu.matmul %4, %5, %cst {dimension_numbers = #tpu.dot_dimension_numbers<[1], [1], [0], [0], [0, 0, 1, 0], [], []>} : vector<32x32xbf16>, vector<8x32xbf16>, vector<32x8xf32> -> vector<32x8xf32>
    %7 = arith.mulf %1, %1 : vector<32x32xf32>
    %cst_5 = arith.constant dense<0.000000e+00> : vector<32xf32>
    %8 = vector.multi_reduction <add>, %7, %cst_5 [1] : vector<32x32xf32> to vector<32xf32>
    %9 = vector.shape_cast %8 : vector<32xf32> to vector<32x1xf32>
    %10 = arith.mulf %3, %3 : vector<8x32xf32>
    %cst_6 = arith.constant dense<0.000000e+00> : vector<8xf32>
    %11 = vector.multi_reduction <add>, %10, %cst_6 [1] : vector<8x32xf32> to vector<8xf32>
    %12 = vector.shape_cast %11 : vector<8xf32> to vector<8x1xf32>
    %13 = tpu.transpose %12, [1, 0] : vector<8x1xf32> -> vector<1x8xf32>
    %14 = vector.broadcast %9 : vector<32x1xf32> to vector<32x8xf32>
    %15 = vector.broadcast %13 : vector<1x8xf32> to vector<32x8xf32>
    %16 = arith.addf %14, %15 : vector<32x8xf32>
    %cst_7 = arith.constant 2.000000e+00 : f32
    %17 = vector.broadcast %cst_7 : f32 to vector<32x8xf32>
    %18 = arith.mulf %17, %6 : vector<32x8xf32>
    %19 = arith.subf %16, %18 : vector<32x8xf32>
    %cst_8 = arith.constant 0.000000e+00 : f32
    %20 = vector.broadcast %cst_8 : f32 to vector<32x8xf32>
    %21 = arith.maximumf %19, %20 : vector<32x8xf32>
    %cst_9 = arith.constant dense<0x7F800000> : vector<32xf32>
    %22 = vector.multi_reduction <minimumf>, %21, %cst_9 [1] : vector<32x8xf32> to vector<32xf32>
    %23 = vector.shape_cast %22 : vector<32xf32> to vector<32x1xf32>
    %24 = tpu.iota {dimensions = array<i32: 1>} : vector<32x8xi32>
    %25 = arith.sitofp %24 : vector<32x8xi32> to vector<32x8xf32>
    %26 = vector.broadcast %23 : vector<32x1xf32> to vector<32x8xf32>
    %27 = arith.cmpf ole, %21, %26 : vector<32x8xf32>
    %cst_10 = arith.constant 8.000000e+00 : f32
    %28 = vector.broadcast %cst_10 : f32 to vector<32x8xf32>
    %29 = arith.select %27, %25, %28 : vector<32x8xi1>, vector<32x8xf32>
    %cst_11 = arith.constant dense<0x7F800000> : vector<32xf32>
    %30 = vector.multi_reduction <minimumf>, %29, %cst_11 [1] : vector<32x8xf32> to vector<32xf32>
    %31 = vector.shape_cast %30 : vector<32xf32> to vector<32x1xf32>
    %32 = tpu.transpose %31, [1, 0] : vector<32x1xf32> -> vector<1x32xf32>
    %33 = arith.fptosi %32 : vector<1x32xf32> to vector<1x32xi32>
    %c0_12 = arith.constant 0 : index
    %c0_13 = arith.constant 0 : index
    %c0_14 = arith.constant 0 : index
    %34 = vector.load %arg3[%c0_12, %c0_13, %c0_14] : memref<1x1x32xi32, #tpu.memory_space<vmem>>, vector<1x1x32xi32>
    %35 = vector.shape_cast %34 : vector<1x1x32xi32> to vector<1x32xi32>
    %36 = vector.shape_cast %33 : vector<1x32xi32> to vector<1x1x32xi32>
    tpu.vector_store %arg3[%c0_12, %c0_13, %c0_14], %36 {strides = array<i32>} : memref<1x1x32xi32, #tpu.memory_space<vmem>>, vector<1x1x32xi32>,
    return
  }
  func.func @transform_0(%arg0: i32) -> (i32, i32, i32) {
    %c0_i32 = arith.constant 0 : i32
    %c0_i32_0 = arith.constant 0 : i32
    %c0_i32_1 = arith.constant 0 : i32
    return %arg0, %c0_i32, %c0_i32_0 : i32, i32, i32
  }
  func.func @transform_1(%arg0: i32) -> (i32, i32, i32) {
    %c0_i32 = arith.constant 0 : i32
    %c0_i32_0 = arith.constant 0 : i32
    %c0_i32_1 = arith.constant 0 : i32
    return %arg0, %c0_i32, %c0_i32_0 : i32, i32, i32
  }
  func.func @transform_2(%arg0: i32) -> (i32, i32, i32) {
    %c0_i32 = arith.constant 0 : i32
    %c0_i32_0 = arith.constant 0 : i32
    %c0_i32_1 = arith.constant 0 : i32
    return %arg0, %c0_i32, %c0_i32_0 : i32, i32, i32
  }
}

module attributes {stable_mosaic.version = 11 : i64} {
  func.func @_merge_kernel(%arg0: i32, %arg1: memref<1x32x32xf32, #tpu.memory_space<vmem>>, %arg2: memref<1x1x32xi32, #tpu.memory_space<vmem>>, %arg3: memref<1x1x32xf32, #tpu.memory_space<vmem>>, %arg4: memref<1x8x32xf32, #tpu.memory_space<vmem>>) attributes {dimension_semantics = [#tpu.dimension_semantics<parallel>], iteration_bounds = array<i64: 2>, scalar_prefetch = 0 : i64, scratch_operands = 0 : i64, tpu.core_type = #tpu.core_type<tc>, window_params = [{transform_indices = @transform_0, window_bounds = array<i64: 1, 32, 32>}, {transform_indices = @transform_1, window_bounds = array<i64: 1, 1, 32>}, {transform_indices = @transform_2, window_bounds = array<i64: 1, 1, 32>}, {transform_indices = @transform_3, window_bounds = array<i64: 1, 8, 32>}]} {
    %c0 = arith.constant 0 : index
    %c0_0 = arith.constant 0 : index
    %c0_1 = arith.constant 0 : index
    %0 = vector.load %arg1[%c0, %c0_0, %c0_1] : memref<1x32x32xf32, #tpu.memory_space<vmem>>, vector<1x32x32xf32>
    %1 = vector.shape_cast %0 : vector<1x32x32xf32> to vector<32x32xf32>
    %c0_2 = arith.constant 0 : index
    %c0_3 = arith.constant 0 : index
    %c0_4 = arith.constant 0 : index
    %2 = vector.load %arg2[%c0_2, %c0_3, %c0_4] : memref<1x1x32xi32, #tpu.memory_space<vmem>>, vector<1x1x32xi32>
    %3 = vector.shape_cast %2 : vector<1x1x32xi32> to vector<1x32xi32>
    %c0_5 = arith.constant 0 : index
    %c0_6 = arith.constant 0 : index
    %c0_7 = arith.constant 0 : index
    %4 = vector.load %arg3[%c0_5, %c0_6, %c0_7] : memref<1x1x32xf32, #tpu.memory_space<vmem>>, vector<1x1x32xf32>
    %5 = vector.shape_cast %4 : vector<1x1x32xf32> to vector<1x32xf32>
    %6 = tpu.iota {dimensions = array<i32: 0>} : vector<8x32xi32>
    %7 = vector.broadcast %3 : vector<1x32xi32> to vector<8x32xi32>
    %8 = arith.cmpi eq, %6, %7 : vector<8x32xi32>
    %9 = arith.extui %8 : vector<8x32xi1> to vector<8x32xi32>
    %10 = arith.sitofp %9 : vector<8x32xi32> to vector<8x32xf32>
    %11 = vector.broadcast %5 : vector<1x32xf32> to vector<8x32xf32>
    %12 = arith.mulf %10, %11 : vector<8x32xf32>
    %cst = arith.constant dense<0.000000e+00> : vector<8xf32>
    %13 = vector.multi_reduction <add>, %12, %cst [1] : vector<8x32xf32> to vector<8xf32>
    %14 = vector.shape_cast %13 : vector<8xf32> to vector<8x1xf32>
    %cst_8 = arith.constant 9.99999997E-7 : f32
    %15 = vector.broadcast %cst_8 : f32 to vector<8x1xf32>
    %16 = arith.addf %14, %15 : vector<8x1xf32>
    %cst_9 = arith.constant dense<0.000000e+00> : vector<8x32xf32>
    %17 = tpu.matmul %12, %1, %cst_9 {dimension_numbers = #tpu.dot_dimension_numbers<[1], [0], [0], [1], [0, 0, 1, 1], [], []>} : vector<8x32xf32>, vector<32x32xf32>, vector<8x32xf32> -> vector<8x32xf32>
    %18 = tpu.reciprocal %16 {approx = true} : vector<8x1xf32> -> vector<8x1xf32>
    %19 = vector.broadcast %18 : vector<8x1xf32> to vector<8x32xf32>
    %20 = arith.mulf %17, %19 : vector<8x32xf32>
    %c0_10 = arith.constant 0 : index
    %c0_11 = arith.constant 0 : index
    %c0_12 = arith.constant 0 : index
    %21 = vector.load %arg4[%c0_10, %c0_11, %c0_12] : memref<1x8x32xf32, #tpu.memory_space<vmem>>, vector<1x8x32xf32>
    %22 = vector.shape_cast %21 : vector<1x8x32xf32> to vector<8x32xf32>
    %23 = vector.shape_cast %20 : vector<8x32xf32> to vector<1x8x32xf32>
    tpu.vector_store %arg4[%c0_10, %c0_11, %c0_12], %23 {strides = array<i32>} : memref<1x8x32xf32, #tpu.memory_space<vmem>>, vector<1x8x32xf32>,
    return
  }
  func.func @transform_0(%arg0: i32) -> (i32, i32, i32) {
    %c0_i32 = arith.constant 0 : i32
    %c0_i32_0 = arith.constant 0 : i32
    %c0_i32_1 = arith.constant 0 : i32
    return %arg0, %c0_i32, %c0_i32_0 : i32, i32, i32
  }
  func.func @transform_1(%arg0: i32) -> (i32, i32, i32) {
    %c0_i32 = arith.constant 0 : i32
    %c0_i32_0 = arith.constant 0 : i32
    %c0_i32_1 = arith.constant 0 : i32
    return %arg0, %c0_i32, %c0_i32_0 : i32, i32, i32
  }
  func.func @transform_2(%arg0: i32) -> (i32, i32, i32) {
    %c0_i32 = arith.constant 0 : i32
    %c0_i32_0 = arith.constant 0 : i32
    %c0_i32_1 = arith.constant 0 : i32
    return %arg0, %c0_i32, %c0_i32_0 : i32, i32, i32
  }
  func.func @transform_3(%arg0: i32) -> (i32, i32, i32) {
    %c0_i32 = arith.constant 0 : i32
    %c0_i32_0 = arith.constant 0 : i32
    %c0_i32_1 = arith.constant 0 : i32
    return %arg0, %c0_i32, %c0_i32_0 : i32, i32, i32
  }
}

</mosaic_0001>

<llo_original>
// kernel: ctm_forward.5
$region0: #{ctm_forward.5}
  #allocation0 [shape = 'u32[]', space=smem, size = 0x4, offset = 0x4, fixed_abs, tag = 'smem constant byte address 0x4 - core index']
  #allocation1 [shape = 'u32[144,128]{1,0:T(1,128)}', space=vmem, size = 0x12000, scoped, tag = 'internal scratch']
  %s0 = inlined_call_operand.vmem [shape: f32[2,32,32], index: 0, kind: input, shape index: {}, may-alias: {0,1}]
  %s1 = inlined_call_operand.vmem [shape: f32[2,32,32], index: 1, kind: input, shape index: {}, may-alias: {0,1}]
  %s2 = inlined_call_operand.vmem [shape: f32[2,1,32], index: 2, kind: input, shape index: {}, may-alias: {2,3}]
  %s3 = inlined_call_operand.vmem [shape: f32[2,1,32], index: 3, kind: input, shape index: {}, may-alias: {2,3}]
  %s4 = inlined_call_operand.vmem [shape: f32[2], index: 4, kind: input, shape index: {}]
  %s5 = inlined_call_operand.vmem [shape: f32[2,1,32], index: 5, kind: output, shape index: {}]
  %s6 = sld [smem:[#allocation0]]
  $region57: #{ctm_forward.5} parent=0
    _
  %s8 = ssub.s32 1, %s6
  %s9 = scalar_select 0, %s8, %s6
  $region1: #{ctm_forward.5} parent=0
    #allocation2 [shape = 'u8[512]{0}', space=smem, size = 0x200, scoped, tag = 'input window, operand 4, single buffered']
    #allocation3 [shape = 's32[2]{0}', space=sflag, size = 0x8, scoped, tag = 'scoped memory for ctm_forward.5']
    %10 = vsyncpa [#allocation3], 0
    loop: start=0, step=1, limit=4
    $region2: #{ctm_forward.5} parent=1 // loop_pre_header
      _
    $region3: #{ctm_forward.5} parent=1 // loop_header
      %s12 = sphi 0, %s16
      %p13 = scmp.ge.s32.totalorder %s12, 4
      %s19 = sphi 0, %s31
      %s20 = sphi 0, %s27
      %s21 = sphi 0, %s19
      %s22 = sphi 0, %s20
      %s23 = sphi 0, %s21
      %s24 = sphi 0, %s22
      %s36 = sphi 0, %s38
      %s39 = sphi 0, %s36
      %s40 = sphi 0, %s39
      %s56 = sphi 0, %s40
      %s62 = sphi 0, %s64
      %s65 = sphi 0, %s62
      %s66 = sphi 0, %s65
      %s82 = sphi 0, %s66
      %s88 = sphi 0, %s90
      %s91 = sphi 0, %s88
      %s92 = sphi 0, %s91
      %s108 = sphi 0, %s92
      %s116 = sphi 0, %s118
      %s119 = sphi 0, %s116
      %s120 = sphi 0, %s119
      %s136 = sphi 0, %s120
      %s140 = sphi 0, %s140
      %s142 = sphi 0, %s140
      %s143 = sphi 0, %s142
      %s157 = sphi 0, %s143
      %s165 = sphi 0, %s167
      %s168 = sphi 0, %s165
      %s169 = sphi 0, %s168
      %s185 = sphi 0, %s169
    $region4: #{ctm_forward.5} parent=1 // loop_header_branch
      %15 = sbr.rel (%p13) target = $region8
    $region5: #{ctm_forward.5} parent=1 // loop_body
      %s17 = ssub.s32 %s12, 1
      %s18 = ssub.s32 %s12, 2
      %s25 = sadd.s32 1, %s20
      %p26 = scmp.ge.s32.totalorder %s25, 1
      %s27 = scalar_select %p26, 0, %s25
      %s28 = sadd.s32 1, %s19
      %s29 = scalar_select %p26, %s28, %s19
      %p30 = scmp.ge.s32.totalorder %s29, 2
      %s31 = scalar_select %p30, 0, %s29
      %s32 = ssub.s32 %s19, %s31
      %s33 = ssub.s32 %s20, %s27
      %s34 = sor.u32 %s32, %s33
      %p35 = scmp.eq.s32.totalorder %s34, 0
      %s37 = sadd.s32 %s36, 1
      %s38 = scalar_select %p35, %s36, %s37
      %p41 = pneg %p35
      %p42 = scmp.eq.s32.totalorder %s12, 1
      %p43 = por %p41, %p42
      %p44 = scmp.ne.s32.totalorder %s36, %s39
      %p45 = scmp.eq.s32.totalorder %s12, 0
      %p46 = por %p44, %p45
      %p47 = scmp.ne.s32.totalorder %s36, %s39
      %p48 = scmp.eq.s32.totalorder %s17, 1
      %p49 = por %p47, %p48
      %p50 = scmp.ne.s32.totalorder %s39, %s40
      %p51 = scmp.eq.s32.totalorder %s17, 0
      %p52 = por %p50, %p51
      %p53 = scmp.ne.s32.totalorder %s39, %s40
      %p54 = scmp.eq.s32.totalorder %s18, 1
      %p55 = por %p53, %p54
      %p57 = scmp.ne.s32.totalorder %s40, %s56
      %p58 = scmp.eq.s32.totalorder %s18, 0
      %p59 = por %p57, %p58
      %s60 = ssub.s32 %s19, %s31
      %p61 = scmp.eq.s32.totalorder %s60, 0
      %s63 = sadd.s32 %s62, 1
      %s64 = scalar_select %p61, %s62, %s63
      %p67 = pneg %p61
      %p68 = scmp.eq.s32.totalorder %s12, 1
      %p69 = por %p67, %p68
      %p70 = scmp.ne.s32.totalorder %s62, %s65
      %p71 = scmp.eq.s32.totalorder %s12, 0
      %p72 = por %p70, %p71
      %p73 = scmp.ne.s32.totalorder %s62, %s65
      %p74 = scmp.eq.s32.totalorder %s17, 1
      %p75 = por %p73, %p74
      %p76 = scmp.ne.s32.totalorder %s65, %s66
      %p77 = scmp.eq.s32.totalorder %s17, 0
      %p78 = por %p76, %p77
      %p79 = scmp.ne.s32.totalorder %s65, %s66
      %p80 = scmp.eq.s32.totalorder %s18, 1
      %p81 = por %p79, %p80
      %p83 = scmp.ne.s32.totalorder %s66, %s82
      %p84 = scmp.eq.s32.totalorder %s18, 0
      %p85 = por %p83, %p84
      %s86 = ssub.s32 %s19, %s31
      %p87 = scmp.eq.s32.totalorder %s86, 0
      %s89 = sadd.s32 %s88, 1
      %s90 = scalar_select %p87, %s88, %s89
      %p93 = pneg %p87
      %p94 = scmp.eq.s32.totalorder %s12, 1
      %p95 = por %p93, %p94
      %p96 = scmp.ne.s32.totalorder %s88, %s91
      %p97 = scmp.eq.s32.totalorder %s12, 0
      %p98 = por %p96, %p97
      %p99 = scmp.ne.s32.totalorder %s88, %s91
      %p100 = scmp.eq.s32.totalorder %s17, 1
      %p101 = por %p99, %p100
      %p102 = scmp.ne.s32.totalorder %s91, %s92
      %p103 = scmp.eq.s32.totalorder %s17, 0
      %p104 = por %p102, %p103
      %p105 = scmp.ne.s32.totalorder %s91, %s92
      %p106 = scmp.eq.s32.totalorder %s18, 1
      %p107 = por %p105, %p106
      %p109 = scmp.ne.s32.totalorder %s92, %s108
      %p110 = scmp.eq.s32.totalorder %s18, 0
      %p111 = por %p109, %p110
      %s112 = ssub.s32 %s19, %s31
      %s113 = ssub.s32 %s20, %s27
      %s114 = sor.u32 %s112, %s113
      %p115 = scmp.eq.s32.totalorder %s114, 0
      %s117 = sadd.s32 %s116, 1
      %s118 = scalar_select %p115, %s116, %s117
      %p121 = pneg %p115
      %p122 = scmp.eq.s32.totalorder %s12, 1
      %p123 = por %p121, %p122
      %p124 = scmp.ne.s32.totalorder %s116, %s119
      %p125 = scmp.eq.s32.totalorder %s12, 0
      %p126 = por %p124, %p125
      %p127 = scmp.ne.s32.totalorder %s116, %s119
      %p128 = scmp.eq.s32.totalorder %s17, 1
      %p129 = por %p127, %p128
      %p130 = scmp.ne.s32.totalorder %s119, %s120
      %p131 = scmp.eq.s32.totalorder %s17, 0
      %p132 = por %p130, %p131
      %p133 = scmp.ne.s32.totalorder %s119, %s120
      %p134 = scmp.eq.s32.totalorder %s18, 1
      %p135 = por %p133, %p134
      %p137 = scmp.ne.s32.totalorder %s120, %s136
      %p138 = scmp.eq.s32.totalorder %s18, 0
      %p139 = por %p137, %p138
      %s141 = sadd.s32 %s140, 1
      %p144 = scmp.eq.s32.totalorder %s12, 1
      %p145 = scmp.ne.s32.totalorder %s140, %s142
      %p146 = scmp.eq.s32.totalorder %s12, 0
      %p147 = por %p145, %p146
      %p148 = scmp.ne.s32.totalorder %s140, %s142
      %p149 = scmp.eq.s32.totalorder %s17, 1
      %p150 = por %p148, %p149
      %p151 = scmp.ne.s32.totalorder %s142, %s143
      %p152 = scmp.eq.s32.totalorder %s17, 0
      %p153 = por %p151, %p152
      %p154 = scmp.ne.s32.totalorder %s142, %s143
      %p155 = scmp.eq.s32.totalorder %s18, 1
      %p156 = por %p154, %p155
      %p158 = scmp.ne.s32.totalorder %s143, %s157
      %p159 = scmp.eq.s32.totalorder %s18, 0
      %p160 = por %p158, %p159
      %s161 = ssub.s32 %s19, %s31
      %s162 = ssub.s32 %s20, %s27
      %s163 = sor.u32 %s161, %s162
      %p164 = scmp.eq.s32.totalorder %s163, 0
      %s166 = sadd.s32 %s165, 1
      %s167 = scalar_select %p164, %s165, %s166
      %p170 = pneg %p164
      %p171 = scmp.eq.s32.totalorder %s12, 1
      %p172 = por %p170, %p171
      %p173 = scmp.ne.s32.totalorder %s165, %s168
      %p174 = scmp.eq.s32.totalorder %s12, 0
      %p175 = por %p173, %p174
      %p176 = scmp.ne.s32.totalorder %s165, %s168
      %p177 = scmp.eq.s32.totalorder %s17, 1
      %p178 = por %p176, %p177
      %p179 = scmp.ne.s32.totalorder %s168, %s169
      %p180 = scmp.eq.s32.totalorder %s17, 0
      %p181 = por %p179, %p180
      %p182 = scmp.ne.s32.totalorder %s168, %s169
      %p183 = scmp.eq.s32.totalorder %s18, 1
      %p184 = por %p182, %p183
      %p186 = scmp.ne.s32.totalorder %s169, %s185
      %p187 = scmp.eq.s32.totalorder %s18, 0
      %p188 = por %p186, %p187
      %p189 = scmp.le.s32.totalorder 1, %s12
      %p190 = scmp.lt.s32.totalorder %s12, 3
      %p191 = pnand %p189, %p190
      %p192 = pneg %p191
      // Predicated region
      $region9: #{ctm_forward.5} parent=5 // pred_check
        _
      $region10: #{ctm_forward.5} parent=5 // pred_check_branch
        %194 = sbr.rel (%p191) target = $region12
      $region11: #{ctm_forward.5} parent=5 // pred_region
        %s195 = ssub.s32 %s12, 1
        // Predicated region
        $region13: #{ctm_forward.5} parent=11 // pred_check
          %p196 = pneg %p153
        $region14: #{ctm_forward.5} parent=11 // pred_check_branch
          %198 = sbr.rel (%p196) target = $region16
        $region15: #{ctm_forward.5} parent=11 // pred_region
          %s200 = ssub.s32 16, 16
          %201 = vsyncadd [#allocation3], %s200
          %s203 = sshll.u32 %s4, 4
          %s204 = int_to_ptr.vmem [resolvable:$true] %s203
          %206 = dma.vmem_to_smem %s204, 16, [#allocation2], [#allocation3]
        $region16: #{ctm_forward.5} parent=11 // pred_fallthru
          _
      $region12: #{ctm_forward.5} parent=5 // pred_fallthru
        _
      %p207 = scmp.lt.s32.totalorder %s12, 2
      // Predicated region
      $region17: #{ctm_forward.5} parent=5 // pred_check
        %p208 = pneg %p207
      $region18: #{ctm_forward.5} parent=5 // pred_check_branch
        %210 = sbr.rel (%p208) target = $region20
      $region19: #{ctm_forward.5} parent=5 // pred_region
        // Predicated region
        $region21: #{ctm_forward.5} parent=19 // pred_check
          %p211 = pneg %p46
        $region22: #{ctm_forward.5} parent=19 // pred_check_branch
          %213 = sbr.rel (%p211) target = $region24
        $region23: #{ctm_forward.5} parent=19 // pred_region
          %s214 = smul.u32 4, %s20
          %p215 = scmp.lt.s32.totalorder %s19, 1
          %s216 = scalar_select %p215, %s19, 1
          %p217 = scmp.lt.s32.totalorder %s214, 3
          %s218 = scalar_select %p217, %s214, 3
          %s219 = smul.addr %s216, 4
          %s220 = sadd.s32 %s218, %s219
          %s221 = smul.addr %s220, 8
          %s222 = scalar_lea.vmem %s0, %s221
          %s223 = smul.u32 4, %s20
        $region24: #{ctm_forward.5} parent=19 // pred_fallthru
          _
        // Predicated region
        $region25: #{ctm_forward.5} parent=19 // pred_check
          %p224 = pneg %p72
        $region26: #{ctm_forward.5} parent=19 // pred_check_branch
          %226 = sbr.rel (%p224) target = $region28
        $region27: #{ctm_forward.5} parent=19 // pred_region
          %p227 = scmp.lt.s32.totalorder %s19, 1
          %s228 = scalar_select %p227, %s19, 1
          %s229 = smul.addr %s228, 4
          %s230 = smul.addr %s229, 8
          %s231 = scalar_lea.vmem %s1, %s230
        $region28: #{ctm_forward.5} parent=19 // pred_fallthru
          _
        // Predicated region
        $region29: #{ctm_forward.5} parent=19 // pred_check
          %p232 = pneg %p98
        $region30: #{ctm_forward.5} parent=19 // pred_check_branch
          %234 = sbr.rel (%p232) target = $region32
        $region31: #{ctm_forward.5} parent=19 // pred_region
          %p235 = scmp.lt.s32.totalorder %s19, 1
          %s236 = scalar_select %p235, %s19, 1
          %s237 = scalar_lea.vmem %s2, %s236
        $region32: #{ctm_forward.5} parent=19 // pred_fallthru
          _
        // Predicated region
        $region33: #{ctm_forward.5} parent=19 // pred_check
          %p238 = pneg %p126
        $region34: #{ctm_forward.5} parent=19 // pred_check_branch
          %240 = sbr.rel (%p238) target = $region36
        $region35: #{ctm_forward.5} parent=19 // pred_region
          %p241 = scmp.lt.s32.totalorder %s19, 1
          %s242 = scalar_select %p241, %s19, 1
          %p243 = scmp.lt.s32.totalorder %s20, 0
          %s244 = scalar_select %p243, %s20, 0
          %s245 = sadd.s32 %s244, %s242
          %s246 = scalar_lea.vmem %s3, %s245
        $region36: #{ctm_forward.5} parent=19 // pred_fallthru
          _
      $region20: #{ctm_forward.5} parent=5 // pred_fallthru
        _
      %p247 = scmp.le.s32.totalorder 1, %s12
      %p248 = scmp.lt.s32.totalorder %s12, 3
      %p249 = pnand %p247, %p248
      %p250 = pneg %p249
      // Predicated region
      $region37: #{ctm_forward.5} parent=5 // pred_check
        _
      $region38: #{ctm_forward.5} parent=5 // pred_check_branch
        %252 = sbr.rel (%p249) target = $region40
      $region39: #{ctm_forward.5} parent=5 // pred_region
        %s253 = ssub.s32 %s12, 1
        // Predicated region
        $region41: #{ctm_forward.5} parent=39 // pred_check
          %p254 = pneg %p153
        $region42: #{ctm_forward.5} parent=39 // pred_check_branch
          %256 = sbr.rel (%p254) target = $region44
        $region43: #{ctm_forward.5} parent=39 // pred_region
          %257 = dma.done [#allocation3], 16
        $region44: #{ctm_forward.5} parent=39 // pred_fallthru
          _
        %258 = sfence
        %s259 = smul.u32 4, %s22
        %p260 = scmp.lt.s32.totalorder %s21, 1
        %s261 = scalar_select %p260, %s21, 1
        %p262 = scmp.lt.s32.totalorder %s259, 3
        %s263 = scalar_select %p262, %s259, 3
        %s264 = smul.addr %s261, 4
        %s265 = sadd.s32 %s263, %s264
        %s266 = smul.addr %s265, 8
        %s267 = scalar_lea.vmem %s0, %s266
        %p268 = pneg %p52
        %p269 = pneg %p49
        %p270 = scmp.lt.s32.totalorder %s21, 1
        %s271 = scalar_select %p270, %s21, 1
        %s272 = smul.addr %s271, 4
        %s273 = smul.addr %s272, 8
        %s274 = scalar_lea.vmem %s1, %s273
        %p275 = pneg %p78
        %p276 = pneg %p75
        %p277 = scmp.lt.s32.totalorder %s21, 1
        %s278 = scalar_select %p277, %s21, 1
        %s279 = scalar_lea.vmem %s2, %s278
        %p280 = pneg %p104
        %p281 = pneg %p101
        %p282 = scmp.lt.s32.totalorder %s21, 1
        %s283 = scalar_select %p282, %s21, 1
        %p284 = scmp.lt.s32.totalorder %s22, 0
        %s285 = scalar_select %p284, %s22, 0
        %s286 = sadd.s32 %s285, %s283
        %s287 = scalar_lea.vmem %s3, %s286
        %p288 = pneg %p132
        %p289 = pneg %p129
        %p290 = pneg %p153
        %p291 = pneg %p150
        %p292 = pneg %p181
        %p293 = pneg %p178
        %p294 = scmp.lt.s32.totalorder %s21, 1
        %s295 = scalar_select %p294, %s21, 1
        %p296 = scmp.lt.s32.totalorder %s22, 0
        %s297 = scalar_select %p296, %s22, 0
        %s298 = sadd.s32 %s297, %s295
        %s299 = scalar_lea.vmem %s5, %s298
        %s300 = smul.u32 4, %s22
        %p301 = scmp.lt.s32.totalorder %s21, 1
        %s302 = scalar_select %p301, %s21, 1
        %p303 = scmp.lt.s32.totalorder %s300, 3
        %s304 = scalar_select %p303, %s300, 3
        %s305 = smul.addr %s302, 4
        %s306 = sadd.s32 %s304, %s305
        %s307 = smul.addr %s306, 8
        %s308 = scalar_lea.vmem %s0, %s307
        %s309 = smul.u32 4, %s22
        %p310 = scmp.lt.s32.totalorder %s21, 1
        %s311 = scalar_select %p310, %s21, 1
        %s312 = smul.addr %s311, 4
        %s313 = smul.addr %s312, 8
        %s314 = scalar_lea.vmem %s1, %s313
        %p315 = scmp.lt.s32.totalorder %s21, 1
        %s316 = scalar_select %p315, %s21, 1
        %s317 = scalar_lea.vmem %s2, %s316
        %p318 = scmp.lt.s32.totalorder %s21, 1
        %s319 = scalar_select %p318, %s21, 1
        %p320 = scmp.lt.s32.totalorder %s22, 0
        %s321 = scalar_select %p320, %s22, 0
        %s322 = sadd.s32 %s321, %s319
        %s323 = scalar_lea.vmem %s3, %s322
        %p324 = scmp.lt.s32.totalorder %s21, 1
        %s325 = scalar_select %p324, %s21, 1
        %p326 = scmp.lt.s32.totalorder %s22, 0
        %s327 = scalar_select %p326, %s22, 0
        %s328 = sadd.s32 %s327, %s325
        %s329 = scalar_lea.vmem %s5, %s328
        %v331 = vld [vmem:[%s308] sm:$0xff]
        %v332 = vld [vmem:[%s308 + $0x8] sm:$0xff]
        %v333 = vld [vmem:[%s308 + $0x10] sm:$0xff]
        %v334 = vld [vmem:[%s308 + $0x18] sm:$0xff]
        %v335 = vmul.f32 %v331, 0.17677669
        %v336 = vmul.f32 %v332, 0.17677669
        %v337 = vmul.f32 %v333, 0.17677669
        %v338 = vmul.f32 %v334, 0.17677669
        %v339 = vld [vmem:[%s314] sm:$0xff]
        %v340 = vld [vmem:[%s314 + $0x8] sm:$0xff]
        %v341 = vld [vmem:[%s314 + $0x10] sm:$0xff]
        %v342 = vld [vmem:[%s314 + $0x18] sm:$0xff]
        %v343 = vmul.f32 %v339, 0.17677669
        %v344 = vmul.f32 %v340, 0.17677669
        %v345 = vmul.f32 %v341, 0.17677669
        %v346 = vmul.f32 %v342, 0.17677669
        %v347 = vpack.c.bf16 %v336, %v335
        %v348 = vpack.c.bf16 %v338, %v337
        %v349 = vpack.c.bf16 %v344, %v343
        %v350 = vpack.c.bf16 %v346, %v345
        %vm351 = vcmask 261120
        %v353 = vsel %vm351, %v347, 0
        %v356 = vsel %vm351, %v348, 0
        %v359 = vsel %vm351, %v349, 0
        %v362 = vsel %vm351, %v350, 0
        %364 = vmatprep.subr.bf16.mxu0 0
        %365 = vmatpush1.bf16.xpose.msra.mxu0 0
        %366 = vmatprep.subr.bf16.mxu0 0
        %367 = vmatpush1.bf16.xpose.msra.mxu0 0
        %368 = vmatprep.subr.bf16.mxu0 0
        %369 = vmatpush1.bf16.xpose.msra.mxu0 0
        %370 = vmatprep.subr.bf16.mxu0 0
        %371 = vmatpush1.bf16.xpose.msra.mxu0 0
        %372 = vmatprep.subr.bf16.mxu0 0
        %373 = vmatpush1.bf16.xpose.msra.mxu0 0
        %374 = vmatprep.subr.bf16.mxu0 0
        %375 = vmatpush1.bf16.xpose.msra.mxu0 0
        %376 = vmatprep.subr.bf16.mxu0 0
        %377 = vmatpush1.bf16.xpose.msra.mxu0 %v362
        %378 = vmatprep.subr.bf16.mxu0 0
        %379 = vmatpush1.bf16.xpose.msra.mxu0 %v359
        %380 = vmatprep.subr.bf16.mxu0 0
        %381 = vmatpush2.bf16.xpose.msra.mxu0 0
        %382 = vmatprep.subr.bf16.mxu0 0
        %383 = vmatpush2.bf16.xpose.msra.mxu0 0
        %384 = vmatprep.subr.bf16.mxu0 0
        %385 = vmatpush2.bf16.xpose.msra.mxu0 0
        %386 = vmatprep.subr.bf16.mxu0 0
        %387 = vmatpush2.bf16.xpose.msra.mxu0 0
        %388 = vmatprep.subr.bf16.mxu0 0
        %389 = vmatpush2.bf16.xpose.msra.mxu0 0
        %390 = vmatprep.subr.bf16.mxu0 0
        %391 = vmatpush2.bf16.xpose.msra.mxu0 0
        %392 = vmatprep.subr.bf16.mxu0 0
        %393 = vmatpush2.bf16.xpose.msra.mxu0 0
        %394 = vmatprep.subr.bf16.mxu0 0
        %395 = vmatpush2.bf16.xpose.msra.mxu0 0
        %396 = vmatprep.mubr.bf16.mxu0 0
        %397 = vmatmul.mubr.bf16.gmra.mxu0 %v353
        %v398 = vpop.f32.mrf.mxu0
        %v399 = vadd.f32 0.0, %v398
        %v400 = vpop.f32.mrf.mxu0
        %v401 = vpop.f32.mrf.mxu0
        %v402 = vadd.f32 0.0, %v401
        %v403 = vpop.f32.mrf.mxu0
        %404 = vmatprep.mubr.bf16.mxu0 0
        %405 = vmatmul.mubr.bf16.gmra.mxu0 %v356
        %v406 = vpop.f32.mrf.mxu0
        %v407 = vadd.f32 0.0, %v406
        %v408 = vpop.f32.mrf.mxu0
        %v409 = vpop.f32.mrf.mxu0
        %v410 = vadd.f32 0.0, %v409
        %v411 = vpop.f32.mrf.mxu0
        %412 = vdwg.mxu0
        %v413 = vmul.f32 %v335, %v335
        %v414 = vmul.f32 %v336, %v336
        %v415 = vmul.f32 %v337, %v337
        %v416 = vmul.f32 %v338, %v338
        %v417 = vsel %vm351, %v413, 0.0
        %418 = vadd.xlane.f32.xlu0 %v417
        %v419 = vpop.xlane.xlu0 %418
        %v420 = vsel %vm351, %v414, 0.0
        %421 = vadd.xlane.f32.xlu0 %v420
        %v422 = vpop.xlane.xlu0 %421
        %v423 = vsel %vm351, %v415, 0.0
        %424 = vadd.xlane.f32.xlu0 %v423
        %v425 = vpop.xlane.xlu0 %424
        %v426 = vsel %vm351, %v416, 0.0
        %427 = vadd.xlane.f32.xlu0 %v426
        %v428 = vpop.xlane.xlu0 %427
        %v429 = vmul.f32 %v343, %v343
        %v430 = vmul.f32 %v344, %v344
        %v431 = vmul.f32 %v345, %v345
        %v432 = vmul.f32 %v346, %v346
        %v433 = vsel %vm351, %v429, 0.0
        %434 = vadd.xlane.f32.xlu0 %v433
        %v435 = vpop.xlane.xlu0 %434
        %v436 = vsel %vm351, %v430, 0.0
        %437 = vadd.xlane.f32.xlu0 %v436
        %v438 = vpop.xlane.xlu0 %437
        %v439 = vsel %vm351, %v431, 0.0
        %440 = vadd.xlane.f32.xlu0 %v439
        %v441 = vpop.xlane.xlu0 %440
        %v442 = vsel %vm351, %v432, 0.0
        %443 = vadd.xlane.f32.xlu0 %v442
        %v444 = vpop.xlane.xlu0 %443
        %445 = vxpose.xlu0.b32.start [1/16] %v435, 128
        %446 = vxpose.xlu0.b32.cont [2/16] %v438, 128
        %447 = vxpose.xlu0.b32.cont [3/16] %v441, 128
        %448 = vxpose.xlu0.b32.cont [4/16] %v444, 128
        %449 = vxpose.xlu0.b32.cont [5/16] 0.0, 128
        %450 = vxpose.xlu0.b32.cont [6/16] 0.0, 128
        %451 = vxpose.xlu0.b32.cont [7/16] 0.0, 128
        %452 = vxpose.xlu0.b32.cont [8/16] 0.0, 128
        %453 = vxpose.xlu0.b32.cont [9/16] 0.0, 128
        %454 = vxpose.xlu0.b32.cont [10/16] 0.0, 128
        %455 = vxpose.xlu0.b32.cont [11/16] 0.0, 128
        %456 = vxpose.xlu0.b32.cont [12/16] 0.0, 128
        %457 = vxpose.xlu0.b32.cont [13/16] 0.0, 128
        %458 = vxpose.xlu0.b32.cont [14/16] 0.0, 128
        %459 = vxpose.xlu0.b32.cont [15/16] 0.0, 128
        %460 = vxpose.xlu0.b32.end [16/16] 0.0, 128
        %v461 = vpop.trf.xlu0
        %v462 = vpop.trf.xlu0
        %v463 = vpop.trf.xlu0
        %v464 = vpop.trf.xlu0
        %v465 = vpop.trf.xlu0
        %v466 = vpop.trf.xlu0
        %v467 = vpop.trf.xlu0
        %v468 = vpop.trf.xlu0
        %v469 = vpop.trf.xlu0
        %v470 = vpop.trf.xlu0
        %v471 = vpop.trf.xlu0
        %v472 = vpop.trf.xlu0
        %v473 = vpop.trf.xlu0
        %v474 = vpop.trf.xlu0
        %v475 = vpop.trf.xlu0
        %v476 = vpop.trf.xlu0
        %v477 = vlaneseq
        %v478 = vshrl.u32 %v477, 7
        %v479 = vsub.s32 0, %v478
        %v480 = vrot.slane %v461, %v479
        %v481 = vadd.f32 %v419, %v480
        %v482 = vadd.f32 %v422, %v480
        %v483 = vadd.f32 %v425, %v480
        %v484 = vadd.f32 %v428, %v480
        %v485 = vmul.f32 %v399, 2.0
        %v486 = vmul.f32 %v402, 2.0
        %v487 = vmul.f32 %v407, 2.0
        %v488 = vmul.f32 %v410, 2.0
        %v489 = vsub.f32 %v481, %v485
        %v490 = vsub.f32 %v482, %v486
        %v491 = vsub.f32 %v483, %v487
        %v492 = vsub.f32 %v484, %v488
        %v493 = vmax.f32 %v489, 0.0
        %v494 = vmax.f32 %v490, 0.0
        %v495 = vmax.f32 %v491, 0.0
        %v496 = vmax.f32 %v492, 0.0
        %v497 = vld [vmem:[%s317] sm:$0x1]
        %v498 = vld [vmem:[%s323] sm:$0x1]
        %499 = vxpose.xlu0.b32.start [1/16] %v498, 128
        %500 = vxpose.xlu0.b32.cont [2/16] 0.0, 128
        %501 = vxpose.xlu0.b32.cont [3/16] 0.0, 128
        %502 = vxpose.xlu0.b32.cont [4/16] 0.0, 128
        %503 = vxpose.xlu0.b32.cont [5/16] 0.0, 128
        %504 = vxpose.xlu0.b32.cont [6/16] 0.0, 128
        %505 = vxpose.xlu0.b32.cont [7/16] 0.0, 128
        %506 = vxpose.xlu0.b32.cont [8/16] 0.0, 128
        %507 = vxpose.xlu0.b32.cont [9/16] 0.0, 128
        %508 = vxpose.xlu0.b32.cont [10/16] 0.0, 128
        %509 = vxpose.xlu0.b32.cont [11/16] 0.0, 128
        %510 = vxpose.xlu0.b32.cont [12/16] 0.0, 128
        %511 = vxpose.xlu0.b32.cont [13/16] 0.0, 128
        %512 = vxpose.xlu0.b32.cont [14/16] 0.0, 128
        %513 = vxpose.xlu0.b32.cont [15/16] 0.0, 128
        %514 = vxpose.xlu0.b32.end [16/16] 0.0, 128
        %v515 = vpop.trf.xlu0
        %v516 = vpop.trf.xlu0
        %v517 = vpop.trf.xlu0
        %v518 = vpop.trf.xlu0
        %v519 = vpop.trf.xlu0
        %v520 = vpop.trf.xlu0
        %v521 = vpop.trf.xlu0
        %v522 = vpop.trf.xlu0
        %v523 = vpop.trf.xlu0
        %v524 = vpop.trf.xlu0
        %v525 = vpop.trf.xlu0
        %v526 = vpop.trf.xlu0
        %v527 = vpop.trf.xlu0
        %v528 = vpop.trf.xlu0
        %v529 = vpop.trf.xlu0
        %v530 = vpop.trf.xlu0
        %s531 = sld [smem:[#allocation2 + %s21]]
        %v533 = vlaneseq
        %v534 = vshrl.u32 %v533, 7
        %v535 = vsub.s32 0, %v534
        %v536 = vrot.slane %v497, %v535
        %539 = vset.pattern.permute.xlu0 0
        %540 = vperm.xlu0 %539, %v515
        %v541 = vpop.permute.xlu0 %540
        %544 = vset.pattern.permute.xlu0 0
        %545 = vperm.xlu0 %544, %v516
        %v546 = vpop.permute.xlu0 %545
        %549 = vset.pattern.permute.xlu0 0
        %550 = vperm.xlu0 %549, %v517
        %v551 = vpop.permute.xlu0 %550
        %554 = vset.pattern.permute.xlu0 0
        %555 = vperm.xlu0 %554, %v518
        %v556 = vpop.permute.xlu0 %555
        %vm558 = vcmp.gt.f32.partialorder %v536, %v541
        %vm559 = vcmp.gt.f32.partialorder %v536, %v546
        %vm560 = vcmp.gt.f32.partialorder %v536, %v551
        %vm561 = vcmp.gt.f32.partialorder %v536, %v556
        %v562 = vstv %s531
        %v563 = vsel %vm558, %v493, %v562
        %v564 = vsel %vm559, %v494, %v562
        %v565 = vsel %vm560, %v495, %v562
        %v566 = vsel %vm561, %v496, %v562
        %v567 = vsel %vm351, %v563, inf
        %568 = vmin.xlane.f32.xlu0 %v567
        %v569 = vpop.xlane.xlu0 %568
        %v570 = vsel %vm351, %v564, inf
        %571 = vmin.xlane.f32.xlu0 %v570
        %v572 = vpop.xlane.xlu0 %571
        %v573 = vsel %vm351, %v565, inf
        %574 = vmin.xlane.f32.xlu0 %v573
        %v575 = vpop.xlane.xlu0 %574
        %v576 = vsel %vm351, %v566, inf
        %577 = vmin.xlane.f32.xlu0 %v576
        %v578 = vpop.xlane.xlu0 %577
        %v579 = vrsqrt.pop %v569
        %v580 = vmul.f32 %v569, %v579
        %vm581 = vcmp.eq.f32.partialorder %v569, inf
        %v582 = vsel %vm581, %v569, %v580
        %vm583 = vcmp.eq.f32.partialorder %v569, 0.0
        %v584 = vand.u32 %v569, 2147483648
        %v585 = vsel %vm583, %v584, %v582
        %v586 = vrsqrt.pop %v572
        %v587 = vmul.f32 %v572, %v586
        %vm588 = vcmp.eq.f32.partialorder %v572, inf
        %v589 = vsel %vm588, %v572, %v587
        %vm590 = vcmp.eq.f32.partialorder %v572, 0.0
        %v591 = vand.u32 %v572, 2147483648
        %v592 = vsel %vm590, %v591, %v589
        %v593 = vrsqrt.pop %v575
        %v594 = vmul.f32 %v575, %v593
        %vm595 = vcmp.eq.f32.partialorder %v575, inf
        %v596 = vsel %vm595, %v575, %v594
        %vm597 = vcmp.eq.f32.partialorder %v575, 0.0
        %v598 = vand.u32 %v575, 2147483648
        %v599 = vsel %vm597, %v598, %v596
        %v600 = vrsqrt.pop %v578
        %v601 = vmul.f32 %v578, %v600
        %vm602 = vcmp.eq.f32.partialorder %v578, inf
        %v603 = vsel %vm602, %v578, %v601
        %vm604 = vcmp.eq.f32.partialorder %v578, 0.0
        %v605 = vand.u32 %v578, 2147483648
        %v606 = vsel %vm604, %v605, %v603
        %v607 = vmul.f32 %v585, %v515
        %v608 = vmul.f32 %v592, %v516
        %v609 = vmul.f32 %v599, %v517
        %v610 = vmul.f32 %v606, %v518
        %611 = vxpose.xlu0.b32.start [1/16] %v607, 128
        %612 = vxpose.xlu0.b32.cont [2/16] %v608, 128
        %613 = vxpose.xlu0.b32.cont [3/16] %v609, 128
        %614 = vxpose.xlu0.b32.cont [4/16] %v610, 128
        %615 = vxpose.xlu0.b32.cont [5/16] 0.0, 128
        %616 = vxpose.xlu0.b32.cont [6/16] 0.0, 128
        %617 = vxpose.xlu0.b32.cont [7/16] 0.0, 128
        %618 = vxpose.xlu0.b32.cont [8/16] 0.0, 128
        %619 = vxpose.xlu0.b32.cont [9/16] 0.0, 128
        %620 = vxpose.xlu0.b32.cont [10/16] 0.0, 128
        %621 = vxpose.xlu0.b32.cont [11/16] 0.0, 128
        %622 = vxpose.xlu0.b32.cont [12/16] 0.0, 128
        %623 = vxpose.xlu0.b32.cont [13/16] 0.0, 128
        %624 = vxpose.xlu0.b32.cont [14/16] 0.0, 128
        %625 = vxpose.xlu0.b32.cont [15/16] 0.0, 128
        %626 = vxpose.xlu0.b32.end [16/16] 0.0, 128
        %v627 = vpop.trf.xlu0
        %v628 = vpop.trf.xlu0
        %v629 = vpop.trf.xlu0
        %v630 = vpop.trf.xlu0
        %v631 = vpop.trf.xlu0
        %v632 = vpop.trf.xlu0
        %v633 = vpop.trf.xlu0
        %v634 = vpop.trf.xlu0
        %v635 = vpop.trf.xlu0
        %v636 = vpop.trf.xlu0
        %v637 = vpop.trf.xlu0
        %v638 = vpop.trf.xlu0
        %v639 = vpop.trf.xlu0
        %v640 = vpop.trf.xlu0
        %v641 = vpop.trf.xlu0
        %v642 = vpop.trf.xlu0
        %vm643 = vcmask 253952
        %644 = vst.msk [vmem:[%s329] sm:$0x1] %vm643, %v627
        %p645 = scmp.lt.s32.totalorder %s21, 1
        %s646 = scalar_select %p645, %s21, 1
        %p647 = scmp.lt.s32.totalorder %s22, 0
        %s648 = scalar_select %p647, %s22, 0
        %s649 = sadd.s32 %s648, %s646
        %s650 = scalar_lea.vmem %s5, %s649
        // Predicated region
        $region45: #{ctm_forward.5} parent=39 // pred_check
          %p651 = pneg %p178
        $region46: #{ctm_forward.5} parent=39 // pred_check_branch
          %653 = sbr.rel (%p651) target = $region48
        $region47: #{ctm_forward.5} parent=39 // pred_region
          _
        $region48: #{ctm_forward.5} parent=39 // pred_fallthru
          _
      $region40: #{ctm_forward.5} parent=5 // pred_fallthru
        _
      %p654 = scmp.le.s32.totalorder 2, %s12
      // Predicated region
      $region49: #{ctm_forward.5} parent=5 // pred_check
        %p655 = pneg %p654
      $region50: #{ctm_forward.5} parent=5 // pred_check_branch
        %657 = sbr.rel (%p655) target = $region52
      $region51: #{ctm_forward.5} parent=5 // pred_region
        %s658 = ssub.s32 %s12, 2
        // Predicated region
        $region53: #{ctm_forward.5} parent=51 // pred_check
          %p659 = pneg %p184
        $region54: #{ctm_forward.5} parent=51 // pred_check_branch
          %661 = sbr.rel (%p659) target = $region56
        $region55: #{ctm_forward.5} parent=51 // pred_region
          %p662 = scmp.lt.s32.totalorder %s23, 1
          %s663 = scalar_select %p662, %s23, 1
          %p664 = scmp.lt.s32.totalorder %s24, 0
          %s665 = scalar_select %p664, %s24, 0
          %s666 = sadd.s32 %s665, %s663
          %s667 = scalar_lea.vmem %s5, %s666
        $region56: #{ctm_forward.5} parent=51 // pred_fallthru
          _
      $region52: #{ctm_forward.5} parent=5 // pred_fallthru
        _
    $region6: #{ctm_forward.5} parent=1 // loop_footer
      %s16 = sadd.s32 1, %s12
    $region7: #{ctm_forward.5} parent=1 // loop_footer_branch
      %11 = sbr.rel target = $region3
    $region8: #{ctm_forward.5} parent=1 // loop_exit
      _
    %668 = vsyncpa [#allocation3], 1
    %s669 = scalar_lea.sflag [#allocation3], 1
    %670 = vsyncpa %s669, 1

// kernel: ctm_forward.4
$region0: #{ctm_forward.4}
  #allocation0 [shape = 'u32[]', space=smem, size = 0x4, offset = 0x4, fixed_abs, tag = 'smem constant byte address 0x4 - core index']
  #allocation1 [shape = 'u32[144,128]{1,0:T(1,128)}', space=vmem, size = 0x12000, scoped, tag = 'internal scratch']
  #allocation2 [shape = 'f32[1]{0:T(128)S(6)}', space=smem, size = 0x200, scoped, tag = 'scoped memory for ctm_forward.4']
  %s0 = inlined_call_operand.hbm [shape: f32[2,32,32], index: 0, kind: input, shape index: {}, may-alias: {0,1}]
  %s1 = inlined_call_operand.hbm [shape: f32[2,32,32], index: 1, kind: input, shape index: {}, may-alias: {0,1}]
  %s2 = inlined_call_operand.vmem [shape: f32[1,32], index: 2, kind: input, shape index: {}]
  %s3 = inlined_call_operand.<no memory space> [shape: f32[1], index: 3, kind: input, shape index: {}]
  %s4 = inlined_call_operand.vmem [shape: f32[2,1,32], index: 4, kind: input, shape index: {}]
  %s5 = inlined_call_operand.vmem [shape: f32[2,1,32], index: 5, kind: output, shape index: {0}]
  %s6 = inlined_call_operand.vmem [shape: f32[2,1,32], index: 6, kind: output, shape index: {1}]
  %s7 = inlined_call_operand.vmem [shape: f32[2,1,32], index: 7, kind: output, shape index: {2}]
  %8 = xla_tuple %s5, %s6, %s7
  %s9 = sld [smem:[#allocation0]]
  $region77: #{ctm_forward.4} parent=0
    _
  %s11 = ssub.s32 1, %s9
  %s12 = scalar_select 0, %s11, %s9
  %13 = sst [smem:[#allocation2]] %s3
  $region1: #{ctm_forward.4} parent=0
    #allocation3 [shape = 'u8[32768]{0}', space=vmem, size = 0x8000, scoped, tag = 'input window, operand 0']
    #allocation4 [shape = 's32[2]{0}', space=sflag, size = 0x8, scoped, tag = 'scoped memory for ctm_forward.4']
    #allocation5 [shape = 'u8[32768]{0}', space=vmem, size = 0x8000, scoped, tag = 'input window, operand 1']
    #allocation6 [shape = 's32[2]{0}', space=sflag, size = 0x8, scoped, tag = 'scoped memory for ctm_forward.4']
    %14 = vsyncpa [#allocation4], 0
    %s15 = scalar_lea.sflag [#allocation4], 1
    %16 = vsyncpa %s15, 0
    %17 = vsyncpa [#allocation6], 0
    %s18 = scalar_lea.sflag [#allocation6], 1
    %19 = vsyncpa %s18, 0
    loop: start=0, step=1, limit=4
    $region2: #{ctm_forward.4} parent=1 // loop_pre_header
      _
    $region3: #{ctm_forward.4} parent=1 // loop_header
      %s21 = sphi 0, %s25
      %p22 = scmp.ge.s32.totalorder %s21, 4
      %s28 = sphi 0, %s40
      %s29 = sphi 0, %s36
      %s30 = sphi 0, %s28
      %s31 = sphi 0, %s29
      %s32 = sphi 0, %s30
      %s33 = sphi 0, %s31
      %s45 = sphi 0, %s47
      %s48 = sphi 0, %s45
      %s49 = sphi 0, %s48
      %s65 = sphi 0, %s49
      %s71 = sphi 0, %s73
      %s74 = sphi 0, %s71
      %s75 = sphi 0, %s74
      %s91 = sphi 0, %s75
      %s95 = sphi 0, %s95
      %s97 = sphi 0, %s95
      %s98 = sphi 0, %s97
      %s112 = sphi 0, %s98
      %s116 = sphi 0, %s116
      %s118 = sphi 0, %s116
      %s119 = sphi 0, %s118
      %s133 = sphi 0, %s119
      %s141 = sphi 0, %s143
      %s144 = sphi 0, %s141
      %s145 = sphi 0, %s144
      %s161 = sphi 0, %s145
      %s169 = sphi 0, %s171
      %s172 = sphi 0, %s169
      %s173 = sphi 0, %s172
      %s189 = sphi 0, %s173
      %s197 = sphi 0, %s199
      %s200 = sphi 0, %s197
      %s201 = sphi 0, %s200
      %s217 = sphi 0, %s201
      %s225 = sphi 0, %s227
      %s228 = sphi 0, %s225
      %s229 = sphi 0, %s228
      %s245 = sphi 0, %s229
    $region4: #{ctm_forward.4} parent=1 // loop_header_branch
      %24 = sbr.rel (%p22) target = $region8
    $region5: #{ctm_forward.4} parent=1 // loop_body
      %s26 = ssub.s32 %s21, 1
      %s27 = ssub.s32 %s21, 2
      %s34 = sadd.s32 1, %s29
      %p35 = scmp.ge.s32.totalorder %s34, 1
      %s36 = scalar_select %p35, 0, %s34
      %s37 = sadd.s32 1, %s28
      %s38 = scalar_select %p35, %s37, %s28
      %p39 = scmp.ge.s32.totalorder %s38, 2
      %s40 = scalar_select %p39, 0, %s38
      %s41 = ssub.s32 %s28, %s40
      %s42 = ssub.s32 %s29, %s36
      %s43 = sor.u32 %s41, %s42
      %p44 = scmp.eq.s32.totalorder %s43, 0
      %s46 = sadd.s32 %s45, 1
      %s47 = scalar_select %p44, %s45, %s46
      %p50 = pneg %p44
      %p51 = scmp.eq.s32.totalorder %s21, 1
      %p52 = por %p50, %p51
      %p53 = scmp.ne.s32.totalorder %s45, %s48
      %p54 = scmp.eq.s32.totalorder %s21, 0
      %p55 = por %p53, %p54
      %p56 = scmp.ne.s32.totalorder %s45, %s48
      %p57 = scmp.eq.s32.totalorder %s26, 1
      %p58 = por %p56, %p57
      %p59 = scmp.ne.s32.totalorder %s48, %s49
      %p60 = scmp.eq.s32.totalorder %s26, 0
      %p61 = por %p59, %p60
      %p62 = scmp.ne.s32.totalorder %s48, %s49
      %p63 = scmp.eq.s32.totalorder %s27, 1
      %p64 = por %p62, %p63
      %p66 = scmp.ne.s32.totalorder %s49, %s65
      %p67 = scmp.eq.s32.totalorder %s27, 0
      %p68 = por %p66, %p67
      %s69 = ssub.s32 %s28, %s40
      %p70 = scmp.eq.s32.totalorder %s69, 0
      %s72 = sadd.s32 %s71, 1
      %s73 = scalar_select %p70, %s71, %s72
      %p76 = pneg %p70
      %p77 = scmp.eq.s32.totalorder %s21, 1
      %p78 = por %p76, %p77
      %p79 = scmp.ne.s32.totalorder %s71, %s74
      %p80 = scmp.eq.s32.totalorder %s21, 0
      %p81 = por %p79, %p80
      %p82 = scmp.ne.s32.totalorder %s71, %s74
      %p83 = scmp.eq.s32.totalorder %s26, 1
      %p84 = por %p82, %p83
      %p85 = scmp.ne.s32.totalorder %s74, %s75
      %p86 = scmp.eq.s32.totalorder %s26, 0
      %p87 = por %p85, %p86
      %p88 = scmp.ne.s32.totalorder %s74, %s75
      %p89 = scmp.eq.s32.totalorder %s27, 1
      %p90 = por %p88, %p89
      %p92 = scmp.ne.s32.totalorder %s75, %s91
      %p93 = scmp.eq.s32.totalorder %s27, 0
      %p94 = por %p92, %p93
      %s96 = sadd.s32 %s95, 1
      %p99 = scmp.eq.s32.totalorder %s21, 1
      %p100 = scmp.ne.s32.totalorder %s95, %s97
      %p101 = scmp.eq.s32.totalorder %s21, 0
      %p102 = por %p100, %p101
      %p103 = scmp.ne.s32.totalorder %s95, %s97
      %p104 = scmp.eq.s32.totalorder %s26, 1
      %p105 = por %p103, %p104
      %p106 = scmp.ne.s32.totalorder %s97, %s98
      %p107 = scmp.eq.s32.totalorder %s26, 0
      %p108 = por %p106, %p107
      %p109 = scmp.ne.s32.totalorder %s97, %s98
      %p110 = scmp.eq.s32.totalorder %s27, 1
      %p111 = por %p109, %p110
      %p113 = scmp.ne.s32.totalorder %s98, %s112
      %p114 = scmp.eq.s32.totalorder %s27, 0
      %p115 = por %p113, %p114
      %s117 = sadd.s32 %s116, 1
      %p120 = scmp.eq.s32.totalorder %s21, 1
      %p121 = scmp.ne.s32.totalorder %s116, %s118
      %p122 = scmp.eq.s32.totalorder %s21, 0
      %p123 = por %p121, %p122
      %p124 = scmp.ne.s32.totalorder %s116, %s118
      %p125 = scmp.eq.s32.totalorder %s26, 1
      %p126 = por %p124, %p125
      %p127 = scmp.ne.s32.totalorder %s118, %s119
      %p128 = scmp.eq.s32.totalorder %s26, 0
      %p129 = por %p127, %p128
      %p130 = scmp.ne.s32.totalorder %s118, %s119
      %p131 = scmp.eq.s32.totalorder %s27, 1
      %p132 = por %p130, %p131
      %p134 = scmp.ne.s32.totalorder %s119, %s133
      %p135 = scmp.eq.s32.totalorder %s27, 0
      %p136 = por %p134, %p135
      %s137 = ssub.s32 %s28, %s40
      %s138 = ssub.s32 %s29, %s36
      %s139 = sor.u32 %s137, %s138
      %p140 = scmp.eq.s32.totalorder %s139, 0
      %s142 = sadd.s32 %s141, 1
      %s143 = scalar_select %p140, %s141, %s142
      %p146 = pneg %p140
      %p147 = scmp.eq.s32.totalorder %s21, 1
      %p148 = por %p146, %p147
      %p149 = scmp.ne.s32.totalorder %s141, %s144
      %p150 = scmp.eq.s32.totalorder %s21, 0
      %p151 = por %p149, %p150
      %p152 = scmp.ne.s32.totalorder %s141, %s144
      %p153 = scmp.eq.s32.totalorder %s26, 1
      %p154 = por %p152, %p153
      %p155 = scmp.ne.s32.totalorder %s144, %s145
      %p156 = scmp.eq.s32.totalorder %s26, 0
      %p157 = por %p155, %p156
      %p158 = scmp.ne.s32.totalorder %s144, %s145
      %p159 = scmp.eq.s32.totalorder %s27, 1
      %p160 = por %p158, %p159
      %p162 = scmp.ne.s32.totalorder %s145, %s161
      %p163 = scmp.eq.s32.totalorder %s27, 0
      %p164 = por %p162, %p163
      %s165 = ssub.s32 %s28, %s40
      %s166 = ssub.s32 %s29, %s36
      %s167 = sor.u32 %s165, %s166
      %p168 = scmp.eq.s32.totalorder %s167, 0
      %s170 = sadd.s32 %s169, 1
      %s171 = scalar_select %p168, %s169, %s170
      %p174 = pneg %p168
      %p175 = scmp.eq.s32.totalorder %s21, 1
      %p176 = por %p174, %p175
      %p177 = scmp.ne.s32.totalorder %s169, %s172
      %p178 = scmp.eq.s32.totalorder %s21, 0
      %p179 = por %p177, %p178
      %p180 = scmp.ne.s32.totalorder %s169, %s172
      %p181 = scmp.eq.s32.totalorder %s26, 1
      %p182 = por %p180, %p181
      %p183 = scmp.ne.s32.totalorder %s172, %s173
      %p184 = scmp.eq.s32.totalorder %s26, 0
      %p185 = por %p183, %p184
      %p186 = scmp.ne.s32.totalorder %s172, %s173
      %p187 = scmp.eq.s32.totalorder %s27, 1
      %p188 = por %p186, %p187
      %p190 = scmp.ne.s32.totalorder %s173, %s189
      %p191 = scmp.eq.s32.totalorder %s27, 0
      %p192 = por %p190, %p191
      %s193 = ssub.s32 %s28, %s40
      %s194 = ssub.s32 %s29, %s36
      %s195 = sor.u32 %s193, %s194
      %p196 = scmp.eq.s32.totalorder %s195, 0
      %s198 = sadd.s32 %s197, 1
      %s199 = scalar_select %p196, %s197, %s198
      %p202 = pneg %p196
      %p203 = scmp.eq.s32.totalorder %s21, 1
      %p204 = por %p202, %p203
      %p205 = scmp.ne.s32.totalorder %s197, %s200
      %p206 = scmp.eq.s32.totalorder %s21, 0
      %p207 = por %p205, %p206
      %p208 = scmp.ne.s32.totalorder %s197, %s200
      %p209 = scmp.eq.s32.totalorder %s26, 1
      %p210 = por %p208, %p209
      %p211 = scmp.ne.s32.totalorder %s200, %s201
      %p212 = scmp.eq.s32.totalorder %s26, 0
      %p213 = por %p211, %p212
      %p214 = scmp.ne.s32.totalorder %s200, %s201
      %p215 = scmp.eq.s32.totalorder %s27, 1
      %p216 = por %p214, %p215
      %p218 = scmp.ne.s32.totalorder %s201, %s217
      %p219 = scmp.eq.s32.totalorder %s27, 0
      %p220 = por %p218, %p219
      %s221 = ssub.s32 %s28, %s40
      %s222 = ssub.s32 %s29, %s36
      %s223 = sor.u32 %s221, %s222
      %p224 = scmp.eq.s32.totalorder %s223, 0
      %s226 = sadd.s32 %s225, 1
      %s227 = scalar_select %p224, %s225, %s226
      %p230 = pneg %p224
      %p231 = scmp.eq.s32.totalorder %s21, 1
      %p232 = por %p230, %p231
      %p233 = scmp.ne.s32.totalorder %s225, %s228
      %p234 = scmp.eq.s32.totalorder %s21, 0
      %p235 = por %p233, %p234
      %p236 = scmp.ne.s32.totalorder %s225, %s228
      %p237 = scmp.eq.s32.totalorder %s26, 1
      %p238 = por %p236, %p237
      %p239 = scmp.ne.s32.totalorder %s228, %s229
      %p240 = scmp.eq.s32.totalorder %s26, 0
      %p241 = por %p239, %p240
      %p242 = scmp.ne.s32.totalorder %s228, %s229
      %p243 = scmp.eq.s32.totalorder %s27, 1
      %p244 = por %p242, %p243
      %p246 = scmp.ne.s32.totalorder %s229, %s245
      %p247 = scmp.eq.s32.totalorder %s27, 0
      %p248 = por %p246, %p247
      %p249 = scmp.le.s32.totalorder 1, %s21
      %p250 = scmp.lt.s32.totalorder %s21, 3
      %p251 = pnand %p249, %p250
      %p252 = pneg %p251
      // Predicated region
      $region9: #{ctm_forward.4} parent=5 // pred_check
        _
      $region10: #{ctm_forward.4} parent=5 // pred_check_branch
        %254 = sbr.rel (%p251) target = $region12
      $region11: #{ctm_forward.4} parent=5 // pred_region
        %s255 = ssub.s32 %s21, 1
        // Predicated region
        $region13: #{ctm_forward.4} parent=11 // pred_check
          %p256 = pneg %p108
        $region14: #{ctm_forward.4} parent=11 // pred_check_branch
          %258 = sbr.rel (%p256) target = $region16
        $region15: #{ctm_forward.4} parent=11 // pred_region
          _
        $region16: #{ctm_forward.4} parent=11 // pred_fallthru
          _
        // Predicated region
        $region17: #{ctm_forward.4} parent=11 // pred_check
          %p259 = pneg %p129
        $region18: #{ctm_forward.4} parent=11 // pred_check_branch
          %261 = sbr.rel (%p259) target = $region20
        $region19: #{ctm_forward.4} parent=11 // pred_region
          _
        $region20: #{ctm_forward.4} parent=11 // pred_fallthru
          _
      $region12: #{ctm_forward.4} parent=5 // pred_fallthru
        _
      %p262 = scmp.lt.s32.totalorder %s21, 2
      // Predicated region
      $region21: #{ctm_forward.4} parent=5 // pred_check
        %p263 = pneg %p262
      $region22: #{ctm_forward.4} parent=5 // pred_check_branch
        %265 = sbr.rel (%p263) target = $region24
      $region23: #{ctm_forward.4} parent=5 // pred_region
        // Predicated region
        $region25: #{ctm_forward.4} parent=23 // pred_check
          %p266 = pneg %p55
        $region26: #{ctm_forward.4} parent=23 // pred_check_branch
          %268 = sbr.rel (%p266) target = $region28
        $region27: #{ctm_forward.4} parent=23 // pred_region
          %s269 = sand.u32 %s45, 1
          %s270 = scalar_lea.sflag [#allocation4], %s269
          %s271 = sand.u32 %s45, 1
          %s272 = smul.addr %s271, 32
          %s273 = scalar_lea.vmem [#allocation3], %s272
          %s274 = smul.u32 4, %s29
          %s276 = ssub.s32 512, 512
          %277 = vsyncadd %s270, %s276
          %s278 = smul.addr %s28, 4
          %s279 = sadd.s32 %s274, %s278
          %s280 = smul.addr %s279, 128
          %s281 = scalar_lea.hbm %s0, %s280
          %s282 = sshll.u32 %s273, 4
          %s283 = int_to_ptr.vmem [resolvable:$true] %s282
          %288 = dma.hbm_to_vmem [thread:$0]  %s281, 512, %s283, %s270, 128, 128, 8
        $region28: #{ctm_forward.4} parent=23 // pred_fallthru
          _
        // Predicated region
        $region29: #{ctm_forward.4} parent=23 // pred_check
          %p289 = pneg %p81
        $region30: #{ctm_forward.4} parent=23 // pred_check_branch
          %291 = sbr.rel (%p289) target = $region32
        $region31: #{ctm_forward.4} parent=23 // pred_region
          %s292 = sand.u32 %s71, 1
          %s293 = scalar_lea.sflag [#allocation6], %s292
          %s294 = sand.u32 %s71, 1
          %s295 = smul.addr %s294, 32
          %s296 = scalar_lea.vmem [#allocation5], %s295
          %s298 = ssub.s32 512, 512
          %299 = vsyncadd %s293, %s298
          %s300 = smul.addr %s28, 4
          %s301 = smul.addr %s300, 128
          %s302 = scalar_lea.hbm %s1, %s301
          %s303 = sshll.u32 %s296, 4
          %s304 = int_to_ptr.vmem [resolvable:$true] %s303
          %309 = dma.hbm_to_vmem [thread:$0]  %s302, 512, %s304, %s293, 128, 128, 8
        $region32: #{ctm_forward.4} parent=23 // pred_fallthru
          _
        // Predicated region
        $region33: #{ctm_forward.4} parent=23 // pred_check
          %p310 = pneg %p151
        $region34: #{ctm_forward.4} parent=23 // pred_check_branch
          %312 = sbr.rel (%p310) target = $region36
        $region35: #{ctm_forward.4} parent=23 // pred_region
          %p313 = scmp.lt.s32.totalorder %s28, 1
          %s314 = scalar_select %p313, %s28, 1
          %p315 = scmp.lt.s32.totalorder %s29, 0
          %s316 = scalar_select %p315, %s29, 0
          %s317 = sadd.s32 %s316, %s314
          %s318 = scalar_lea.vmem %s4, %s317
        $region36: #{ctm_forward.4} parent=23 // pred_fallthru
          _
      $region24: #{ctm_forward.4} parent=5 // pred_fallthru
        _
      %p319 = scmp.le.s32.totalorder 1, %s21
      %p320 = scmp.lt.s32.totalorder %s21, 3
      %p321 = pnand %p319, %p320
      %p322 = pneg %p321
      // Predicated region
      $region37: #{ctm_forward.4} parent=5 // pred_check
        _
      $region38: #{ctm_forward.4} parent=5 // pred_check_branch
        %324 = sbr.rel (%p321) target = $region40
      $region39: #{ctm_forward.4} parent=5 // pred_region
        %s325 = ssub.s32 %s21, 1
        %s326 = sand.u32 %s48, 1
        %s327 = scalar_lea.sflag [#allocation4], %s326
        %s328 = sand.u32 %s48, 1
        %s329 = smul.addr %s328, 32
        %s330 = scalar_lea.vmem [#allocation3], %s329
        // Predicated region
        $region41: #{ctm_forward.4} parent=39 // pred_check
          %p331 = pneg %p61
        $region42: #{ctm_forward.4} parent=39 // pred_check_branch
          %333 = sbr.rel (%p331) target = $region44
        $region43: #{ctm_forward.4} parent=39 // pred_region
          %334 = dma.done %s327, 512
        $region44: #{ctm_forward.4} parent=39 // pred_fallthru
          _
        %s335 = sand.u32 %s74, 1
        %s336 = scalar_lea.sflag [#allocation6], %s335
        %s337 = sand.u32 %s74, 1
        %s338 = smul.addr %s337, 32
        %s339 = scalar_lea.vmem [#allocation5], %s338
        // Predicated region
        $region45: #{ctm_forward.4} parent=39 // pred_check
          %p340 = pneg %p87
        $region46: #{ctm_forward.4} parent=39 // pred_check_branch
          %342 = sbr.rel (%p340) target = $region48
        $region47: #{ctm_forward.4} parent=39 // pred_region
          %343 = dma.done %s336, 512
        $region48: #{ctm_forward.4} parent=39 // pred_fallthru
          _
        %s344 = sand.u32 %s48, 1
        %s345 = scalar_lea.sflag [#allocation4], %s344
        %s346 = sand.u32 %s48, 1
        %s347 = smul.addr %s346, 32
        %s348 = scalar_lea.vmem [#allocation3], %s347
        %p349 = pneg %p61
        %p350 = pneg %p58
        %s351 = sand.u32 %s74, 1
        %s352 = scalar_lea.sflag [#allocation6], %s351
        %s353 = sand.u32 %s74, 1
        %s354 = smul.addr %s353, 32
        %s355 = scalar_lea.vmem [#allocation5], %s354
        %p356 = pneg %p87
        %p357 = pneg %p84
        %p358 = pneg %p108
        %p359 = pneg %p105
        %p360 = pneg %p129
        %p361 = pneg %p126
        %p362 = scmp.lt.s32.totalorder %s30, 1
        %s363 = scalar_select %p362, %s30, 1
        %p364 = scmp.lt.s32.totalorder %s31, 0
        %s365 = scalar_select %p364, %s31, 0
        %s366 = sadd.s32 %s365, %s363
        %s367 = scalar_lea.vmem %s4, %s366
        %p368 = pneg %p157
        %p369 = pneg %p154
        %p370 = pneg %p185
        %p371 = pneg %p182
        %p372 = scmp.lt.s32.totalorder %s30, 1
        %s373 = scalar_select %p372, %s30, 1
        %p374 = scmp.lt.s32.totalorder %s31, 0
        %s375 = scalar_select %p374, %s31, 0
        %s376 = sadd.s32 %s375, %s373
        %s377 = scalar_lea.vmem %s5, %s376
        %p378 = pneg %p213
        %p379 = pneg %p210
        %p380 = scmp.lt.s32.totalorder %s30, 1
        %s381 = scalar_select %p380, %s30, 1
        %p382 = scmp.lt.s32.totalorder %s31, 0
        %s383 = scalar_select %p382, %s31, 0
        %s384 = sadd.s32 %s383, %s381
        %s385 = scalar_lea.vmem %s6, %s384
        %p386 = pneg %p241
        %p387 = pneg %p238
        %p388 = scmp.lt.s32.totalorder %s30, 1
        %s389 = scalar_select %p388, %s30, 1
        %p390 = scmp.lt.s32.totalorder %s31, 0
        %s391 = scalar_select %p390, %s31, 0
        %s392 = sadd.s32 %s391, %s389
        %s393 = scalar_lea.vmem %s7, %s392
        %s394 = smul.u32 4, %s31
        %p395 = scmp.lt.s32.totalorder %s30, 1
        %s396 = scalar_select %p395, %s30, 1
        %p397 = scmp.lt.s32.totalorder %s31, 0
        %s398 = scalar_select %p397, %s31, 0
        %s399 = sadd.s32 %s398, %s396
        %s400 = scalar_lea.vmem %s4, %s399
        %p401 = scmp.lt.s32.totalorder %s30, 1
        %s402 = scalar_select %p401, %s30, 1
        %p403 = scmp.lt.s32.totalorder %s31, 0
        %s404 = scalar_select %p403, %s31, 0
        %s405 = sadd.s32 %s404, %s402
        %s406 = scalar_lea.vmem %s5, %s405
        %p407 = scmp.lt.s32.totalorder %s30, 1
        %s408 = scalar_select %p407, %s30, 1
        %p409 = scmp.lt.s32.totalorder %s31, 0
        %s410 = scalar_select %p409, %s31, 0
        %s411 = sadd.s32 %s410, %s408
        %s412 = scalar_lea.vmem %s6, %s411
        %p413 = scmp.lt.s32.totalorder %s30, 1
        %s414 = scalar_select %p413, %s30, 1
        %p415 = scmp.lt.s32.totalorder %s31, 0
        %s416 = scalar_select %p415, %s31, 0
        %s417 = sadd.s32 %s416, %s414
        %s418 = scalar_lea.vmem %s7, %s417
        %v420 = vld [vmem:[%s330] sm:$0xff]
        %v421 = vld [vmem:[%s330 + $0x8] sm:$0xff]
        %v422 = vld [vmem:[%s330 + $0x10] sm:$0xff]
        %v423 = vld [vmem:[%s330 + $0x18] sm:$0xff]
        %v424 = vld [vmem:[%s339] sm:$0xff]
        %v425 = vld [vmem:[%s339 + $0x8] sm:$0xff]
        %v426 = vld [vmem:[%s339 + $0x10] sm:$0xff]
        %v427 = vld [vmem:[%s339 + $0x18] sm:$0xff]
        %v428 = vld [vmem:[%s2] sm:$0x1]
        %v430 = vlaneseq
        %v431 = vshrl.u32 %v430, 7
        %v432 = vsub.s32 0, %v431
        %v433 = vrot.slane %v428, %v432
        %v435 = vmul.f32 %v420, %v433
        %v436 = vmul.f32 %v421, %v433
        %v437 = vmul.f32 %v422, %v433
        %v438 = vmul.f32 %v423, %v433
        %vm439 = vcmask 261120
        %v440 = vsel %vm439, %v435, 0.0
        %441 = vadd.xlane.f32.xlu0 %v440
        %v442 = vpop.xlane.xlu0 %441
        %v443 = vsel %vm439, %v436, 0.0
        %444 = vadd.xlane.f32.xlu0 %v443
        %v445 = vpop.xlane.xlu0 %444
        %v446 = vsel %vm439, %v437, 0.0
        %447 = vadd.xlane.f32.xlu0 %v446
        %v448 = vpop.xlane.xlu0 %447
        %v449 = vsel %vm439, %v438, 0.0
        %450 = vadd.xlane.f32.xlu0 %v449
        %v451 = vpop.xlane.xlu0 %450
        %s452 = sld [smem:[#allocation2]]
        %v453 = vstv %s452
        %v454 = vadd.f32 %v442, %v453
        %v455 = vadd.f32 %v445, %v453
        %v456 = vadd.f32 %v448, %v453
        %v457 = vadd.f32 %v451, %v453
        %458 = vxpose.xlu0.b32.start [1/16] %v454, 128
        %459 = vxpose.xlu0.b32.cont [2/16] %v455, 128
        %460 = vxpose.xlu0.b32.cont [3/16] %v456, 128
        %461 = vxpose.xlu0.b32.cont [4/16] %v457, 128
        %462 = vxpose.xlu0.b32.cont [5/16] 0.0, 128
        %463 = vxpose.xlu0.b32.cont [6/16] 0.0, 128
        %464 = vxpose.xlu0.b32.cont [7/16] 0.0, 128
        %465 = vxpose.xlu0.b32.cont [8/16] 0.0, 128
        %466 = vxpose.xlu0.b32.cont [9/16] 0.0, 128
        %467 = vxpose.xlu0.b32.cont [10/16] 0.0, 128
        %468 = vxpose.xlu0.b32.cont [11/16] 0.0, 128
        %469 = vxpose.xlu0.b32.cont [12/16] 0.0, 128
        %470 = vxpose.xlu0.b32.cont [13/16] 0.0, 128
        %471 = vxpose.xlu0.b32.cont [14/16] 0.0, 128
        %472 = vxpose.xlu0.b32.cont [15/16] 0.0, 128
        %473 = vxpose.xlu0.b32.end [16/16] 0.0, 128
        %v474 = vpop.trf.xlu0
        %v475 = vpop.trf.xlu0
        %v476 = vpop.trf.xlu0
        %v477 = vpop.trf.xlu0
        %v478 = vpop.trf.xlu0
        %v479 = vpop.trf.xlu0
        %v480 = vpop.trf.xlu0
        %v481 = vpop.trf.xlu0
        %v482 = vpop.trf.xlu0
        %v483 = vpop.trf.xlu0
        %v484 = vpop.trf.xlu0
        %v485 = vpop.trf.xlu0
        %v486 = vpop.trf.xlu0
        %v487 = vpop.trf.xlu0
        %v488 = vpop.trf.xlu0
        %v489 = vpop.trf.xlu0
        %v490 = vmul.f32 %v474, 1.442695
        %v491 = vpow.pop %v490
        %vm492 = vcmask 253952
        %493 = vst.msk [vmem:[%s406] sm:$0x1] %vm492, %v491
        %v494 = vmul.f32 %v420, 0.17677669
        %v495 = vmul.f32 %v421, 0.17677669
        %v496 = vmul.f32 %v422, 0.17677669
        %v497 = vmul.f32 %v423, 0.17677669
        %v498 = vmul.f32 %v424, 0.17677669
        %v499 = vmul.f32 %v425, 0.17677669
        %v500 = vmul.f32 %v426, 0.17677669
        %v501 = vmul.f32 %v427, 0.17677669
        %v502 = vpack.c.bf16 %v495, %v494
        %v503 = vpack.c.bf16 %v497, %v496
        %v504 = vpack.c.bf16 %v499, %v498
        %v505 = vpack.c.bf16 %v501, %v500
        %v507 = vsel %vm439, %v502, 0
        %v510 = vsel %vm439, %v503, 0
        %v513 = vsel %vm439, %v504, 0
        %v516 = vsel %vm439, %v505, 0
        %518 = vmatprep.subr.bf16.mxu0 0
        %519 = vmatpush1.bf16.xpose.msra.mxu0 0
        %520 = vmatprep.subr.bf16.mxu0 0
        %521 = vmatpush1.bf16.xpose.msra.mxu0 0
        %522 = vmatprep.subr.bf16.mxu0 0
        %523 = vmatpush1.bf16.xpose.msra.mxu0 0
        %524 = vmatprep.subr.bf16.mxu0 0
        %525 = vmatpush1.bf16.xpose.msra.mxu0 0
        %526 = vmatprep.subr.bf16.mxu0 0
        %527 = vmatpush1.bf16.xpose.msra.mxu0 0
        %528 = vmatprep.subr.bf16.mxu0 0
        %529 = vmatpush1.bf16.xpose.msra.mxu0 0
        %530 = vmatprep.subr.bf16.mxu0 0
        %531 = vmatpush1.bf16.xpose.msra.mxu0 %v516
        %532 = vmatprep.subr.bf16.mxu0 0
        %533 = vmatpush1.bf16.xpose.msra.mxu0 %v513
        %534 = vmatprep.subr.bf16.mxu0 0
        %535 = vmatpush2.bf16.xpose.msra.mxu0 0
        %536 = vmatprep.subr.bf16.mxu0 0
        %537 = vmatpush2.bf16.xpose.msra.mxu0 0
        %538 = vmatprep.subr.bf16.mxu0 0
        %539 = vmatpush2.bf16.xpose.msra.mxu0 0
        %540 = vmatprep.subr.bf16.mxu0 0
        %541 = vmatpush2.bf16.xpose.msra.mxu0 0
        %542 = vmatprep.subr.bf16.mxu0 0
        %543 = vmatpush2.bf16.xpose.msra.mxu0 0
        %544 = vmatprep.subr.bf16.mxu0 0
        %545 = vmatpush2.bf16.xpose.msra.mxu0 0
        %546 = vmatprep.subr.bf16.mxu0 0
        %547 = vmatpush2.bf16.xpose.msra.mxu0 0
        %548 = vmatprep.subr.bf16.mxu0 0
        %549 = vmatpush2.bf16.xpose.msra.mxu0 0
        %550 = vmatprep.mubr.bf16.mxu0 0
        %551 = vmatmul.mubr.bf16.gmra.mxu0 %v507
        %v552 = vpop.f32.mrf.mxu0
        %v553 = vadd.f32 0.0, %v552
        %v554 = vpop.f32.mrf.mxu0
        %v555 = vpop.f32.mrf.mxu0
        %v556 = vadd.f32 0.0, %v555
        %v557 = vpop.f32.mrf.mxu0
        %558 = vmatprep.mubr.bf16.mxu0 0
        %559 = vmatmul.mubr.bf16.gmra.mxu0 %v510
        %v560 = vpop.f32.mrf.mxu0
        %v561 = vadd.f32 0.0, %v560
        %v562 = vpop.f32.mrf.mxu0
        %v563 = vpop.f32.mrf.mxu0
        %v564 = vadd.f32 0.0, %v563
        %v565 = vpop.f32.mrf.mxu0
        %566 = vdwg.mxu0
        %v567 = vmul.f32 %v494, %v494
        %v568 = vmul.f32 %v495, %v495
        %v569 = vmul.f32 %v496, %v496
        %v570 = vmul.f32 %v497, %v497
        %v571 = vsel %vm439, %v567, 0.0
        %572 = vadd.xlane.f32.xlu0 %v571
        %v573 = vpop.xlane.xlu0 %572
        %v574 = vsel %vm439, %v568, 0.0
        %575 = vadd.xlane.f32.xlu0 %v574
        %v576 = vpop.xlane.xlu0 %575
        %v577 = vsel %vm439, %v569, 0.0
        %578 = vadd.xlane.f32.xlu0 %v577
        %v579 = vpop.xlane.xlu0 %578
        %v580 = vsel %vm439, %v570, 0.0
        %581 = vadd.xlane.f32.xlu0 %v580
        %v582 = vpop.xlane.xlu0 %581
        %v583 = vmul.f32 %v498, %v498
        %v584 = vmul.f32 %v499, %v499
        %v585 = vmul.f32 %v500, %v500
        %v586 = vmul.f32 %v501, %v501
        %v587 = vsel %vm439, %v583, 0.0
        %588 = vadd.xlane.f32.xlu0 %v587
        %v589 = vpop.xlane.xlu0 %588
        %v590 = vsel %vm439, %v584, 0.0
        %591 = vadd.xlane.f32.xlu0 %v590
        %v592 = vpop.xlane.xlu0 %591
        %v593 = vsel %vm439, %v585, 0.0
        %594 = vadd.xlane.f32.xlu0 %v593
        %v595 = vpop.xlane.xlu0 %594
        %v596 = vsel %vm439, %v586, 0.0
        %597 = vadd.xlane.f32.xlu0 %v596
        %v598 = vpop.xlane.xlu0 %597
        %599 = vxpose.xlu0.b32.start [1/16] %v589, 128
        %600 = vxpose.xlu0.b32.cont [2/16] %v592, 128
        %601 = vxpose.xlu0.b32.cont [3/16] %v595, 128
        %602 = vxpose.xlu0.b32.cont [4/16] %v598, 128
        %603 = vxpose.xlu0.b32.cont [5/16] 0.0, 128
        %604 = vxpose.xlu0.b32.cont [6/16] 0.0, 128
        %605 = vxpose.xlu0.b32.cont [7/16] 0.0, 128
        %606 = vxpose.xlu0.b32.cont [8/16] 0.0, 128
        %607 = vxpose.xlu0.b32.cont [9/16] 0.0, 128
        %608 = vxpose.xlu0.b32.cont [10/16] 0.0, 128
        %609 = vxpose.xlu0.b32.cont [11/16] 0.0, 128
        %610 = vxpose.xlu0.b32.cont [12/16] 0.0, 128
        %611 = vxpose.xlu0.b32.cont [13/16] 0.0, 128
        %612 = vxpose.xlu0.b32.cont [14/16] 0.0, 128
        %613 = vxpose.xlu0.b32.cont [15/16] 0.0, 128
        %614 = vxpose.xlu0.b32.end [16/16] 0.0, 128
        %v615 = vpop.trf.xlu0
        %v616 = vpop.trf.xlu0
        %v617 = vpop.trf.xlu0
        %v618 = vpop.trf.xlu0
        %v619 = vpop.trf.xlu0
        %v620 = vpop.trf.xlu0
        %v621 = vpop.trf.xlu0
        %v622 = vpop.trf.xlu0
        %v623 = vpop.trf.xlu0
        %v624 = vpop.trf.xlu0
        %v625 = vpop.trf.xlu0
        %v626 = vpop.trf.xlu0
        %v627 = vpop.trf.xlu0
        %v628 = vpop.trf.xlu0
        %v629 = vpop.trf.xlu0
        %v630 = vpop.trf.xlu0
        %v631 = vlaneseq
        %v632 = vshrl.u32 %v631, 7
        %v633 = vsub.s32 0, %v632
        %v634 = vrot.slane %v615, %v633
        %v635 = vadd.f32 %v573, %v634
        %v636 = vadd.f32 %v576, %v634
        %v637 = vadd.f32 %v579, %v634
        %v638 = vadd.f32 %v582, %v634
        %v639 = vmul.f32 %v553, 2.0
        %v640 = vmul.f32 %v556, 2.0
        %v641 = vmul.f32 %v561, 2.0
        %v642 = vmul.f32 %v564, 2.0
        %v643 = vsub.f32 %v635, %v639
        %v644 = vsub.f32 %v636, %v640
        %v645 = vsub.f32 %v637, %v641
        %v646 = vsub.f32 %v638, %v642
        %v647 = vmax.f32 %v643, 0.0
        %v648 = vmax.f32 %v644, 0.0
        %v649 = vmax.f32 %v645, 0.0
        %v650 = vmax.f32 %v646, 0.0
        %v651 = vsel %vm439, %v647, -inf
        %652 = vmax.xlane.f32.xlu0 %v651
        %v653 = vpop.xlane.xlu0 %652
        %v654 = vsel %vm439, %v648, -inf
        %655 = vmax.xlane.f32.xlu0 %v654
        %v656 = vpop.xlane.xlu0 %655
        %v657 = vsel %vm439, %v649, -inf
        %658 = vmax.xlane.f32.xlu0 %v657
        %v659 = vpop.xlane.xlu0 %658
        %v660 = vsel %vm439, %v650, -inf
        %661 = vmax.xlane.f32.xlu0 %v660
        %v662 = vpop.xlane.xlu0 %661
        %663 = vxpose.xlu0.b32.start [1/16] %v653, 128
        %664 = vxpose.xlu0.b32.cont [2/16] %v656, 128
        %665 = vxpose.xlu0.b32.cont [3/16] %v659, 128
        %666 = vxpose.xlu0.b32.cont [4/16] %v662, 128
        %667 = vxpose.xlu0.b32.cont [5/16] 0.0, 128
        %668 = vxpose.xlu0.b32.cont [6/16] 0.0, 128
        %669 = vxpose.xlu0.b32.cont [7/16] 0.0, 128
        %670 = vxpose.xlu0.b32.cont [8/16] 0.0, 128
        %671 = vxpose.xlu0.b32.cont [9/16] 0.0, 128
        %672 = vxpose.xlu0.b32.cont [10/16] 0.0, 128
        %673 = vxpose.xlu0.b32.cont [11/16] 0.0, 128
        %674 = vxpose.xlu0.b32.cont [12/16] 0.0, 128
        %675 = vxpose.xlu0.b32.cont [13/16] 0.0, 128
        %676 = vxpose.xlu0.b32.cont [14/16] 0.0, 128
        %677 = vxpose.xlu0.b32.cont [15/16] 0.0, 128
        %678 = vxpose.xlu0.b32.end [16/16] 0.0, 128
        %v679 = vpop.trf.xlu0
        %v680 = vpop.trf.xlu0
        %v681 = vpop.trf.xlu0
        %v682 = vpop.trf.xlu0
        %v683 = vpop.trf.xlu0
        %v684 = vpop.trf.xlu0
        %v685 = vpop.trf.xlu0
        %v686 = vpop.trf.xlu0
        %v687 = vpop.trf.xlu0
        %v688 = vpop.trf.xlu0
        %v689 = vpop.trf.xlu0
        %v690 = vpop.trf.xlu0
        %v691 = vpop.trf.xlu0
        %v692 = vpop.trf.xlu0
        %v693 = vpop.trf.xlu0
        %v694 = vpop.trf.xlu0
        %695 = vst.msk [vmem:[%s418] sm:$0x1] %vm492, %v679
        %v696 = vlaneseq
        %v697 = vand.u32 %v696, 127
        %v698 = vsel %vm439, %v647, inf
        %699 = vmin.xlane.f32.xlu0 %v698
        %v700 = vpop.xlane.xlu0 %699
        %v701 = vsel %vm439, %v648, inf
        %702 = vmin.xlane.f32.xlu0 %v701
        %v703 = vpop.xlane.xlu0 %702
        %v704 = vsel %vm439, %v649, inf
        %705 = vmin.xlane.f32.xlu0 %v704
        %v706 = vpop.xlane.xlu0 %705
        %v707 = vsel %vm439, %v650, inf
        %708 = vmin.xlane.f32.xlu0 %v707
        %v709 = vpop.xlane.xlu0 %708
        %v710 = vadd.f32 %v700, 0.0
        %v711 = vadd.f32 %v703, 0.0
        %v712 = vadd.f32 %v706, 0.0
        %v713 = vadd.f32 %v709, 0.0
        %vm714 = vcmp.le.f32.partialorder %v647, %v700
        %vm715 = vcmp.le.f32.partialorder %v648, %v703
        %vm716 = vcmp.le.f32.partialorder %v649, %v706
        %vm717 = vcmp.le.f32.partialorder %v650, %v709
        %v718 = vsel %vm714, %v697, 32
        %v719 = vsel %vm715, %v697, 32
        %v720 = vsel %vm716, %v697, 32
        %v721 = vsel %vm717, %v697, 32
        %v722 = vsel %vm439, %v718, 2147483647
        %v723 = vand.u32 %v722, 65535
        %v724 = vshra.s32 %v722, 16
        %v725 = vcvt.s32.f32 %v723
        %v726 = vcvt.s32.f32 %v724
        %727 = vmin.xlane.f32.xlu0 %v726
        %v728 = vpop.xlane.xlu0 %727
        %vm729 = vcmp.eq.f32.partialorder %v726, %v728
        %v730 = vsel %vm729, %v725, inf
        %731 = vmin.xlane.f32.xlu0 %v730
        %v732 = vpop.xlane.xlu0 %731
        %v733 = vcvt.f32.s32 %v732
        %v734 = vcvt.f32.s32 %v728
        %v735 = vshll.u32 %v734, 16
        %v736 = vadd.s32 %v735, %v733
        %v737 = vsel %vm439, %v719, 2147483647
        %v738 = vand.u32 %v737, 65535
        %v739 = vshra.s32 %v737, 16
        %v740 = vcvt.s32.f32 %v738
        %v741 = vcvt.s32.f32 %v739
        %742 = vmin.xlane.f32.xlu0 %v741
        %v743 = vpop.xlane.xlu0 %742
        %vm744 = vcmp.eq.f32.partialorder %v741, %v743
        %v745 = vsel %vm744, %v740, inf
        %746 = vmin.xlane.f32.xlu0 %v745
        %v747 = vpop.xlane.xlu0 %746
        %v748 = vcvt.f32.s32 %v747
        %v749 = vcvt.f32.s32 %v743
        %v750 = vshll.u32 %v749, 16
        %v751 = vadd.s32 %v750, %v748
        %v752 = vsel %vm439, %v720, 2147483647
        %v753 = vand.u32 %v752, 65535
        %v754 = vshra.s32 %v752, 16
        %v755 = vcvt.s32.f32 %v753
        %v756 = vcvt.s32.f32 %v754
        %757 = vmin.xlane.f32.xlu0 %v756
        %v758 = vpop.xlane.xlu0 %757
        %vm759 = vcmp.eq.f32.partialorder %v756, %v758
        %v760 = vsel %vm759, %v755, inf
        %761 = vmin.xlane.f32.xlu0 %v760
        %v762 = vpop.xlane.xlu0 %761
        %v763 = vcvt.f32.s32 %v762
        %v764 = vcvt.f32.s32 %v758
        %v765 = vshll.u32 %v764, 16
        %v766 = vadd.s32 %v765, %v763
        %v767 = vsel %vm439, %v721, 2147483647
        %v768 = vand.u32 %v767, 65535
        %v769 = vshra.s32 %v767, 16
        %v770 = vcvt.s32.f32 %v768
        %v771 = vcvt.s32.f32 %v769
        %772 = vmin.xlane.f32.xlu0 %v771
        %v773 = vpop.xlane.xlu0 %772
        %vm774 = vcmp.eq.f32.partialorder %v771, %v773
        %v775 = vsel %vm774, %v770, inf
        %776 = vmin.xlane.f32.xlu0 %v775
        %v777 = vpop.xlane.xlu0 %776
        %v778 = vcvt.f32.s32 %v777
        %v779 = vcvt.f32.s32 %v773
        %v780 = vshll.u32 %v779, 16
        %v781 = vadd.s32 %v780, %v778
        %vm782 = vcmp.eq.s32.totalorder %v697, %v736
        %vm783 = vcmp.eq.s32.totalorder %v697, %v751
        %vm784 = vcmp.eq.s32.totalorder %v697, %v766
        %vm785 = vcmp.eq.s32.totalorder %v697, %v781
        %v786 = vsel %vm782, 3e+38, %v647
        %v787 = vsel %vm783, 3e+38, %v648
        %v788 = vsel %vm784, 3e+38, %v649
        %v789 = vsel %vm785, 3e+38, %v650
        %v790 = vsel %vm439, %v786, inf
        %791 = vmin.xlane.f32.xlu0 %v790
        %v792 = vpop.xlane.xlu0 %791
        %v793 = vsel %vm439, %v787, inf
        %794 = vmin.xlane.f32.xlu0 %v793
        %v795 = vpop.xlane.xlu0 %794
        %v796 = vsel %vm439, %v788, inf
        %797 = vmin.xlane.f32.xlu0 %v796
        %v798 = vpop.xlane.xlu0 %797
        %v799 = vsel %vm439, %v789, inf
        %800 = vmin.xlane.f32.xlu0 %v799
        %v801 = vpop.xlane.xlu0 %800
        %v802 = vadd.f32 %v710, %v792
        %v803 = vadd.f32 %v711, %v795
        %v804 = vadd.f32 %v712, %v798
        %v805 = vadd.f32 %v713, %v801
        %vm806 = vcmp.le.f32.partialorder %v786, %v792
        %vm807 = vcmp.le.f32.partialorder %v787, %v795
        %vm808 = vcmp.le.f32.partialorder %v788, %v798
        %vm809 = vcmp.le.f32.partialorder %v789, %v801
        %v810 = vsel %vm806, %v697, 32
        %v811 = vsel %vm807, %v697, 32
        %v812 = vsel %vm808, %v697, 32
        %v813 = vsel %vm809, %v697, 32
        %v814 = vsel %vm439, %v810, 2147483647
        %v815 = vand.u32 %v814, 65535
        %v816 = vshra.s32 %v814, 16
        %v817 = vcvt.s32.f32 %v815
        %v818 = vcvt.s32.f32 %v816
        %819 = vmin.xlane.f32.xlu0 %v818
        %v820 = vpop.xlane.xlu0 %819
        %vm821 = vcmp.eq.f32.partialorder %v818, %v820
        %v822 = vsel %vm821, %v817, inf
        %823 = vmin.xlane.f32.xlu0 %v822
        %v824 = vpop.xlane.xlu0 %823
        %v825 = vcvt.f32.s32 %v824
        %v826 = vcvt.f32.s32 %v820
        %v827 = vshll.u32 %v826, 16
        %v828 = vadd.s32 %v827, %v825
        %v829 = vsel %vm439, %v811, 2147483647
        %v830 = vand.u32 %v829, 65535
        %v831 = vshra.s32 %v829, 16
        %v832 = vcvt.s32.f32 %v830
        %v833 = vcvt.s32.f32 %v831
        %834 = vmin.xlane.f32.xlu0 %v833
        %v835 = vpop.xlane.xlu0 %834
        %vm836 = vcmp.eq.f32.partialorder %v833, %v835
        %v837 = vsel %vm836, %v832, inf
        %838 = vmin.xlane.f32.xlu0 %v837
        %v839 = vpop.xlane.xlu0 %838
        %v840 = vcvt.f32.s32 %v839
        %v841 = vcvt.f32.s32 %v835
        %v842 = vshll.u32 %v841, 16
        %v843 = vadd.s32 %v842, %v840
        %v844 = vsel %vm439, %v812, 2147483647
        %v845 = vand.u32 %v844, 65535
        %v846 = vshra.s32 %v844, 16
        %v847 = vcvt.s32.f32 %v845
        %v848 = vcvt.s32.f32 %v846
        %849 = vmin.xlane.f32.xlu0 %v848
        %v850 = vpop.xlane.xlu0 %849
        %vm851 = vcmp.eq.f32.partialorder %v848, %v850
        %v852 = vsel %vm851, %v847, inf
        %853 = vmin.xlane.f32.xlu0 %v852
        %v854 = vpop.xlane.xlu0 %853
        %v855 = vcvt.f32.s32 %v854
        %v856 = vcvt.f32.s32 %v850
        %v857 = vshll.u32 %v856, 16
        %v858 = vadd.s32 %v857, %v855
        %v859 = vsel %vm439, %v813, 2147483647
        %v860 = vand.u32 %v859, 65535
        %v861 = vshra.s32 %v859, 16
        %v862 = vcvt.s32.f32 %v860
        %v863 = vcvt.s32.f32 %v861
        %864 = vmin.xlane.f32.xlu0 %v863
        %v865 = vpop.xlane.xlu0 %864
        %vm866 = vcmp.eq.f32.partialorder %v863, %v865
        %v867 = vsel %vm866, %v862, inf
        %868 = vmin.xlane.f32.xlu0 %v867
        %v869 = vpop.xlane.xlu0 %868
        %v870 = vcvt.f32.s32 %v869
        %v871 = vcvt.f32.s32 %v865
        %v872 = vshll.u32 %v871, 16
        %v873 = vadd.s32 %v872, %v870
        %vm874 = vcmp.eq.s32.totalorder %v697, %v828
        %vm875 = vcmp.eq.s32.totalorder %v697, %v843
        %vm876 = vcmp.eq.s32.totalorder %v697, %v858
        %vm877 = vcmp.eq.s32.totalorder %v697, %v873
        %v878 = vsel %vm874, 3e+38, %v786
        %v879 = vsel %vm875, 3e+38, %v787
        %v880 = vsel %vm876, 3e+38, %v788
        %v881 = vsel %vm877, 3e+38, %v789
        %v882 = vsel %vm439, %v878, inf
        %883 = vmin.xlane.f32.xlu0 %v882
        %v884 = vpop.xlane.xlu0 %883
        %v885 = vsel %vm439, %v879, inf
        %886 = vmin.xlane.f32.xlu0 %v885
        %v887 = vpop.xlane.xlu0 %886
        %v888 = vsel %vm439, %v880, inf
        %889 = vmin.xlane.f32.xlu0 %v888
        %v890 = vpop.xlane.xlu0 %889
        %v891 = vsel %vm439, %v881, inf
        %892 = vmin.xlane.f32.xlu0 %v891
        %v893 = vpop.xlane.xlu0 %892
        %v894 = vadd.f32 %v802, %v884
        %v895 = vadd.f32 %v803, %v887
        %v896 = vadd.f32 %v804, %v890
        %v897 = vadd.f32 %v805, %v893
        %vm898 = vcmp.le.f32.partialorder %v878, %v884
        %vm899 = vcmp.le.f32.partialorder %v879, %v887
        %vm900 = vcmp.le.f32.partialorder %v880, %v890
        %vm901 = vcmp.le.f32.partialorder %v881, %v893
        %v902 = vsel %vm898, %v697, 32
        %v903 = vsel %vm899, %v697, 32
        %v904 = vsel %vm900, %v697, 32
        %v905 = vsel %vm901, %v697, 32
        %v906 = vsel %vm439, %v902, 2147483647
        %v907 = vand.u32 %v906, 65535
        %v908 = vshra.s32 %v906, 16
        %v909 = vcvt.s32.f32 %v907
        %v910 = vcvt.s32.f32 %v908
        %911 = vmin.xlane.f32.xlu0 %v910
        %v912 = vpop.xlane.xlu0 %911
        %vm913 = vcmp.eq.f32.partialorder %v910, %v912
        %v914 = vsel %vm913, %v909, inf
        %915 = vmin.xlane.f32.xlu0 %v914
        %v916 = vpop.xlane.xlu0 %915
        %v917 = vcvt.f32.s32 %v916
        %v918 = vcvt.f32.s32 %v912
        %v919 = vshll.u32 %v918, 16
        %v920 = vadd.s32 %v919, %v917
        %v921 = vsel %vm439, %v903, 2147483647
        %v922 = vand.u32 %v921, 65535
        %v923 = vshra.s32 %v921, 16
        %v924 = vcvt.s32.f32 %v922
        %v925 = vcvt.s32.f32 %v923
        %926 = vmin.xlane.f32.xlu0 %v925
        %v927 = vpop.xlane.xlu0 %926
        %vm928 = vcmp.eq.f32.partialorder %v925, %v927
        %v929 = vsel %vm928, %v924, inf
        %930 = vmin.xlane.f32.xlu0 %v929
        %v931 = vpop.xlane.xlu0 %930
        %v932 = vcvt.f32.s32 %v931
        %v933 = vcvt.f32.s32 %v927
        %v934 = vshll.u32 %v933, 16
        %v935 = vadd.s32 %v934, %v932
        %v936 = vsel %vm439, %v904, 2147483647
        %v937 = vand.u32 %v936, 65535
        %v938 = vshra.s32 %v936, 16
        %v939 = vcvt.s32.f32 %v937
        %v940 = vcvt.s32.f32 %v938
        %941 = vmin.xlane.f32.xlu0 %v940
        %v942 = vpop.xlane.xlu0 %941
        %vm943 = vcmp.eq.f32.partialorder %v940, %v942
        %v944 = vsel %vm943, %v939, inf
        %945 = vmin.xlane.f32.xlu0 %v944
        %v946 = vpop.xlane.xlu0 %945
        %v947 = vcvt.f32.s32 %v946
        %v948 = vcvt.f32.s32 %v942
        %v949 = vshll.u32 %v948, 16
        %v950 = vadd.s32 %v949, %v947
        %v951 = vsel %vm439, %v905, 2147483647
        %v952 = vand.u32 %v951, 65535
        %v953 = vshra.s32 %v951, 16
        %v954 = vcvt.s32.f32 %v952
        %v955 = vcvt.s32.f32 %v953
        %956 = vmin.xlane.f32.xlu0 %v955
        %v957 = vpop.xlane.xlu0 %956
        %vm958 = vcmp.eq.f32.partialorder %v955, %v957
        %v959 = vsel %vm958, %v954, inf
        %960 = vmin.xlane.f32.xlu0 %v959
        %v961 = vpop.xlane.xlu0 %960
        %v962 = vcvt.f32.s32 %v961
        %v963 = vcvt.f32.s32 %v957
        %v964 = vshll.u32 %v963, 16
        %v965 = vadd.s32 %v964, %v962
        %vm966 = vcmp.eq.s32.totalorder %v697, %v920
        %vm967 = vcmp.eq.s32.totalorder %v697, %v935
        %vm968 = vcmp.eq.s32.totalorder %v697, %v950
        %vm969 = vcmp.eq.s32.totalorder %v697, %v965
        %v970 = vsel %vm966, 3e+38, %v878
        %v971 = vsel %vm967, 3e+38, %v879
        %v972 = vsel %vm968, 3e+38, %v880
        %v973 = vsel %vm969, 3e+38, %v881
        %v974 = vsel %vm439, %v970, inf
        %975 = vmin.xlane.f32.xlu0 %v974
        %v976 = vpop.xlane.xlu0 %975
        %v977 = vsel %vm439, %v971, inf
        %978 = vmin.xlane.f32.xlu0 %v977
        %v979 = vpop.xlane.xlu0 %978
        %v980 = vsel %vm439, %v972, inf
        %981 = vmin.xlane.f32.xlu0 %v980
        %v982 = vpop.xlane.xlu0 %981
        %v983 = vsel %vm439, %v973, inf
        %984 = vmin.xlane.f32.xlu0 %v983
        %v985 = vpop.xlane.xlu0 %984
        %v986 = vadd.f32 %v894, %v976
        %v987 = vadd.f32 %v895, %v979
        %v988 = vadd.f32 %v896, %v982
        %v989 = vadd.f32 %v897, %v985
        %vm990 = vcmp.le.f32.partialorder %v970, %v976
        %vm991 = vcmp.le.f32.partialorder %v971, %v979
        %vm992 = vcmp.le.f32.partialorder %v972, %v982
        %vm993 = vcmp.le.f32.partialorder %v973, %v985
        %v994 = vsel %vm990, %v697, 32
        %v995 = vsel %vm991, %v697, 32
        %v996 = vsel %vm992, %v697, 32
        %v997 = vsel %vm993, %v697, 32
        %v998 = vsel %vm439, %v994, 2147483647
        %v999 = vand.u32 %v998, 65535
        %v1000 = vshra.s32 %v998, 16
        %v1001 = vcvt.s32.f32 %v999
        %v1002 = vcvt.s32.f32 %v1000
        %1003 = vmin.xlane.f32.xlu0 %v1002
        %v1004 = vpop.xlane.xlu0 %1003
        %vm1005 = vcmp.eq.f32.partialorder %v1002, %v1004
        %v1006 = vsel %vm1005, %v1001, inf
        %1007 = vmin.xlane.f32.xlu0 %v1006
        %v1008 = vpop.xlane.xlu0 %1007
        %v1009 = vcvt.f32.s32 %v1008
        %v1010 = vcvt.f32.s32 %v1004
        %v1011 = vshll.u32 %v1010, 16
        %v1012 = vadd.s32 %v1011, %v1009
        %v1013 = vsel %vm439, %v995, 2147483647
        %v1014 = vand.u32 %v1013, 65535
        %v1015 = vshra.s32 %v1013, 16
        %v1016 = vcvt.s32.f32 %v1014
        %v1017 = vcvt.s32.f32 %v1015
        %1018 = vmin.xlane.f32.xlu0 %v1017
        %v1019 = vpop.xlane.xlu0 %1018
        %vm1020 = vcmp.eq.f32.partialorder %v1017, %v1019
        %v1021 = vsel %vm1020, %v1016, inf
        %1022 = vmin.xlane.f32.xlu0 %v1021
        %v1023 = vpop.xlane.xlu0 %1022
        %v1024 = vcvt.f32.s32 %v1023
        %v1025 = vcvt.f32.s32 %v1019
        %v1026 = vshll.u32 %v1025, 16
        %v1027 = vadd.s32 %v1026, %v1024
        %v1028 = vsel %vm439, %v996, 2147483647
        %v1029 = vand.u32 %v1028, 65535
        %v1030 = vshra.s32 %v1028, 16
        %v1031 = vcvt.s32.f32 %v1029
        %v1032 = vcvt.s32.f32 %v1030
        %1033 = vmin.xlane.f32.xlu0 %v1032
        %v1034 = vpop.xlane.xlu0 %1033
        %vm1035 = vcmp.eq.f32.partialorder %v1032, %v1034
        %v1036 = vsel %vm1035, %v1031, inf
        %1037 = vmin.xlane.f32.xlu0 %v1036
        %v1038 = vpop.xlane.xlu0 %1037
        %v1039 = vcvt.f32.s32 %v1038
        %v1040 = vcvt.f32.s32 %v1034
        %v1041 = vshll.u32 %v1040, 16
        %v1042 = vadd.s32 %v1041, %v1039
        %v1043 = vsel %vm439, %v997, 2147483647
        %v1044 = vand.u32 %v1043, 65535
        %v1045 = vshra.s32 %v1043, 16
        %v1046 = vcvt.s32.f32 %v1044
        %v1047 = vcvt.s32.f32 %v1045
        %1048 = vmin.xlane.f32.xlu0 %v1047
        %v1049 = vpop.xlane.xlu0 %1048
        %vm1050 = vcmp.eq.f32.partialorder %v1047, %v1049
        %v1051 = vsel %vm1050, %v1046, inf
        %1052 = vmin.xlane.f32.xlu0 %v1051
        %v1053 = vpop.xlane.xlu0 %1052
        %v1054 = vcvt.f32.s32 %v1053
        %v1055 = vcvt.f32.s32 %v1049
        %v1056 = vshll.u32 %v1055, 16
        %v1057 = vadd.s32 %v1056, %v1054
        %vm1058 = vcmp.eq.s32.totalorder %v697, %v1012
        %vm1059 = vcmp.eq.s32.totalorder %v697, %v1027
        %vm1060 = vcmp.eq.s32.totalorder %v697, %v1042
        %vm1061 = vcmp.eq.s32.totalorder %v697, %v1057
        %v1062 = vsel %vm1058, 3e+38, %v970
        %v1063 = vsel %vm1059, 3e+38, %v971
        %v1064 = vsel %vm1060, 3e+38, %v972
        %v1065 = vsel %vm1061, 3e+38, %v973
        %v1066 = vsel %vm439, %v1062, inf
        %1067 = vmin.xlane.f32.xlu0 %v1066
        %v1068 = vpop.xlane.xlu0 %1067
        %v1069 = vsel %vm439, %v1063, inf
        %1070 = vmin.xlane.f32.xlu0 %v1069
        %v1071 = vpop.xlane.xlu0 %1070
        %v1072 = vsel %vm439, %v1064, inf
        %1073 = vmin.xlane.f32.xlu0 %v1072
        %v1074 = vpop.xlane.xlu0 %1073
        %v1075 = vsel %vm439, %v1065, inf
        %1076 = vmin.xlane.f32.xlu0 %v1075
        %v1077 = vpop.xlane.xlu0 %1076
        %v1078 = vadd.f32 %v986, %v1068
        %v1079 = vadd.f32 %v987, %v1071
        %v1080 = vadd.f32 %v988, %v1074
        %v1081 = vadd.f32 %v989, %v1077
        %v1082 = vmul.f32 %v1078, 0.2
        %v1083 = vmul.f32 %v1079, 0.2
        %v1084 = vmul.f32 %v1080, 0.2
        %v1085 = vmul.f32 %v1081, 0.2
        %v1086 = vsub.f32 0.0, %v1082
        %v1087 = vsub.f32 0.0, %v1083
        %v1088 = vsub.f32 0.0, %v1084
        %v1089 = vsub.f32 0.0, %v1085
        %v1090 = vmul.f32 %v1086, 1.442695
        %v1091 = vpow.pop %v1090
        %v1092 = vmul.f32 %v1087, 1.442695
        %v1093 = vpow.pop %v1092
        %v1094 = vmul.f32 %v1088, 1.442695
        %v1095 = vpow.pop %v1094
        %v1096 = vmul.f32 %v1089, 1.442695
        %v1097 = vpow.pop %v1096
        %1098 = vxpose.xlu0.b32.start [1/16] %v1091, 128
        %1099 = vxpose.xlu0.b32.cont [2/16] %v1093, 128
        %1100 = vxpose.xlu0.b32.cont [3/16] %v1095, 128
        %1101 = vxpose.xlu0.b32.cont [4/16] %v1097, 128
        %1102 = vxpose.xlu0.b32.cont [5/16] 0.0, 128
        %1103 = vxpose.xlu0.b32.cont [6/16] 0.0, 128
        %1104 = vxpose.xlu0.b32.cont [7/16] 0.0, 128
        %1105 = vxpose.xlu0.b32.cont [8/16] 0.0, 128
        %1106 = vxpose.xlu0.b32.cont [9/16] 0.0, 128
        %1107 = vxpose.xlu0.b32.cont [10/16] 0.0, 128
        %1108 = vxpose.xlu0.b32.cont [11/16] 0.0, 128
        %1109 = vxpose.xlu0.b32.cont [12/16] 0.0, 128
        %1110 = vxpose.xlu0.b32.cont [13/16] 0.0, 128
        %1111 = vxpose.xlu0.b32.cont [14/16] 0.0, 128
        %1112 = vxpose.xlu0.b32.cont [15/16] 0.0, 128
        %1113 = vxpose.xlu0.b32.end [16/16] 0.0, 128
        %v1114 = vpop.trf.xlu0
        %v1115 = vpop.trf.xlu0
        %v1116 = vpop.trf.xlu0
        %v1117 = vpop.trf.xlu0
        %v1118 = vpop.trf.xlu0
        %v1119 = vpop.trf.xlu0
        %v1120 = vpop.trf.xlu0
        %v1121 = vpop.trf.xlu0
        %v1122 = vpop.trf.xlu0
        %v1123 = vpop.trf.xlu0
        %v1124 = vpop.trf.xlu0
        %v1125 = vpop.trf.xlu0
        %v1126 = vpop.trf.xlu0
        %v1127 = vpop.trf.xlu0
        %v1128 = vpop.trf.xlu0
        %v1129 = vpop.trf.xlu0
        %v1130 = vld [vmem:[%s400] sm:$0x1]
        %v1131 = vmul.f32 %v1130, 1e-06
        %v1132 = vadd.f32 %v1114, %v1131
        %1133 = vst.msk [vmem:[%s412] sm:$0x1] %vm492, %v1132
        %p1134 = scmp.lt.s32.totalorder %s30, 1
        %s1135 = scalar_select %p1134, %s30, 1
        %p1136 = scmp.lt.s32.totalorder %s31, 0
        %s1137 = scalar_select %p1136, %s31, 0
        %s1138 = sadd.s32 %s1137, %s1135
        %s1139 = scalar_lea.vmem %s5, %s1138
        %p1140 = scmp.lt.s32.totalorder %s30, 1
        %s1141 = scalar_select %p1140, %s30, 1
        %p1142 = scmp.lt.s32.totalorder %s31, 0
        %s1143 = scalar_select %p1142, %s31, 0
        %s1144 = sadd.s32 %s1143, %s1141
        %s1145 = scalar_lea.vmem %s6, %s1144
        %p1146 = scmp.lt.s32.totalorder %s30, 1
        %s1147 = scalar_select %p1146, %s30, 1
        %p1148 = scmp.lt.s32.totalorder %s31, 0
        %s1149 = scalar_select %p1148, %s31, 0
        %s1150 = sadd.s32 %s1149, %s1147
        %s1151 = scalar_lea.vmem %s7, %s1150
        // Predicated region
        $region49: #{ctm_forward.4} parent=39 // pred_check
          %p1152 = pneg %p182
        $region50: #{ctm_forward.4} parent=39 // pred_check_branch
          %1154 = sbr.rel (%p1152) target = $region52
        $region51: #{ctm_forward.4} parent=39 // pred_region
          _
        $region52: #{ctm_forward.4} parent=39 // pred_fallthru
          _
        // Predicated region
        $region53: #{ctm_forward.4} parent=39 // pred_check
          %p1155 = pneg %p210
        $region54: #{ctm_forward.4} parent=39 // pred_check_branch
          %1157 = sbr.rel (%p1155) target = $region56
        $region55: #{ctm_forward.4} parent=39 // pred_region
          _
        $region56: #{ctm_forward.4} parent=39 // pred_fallthru
          _
        // Predicated region
        $region57: #{ctm_forward.4} parent=39 // pred_check
          %p1158 = pneg %p238
        $region58: #{ctm_forward.4} parent=39 // pred_check_branch
          %1160 = sbr.rel (%p1158) target = $region60
        $region59: #{ctm_forward.4} parent=39 // pred_region
          _
        $region60: #{ctm_forward.4} parent=39 // pred_fallthru
          _
      $region40: #{ctm_forward.4} parent=5 // pred_fallthru
        _
      %p1161 = scmp.le.s32.totalorder 2, %s21
      // Predicated region
      $region61: #{ctm_forward.4} parent=5 // pred_check
        %p1162 = pneg %p1161
      $region62: #{ctm_forward.4} parent=5 // pred_check_branch
        %1164 = sbr.rel (%p1162) target = $region64
      $region63: #{ctm_forward.4} parent=5 // pred_region
        %s1165 = ssub.s32 %s21, 2
        // Predicated region
        $region65: #{ctm_forward.4} parent=63 // pred_check
          %p1166 = pneg %p188
        $region66: #{ctm_forward.4} parent=63 // pred_check_branch
          %1168 = sbr.rel (%p1166) target = $region68
        $region67: #{ctm_forward.4} parent=63 // pred_region
          %p1169 = scmp.lt.s32.totalorder %s32, 1
          %s1170 = scalar_select %p1169, %s32, 1
          %p1171 = scmp.lt.s32.totalorder %s33, 0
          %s1172 = scalar_select %p1171, %s33, 0
          %s1173 = sadd.s32 %s1172, %s1170
          %s1174 = scalar_lea.vmem %s5, %s1173
        $region68: #{ctm_forward.4} parent=63 // pred_fallthru
          _
        // Predicated region
        $region69: #{ctm_forward.4} parent=63 // pred_check
          %p1175 = pneg %p216
        $region70: #{ctm_forward.4} parent=63 // pred_check_branch
          %1177 = sbr.rel (%p1175) target = $region72
        $region71: #{ctm_forward.4} parent=63 // pred_region
          %p1178 = scmp.lt.s32.totalorder %s32, 1
          %s1179 = scalar_select %p1178, %s32, 1
          %p1180 = scmp.lt.s32.totalorder %s33, 0
          %s1181 = scalar_select %p1180, %s33, 0
          %s1182 = sadd.s32 %s1181, %s1179
          %s1183 = scalar_lea.vmem %s6, %s1182
        $region72: #{ctm_forward.4} parent=63 // pred_fallthru
          _
        // Predicated region
        $region73: #{ctm_forward.4} parent=63 // pred_check
          %p1184 = pneg %p244
        $region74: #{ctm_forward.4} parent=63 // pred_check_branch
          %1186 = sbr.rel (%p1184) target = $region76
        $region75: #{ctm_forward.4} parent=63 // pred_region
          %p1187 = scmp.lt.s32.totalorder %s32, 1
          %s1188 = scalar_select %p1187, %s32, 1
          %p1189 = scmp.lt.s32.totalorder %s33, 0
          %s1190 = scalar_select %p1189, %s33, 0
          %s1191 = sadd.s32 %s1190, %s1188
          %s1192 = scalar_lea.vmem %s7, %s1191
        $region76: #{ctm_forward.4} parent=63 // pred_fallthru
          _
      $region64: #{ctm_forward.4} parent=5 // pred_fallthru
        _
    $region6: #{ctm_forward.4} parent=1 // loop_footer
      %s25 = sadd.s32 1, %s21
    $region7: #{ctm_forward.4} parent=1 // loop_footer_branch
      %20 = sbr.rel target = $region3
    $region8: #{ctm_forward.4} parent=1 // loop_exit
      _
    %1193 = vsyncpa [#allocation4], 1
    %s1194 = scalar_lea.sflag [#allocation4], 1
    %1195 = vsyncpa %s1194, 1
    %1196 = vsyncpa [#allocation6], 1
    %s1197 = scalar_lea.sflag [#allocation6], 1
    %1198 = vsyncpa %s1197, 1

// kernel: ctm_forward.6
$region0: #{ctm_forward.6}
  #allocation0 [shape = 'u32[]', space=smem, size = 0x4, offset = 0x4, fixed_abs, tag = 'smem constant byte address 0x4 - core index']
  #allocation1 [shape = 'u32[144,128]{1,0:T(1,128)}', space=vmem, size = 0x12000, scoped, tag = 'internal scratch']
  %s0 = inlined_call_operand.vmem [shape: f32[2,32,32], index: 0, kind: input, shape index: {}]
  %s1 = inlined_call_operand.vmem [shape: f32[2,8,32], index: 1, kind: input, shape index: {}]
  %s2 = inlined_call_operand.vmem [shape: s32[2,1,32], index: 2, kind: output, shape index: {}]
  %s3 = sld [smem:[#allocation0]]
  $region41: #{ctm_forward.6} parent=0
    _
  %s5 = ssub.s32 1, %s3
  %s6 = scalar_select 0, %s5, %s3
  loop: start=0, step=1, limit=4
  $region2: #{ctm_forward.6} parent=0 // loop_pre_header
    _
  $region3: #{ctm_forward.6} parent=0 // loop_header
    %s8 = sphi 0, %s12
    %p9 = scmp.ge.s32.totalorder %s8, 4
    %s18 = sphi 0, %s20
    %s21 = sphi 0, %s18
    %s22 = sphi 0, %s21
    %s38 = sphi 0, %s22
    %s44 = sphi 0, %s46
    %s47 = sphi 0, %s44
    %s48 = sphi 0, %s47
    %s64 = sphi 0, %s48
    %s70 = sphi 0, %s72
    %s73 = sphi 0, %s70
    %s74 = sphi 0, %s73
    %s90 = sphi 0, %s74
  $region4: #{ctm_forward.6} parent=0 // loop_header_branch
    %11 = sbr.rel (%p9) target = $region8
  $region5: #{ctm_forward.6} parent=0 // loop_body
    %s13 = ssub.s32 %s8, 1
    %s14 = ssub.s32 %s8, 2
    %s15 = sadd.s32 %s8, 1
    %s16 = ssub.s32 %s8, %s15
    %p17 = scmp.eq.s32.totalorder %s16, 0
    %s19 = sadd.s32 %s18, 1
    %s20 = scalar_select %p17, %s18, %s19
    %p23 = pneg %p17
    %p24 = scmp.eq.s32.totalorder %s8, 1
    %p25 = por %p23, %p24
    %p26 = scmp.ne.s32.totalorder %s18, %s21
    %p27 = scmp.eq.s32.totalorder %s8, 0
    %p28 = por %p26, %p27
    %p29 = scmp.ne.s32.totalorder %s18, %s21
    %p30 = scmp.eq.s32.totalorder %s13, 1
    %p31 = por %p29, %p30
    %p32 = scmp.ne.s32.totalorder %s21, %s22
    %p33 = scmp.eq.s32.totalorder %s13, 0
    %p34 = por %p32, %p33
    %p35 = scmp.ne.s32.totalorder %s21, %s22
    %p36 = scmp.eq.s32.totalorder %s14, 1
    %p37 = por %p35, %p36
    %p39 = scmp.ne.s32.totalorder %s22, %s38
    %p40 = scmp.eq.s32.totalorder %s14, 0
    %p41 = por %p39, %p40
    %s42 = ssub.s32 %s8, %s15
    %p43 = scmp.eq.s32.totalorder %s42, 0
    %s45 = sadd.s32 %s44, 1
    %s46 = scalar_select %p43, %s44, %s45
    %p49 = pneg %p43
    %p50 = scmp.eq.s32.totalorder %s8, 1
    %p51 = por %p49, %p50
    %p52 = scmp.ne.s32.totalorder %s44, %s47
    %p53 = scmp.eq.s32.totalorder %s8, 0
    %p54 = por %p52, %p53
    %p55 = scmp.ne.s32.totalorder %s44, %s47
    %p56 = scmp.eq.s32.totalorder %s13, 1
    %p57 = por %p55, %p56
    %p58 = scmp.ne.s32.totalorder %s47, %s48
    %p59 = scmp.eq.s32.totalorder %s13, 0
    %p60 = por %p58, %p59
    %p61 = scmp.ne.s32.totalorder %s47, %s48
    %p62 = scmp.eq.s32.totalorder %s14, 1
    %p63 = por %p61, %p62
    %p65 = scmp.ne.s32.totalorder %s48, %s64
    %p66 = scmp.eq.s32.totalorder %s14, 0
    %p67 = por %p65, %p66
    %s68 = ssub.s32 %s8, %s15
    %p69 = scmp.eq.s32.totalorder %s68, 0
    %s71 = sadd.s32 %s70, 1
    %s72 = scalar_select %p69, %s70, %s71
    %p75 = pneg %p69
    %p76 = scmp.eq.s32.totalorder %s8, 1
    %p77 = por %p75, %p76
    %p78 = scmp.ne.s32.totalorder %s70, %s73
    %p79 = scmp.eq.s32.totalorder %s8, 0
    %p80 = por %p78, %p79
    %p81 = scmp.ne.s32.totalorder %s70, %s73
    %p82 = scmp.eq.s32.totalorder %s13, 1
    %p83 = por %p81, %p82
    %p84 = scmp.ne.s32.totalorder %s73, %s74
    %p85 = scmp.eq.s32.totalorder %s13, 0
    %p86 = por %p84, %p85
    %p87 = scmp.ne.s32.totalorder %s73, %s74
    %p88 = scmp.eq.s32.totalorder %s14, 1
    %p89 = por %p87, %p88
    %p91 = scmp.ne.s32.totalorder %s74, %s90
    %p92 = scmp.eq.s32.totalorder %s14, 0
    %p93 = por %p91, %p92
    %p94 = scmp.le.s32.totalorder 1, %s8
    %p95 = scmp.lt.s32.totalorder %s8, 3
    %p96 = pnand %p94, %p95
    %p97 = pneg %p96
    // Predicated region
    $region9: #{ctm_forward.6} parent=5 // pred_check
      _
    $region10: #{ctm_forward.6} parent=5 // pred_check_branch
      %99 = sbr.rel (%p96) target = $region12
    $region11: #{ctm_forward.6} parent=5 // pred_region
      %s100 = ssub.s32 %s8, 1
    $region12: #{ctm_forward.6} parent=5 // pred_fallthru
      _
    %p101 = scmp.lt.s32.totalorder %s8, 2
    // Predicated region
    $region13: #{ctm_forward.6} parent=5 // pred_check
      %p102 = pneg %p101
    $region14: #{ctm_forward.6} parent=5 // pred_check_branch
      %104 = sbr.rel (%p102) target = $region16
    $region15: #{ctm_forward.6} parent=5 // pred_region
      // Predicated region
      $region17: #{ctm_forward.6} parent=15 // pred_check
        %p105 = pneg %p28
      $region18: #{ctm_forward.6} parent=15 // pred_check_branch
        %107 = sbr.rel (%p105) target = $region20
      $region19: #{ctm_forward.6} parent=15 // pred_region
        %p108 = scmp.lt.s32.totalorder %s8, 1
        %s109 = scalar_select %p108, %s8, 1
        %s110 = smul.addr %s109, 4
        %s111 = smul.addr %s110, 8
        %s112 = scalar_lea.vmem %s0, %s111
      $region20: #{ctm_forward.6} parent=15 // pred_fallthru
        _
      // Predicated region
      $region21: #{ctm_forward.6} parent=15 // pred_check
        %p113 = pneg %p54
      $region22: #{ctm_forward.6} parent=15 // pred_check_branch
        %115 = sbr.rel (%p113) target = $region24
      $region23: #{ctm_forward.6} parent=15 // pred_region
        %p116 = scmp.lt.s32.totalorder %s8, 1
        %s117 = scalar_select %p116, %s8, 1
        %s118 = smul.addr %s117, 8
        %s119 = scalar_lea.vmem %s1, %s118
      $region24: #{ctm_forward.6} parent=15 // pred_fallthru
        _
    $region16: #{ctm_forward.6} parent=5 // pred_fallthru
      _
    %p120 = scmp.le.s32.totalorder 1, %s8
    %p121 = scmp.lt.s32.totalorder %s8, 3
    %p122 = pnand %p120, %p121
    %p123 = pneg %p122
    // Predicated region
    $region25: #{ctm_forward.6} parent=5 // pred_check
      _
    $region26: #{ctm_forward.6} parent=5 // pred_check_branch
      %125 = sbr.rel (%p122) target = $region28
    $region27: #{ctm_forward.6} parent=5 // pred_region
      %s126 = ssub.s32 %s8, 1
      %p127 = scmp.lt.s32.totalorder %s13, 1
      %s128 = scalar_select %p127, %s13, 1
      %s129 = smul.addr %s128, 4
      %s130 = smul.addr %s129, 8
      %s131 = scalar_lea.vmem %s0, %s130
      %p132 = pneg %p34
      %p133 = pneg %p31
      %p134 = scmp.lt.s32.totalorder %s13, 1
      %s135 = scalar_select %p134, %s13, 1
      %s136 = smul.addr %s135, 8
      %s137 = scalar_lea.vmem %s1, %s136
      %p138 = pneg %p60
      %p139 = pneg %p57
      %p140 = pneg %p86
      %p141 = pneg %p83
      %p142 = scmp.lt.s32.totalorder %s13, 1
      %s143 = scalar_select %p142, %s13, 1
      %s144 = scalar_lea.vmem %s2, %s143
      %p145 = scmp.lt.s32.totalorder %s13, 1
      %s146 = scalar_select %p145, %s13, 1
      %s147 = smul.addr %s146, 4
      %s148 = smul.addr %s147, 8
      %s149 = scalar_lea.vmem %s0, %s148
      %p150 = scmp.lt.s32.totalorder %s13, 1
      %s151 = scalar_select %p150, %s13, 1
      %s152 = smul.addr %s151, 8
      %s153 = scalar_lea.vmem %s1, %s152
      %p154 = scmp.lt.s32.totalorder %s13, 1
      %s155 = scalar_select %p154, %s13, 1
      %s156 = scalar_lea.vmem %s2, %s155
      %v158 = vld [vmem:[%s149] sm:$0xff]
      %v159 = vld [vmem:[%s149 + $0x8] sm:$0xff]
      %v160 = vld [vmem:[%s149 + $0x10] sm:$0xff]
      %v161 = vld [vmem:[%s149 + $0x18] sm:$0xff]
      %v162 = vld [vmem:[%s153] sm:$0xff]
      %v163 = vpack.c.bf16 %v159, %v158
      %v164 = vpack.c.bf16 %v161, %v160
      %v165 = vpack.c.bf16 %v162, %v162
      %vm166 = vcmask 261120
      %v168 = vsel %vm166, %v163, 0
      %v171 = vsel %vm166, %v164, 0
      %v174 = vsel %vm166, %v165, 0
      %176 = vmatprep.subr.bf16.mxu0 0
      %177 = vmatpush1.bf16.xpose.msra.mxu0 0
      %178 = vmatprep.subr.bf16.mxu0 0
      %179 = vmatpush1.bf16.xpose.msra.mxu0 0
      %180 = vmatprep.subr.bf16.mxu0 0
      %181 = vmatpush1.bf16.xpose.msra.mxu0 0
      %182 = vmatprep.subr.bf16.mxu0 0
      %183 = vmatpush1.bf16.xpose.msra.mxu0 0
      %184 = vmatprep.subr.bf16.mxu0 0
      %185 = vmatpush1.bf16.xpose.msra.mxu0 0
      %186 = vmatprep.subr.bf16.mxu0 0
      %187 = vmatpush1.bf16.xpose.msra.mxu0 0
      %188 = vmatprep.subr.bf16.mxu0 0
      %189 = vmatpush1.bf16.xpose.msra.mxu0 0
      %190 = vmatprep.subr.bf16.mxu0 0
      %191 = vmatpush1.bf16.xpose.msra.mxu0 %v174
      %192 = vmatprep.subr.bf16.mxu0 0
      %193 = vmatpush2.bf16.xpose.msra.mxu0 0
      %194 = vmatprep.subr.bf16.mxu0 0
      %195 = vmatpush2.bf16.xpose.msra.mxu0 0
      %196 = vmatprep.subr.bf16.mxu0 0
      %197 = vmatpush2.bf16.xpose.msra.mxu0 0
      %198 = vmatprep.subr.bf16.mxu0 0
      %199 = vmatpush2.bf16.xpose.msra.mxu0 0
      %200 = vmatprep.subr.bf16.mxu0 0
      %201 = vmatpush2.bf16.xpose.msra.mxu0 0
      %202 = vmatprep.subr.bf16.mxu0 0
      %203 = vmatpush2.bf16.xpose.msra.mxu0 0
      %204 = vmatprep.subr.bf16.mxu0 0
      %205 = vmatpush2.bf16.xpose.msra.mxu0 0
      %206 = vmatprep.subr.bf16.mxu0 0
      %207 = vmatpush2.bf16.xpose.msra.mxu0 0
      %208 = vmatprep.mubr.bf16.mxu0 0
      %209 = vmatmul.mubr.bf16.gmra.mxu0 %v168
      %v210 = vpop.f32.mrf.mxu0
      %v211 = vadd.f32 0.0, %v210
      %v212 = vpop.f32.mrf.mxu0
      %v213 = vpop.f32.mrf.mxu0
      %v214 = vadd.f32 0.0, %v213
      %v215 = vpop.f32.mrf.mxu0
      %216 = vmatprep.mubr.bf16.mxu0 0
      %217 = vmatmul.mubr.bf16.gmra.mxu0 %v171
      %v218 = vpop.f32.mrf.mxu0
      %v219 = vadd.f32 0.0, %v218
      %v220 = vpop.f32.mrf.mxu0
      %v221 = vpop.f32.mrf.mxu0
      %v222 = vadd.f32 0.0, %v221
      %v223 = vpop.f32.mrf.mxu0
      %224 = vdwg.mxu0
      %v225 = vmul.f32 %v158, %v158
      %v226 = vmul.f32 %v159, %v159
      %v227 = vmul.f32 %v160, %v160
      %v228 = vmul.f32 %v161, %v161
      %v229 = vsel %vm166, %v225, 0.0
      %230 = vadd.xlane.f32.xlu0 %v229
      %v231 = vpop.xlane.xlu0 %230
      %v232 = vsel %vm166, %v226, 0.0
      %233 = vadd.xlane.f32.xlu0 %v232
      %v234 = vpop.xlane.xlu0 %233
      %v235 = vsel %vm166, %v227, 0.0
      %236 = vadd.xlane.f32.xlu0 %v235
      %v237 = vpop.xlane.xlu0 %236
      %v238 = vsel %vm166, %v228, 0.0
      %239 = vadd.xlane.f32.xlu0 %v238
      %v240 = vpop.xlane.xlu0 %239
      %v241 = vmul.f32 %v162, %v162
      %v242 = vsel %vm166, %v241, 0.0
      %243 = vadd.xlane.f32.xlu0 %v242
      %v244 = vpop.xlane.xlu0 %243
      %245 = vxpose.xlu0.b32.start [1/16] %v244, 128
      %246 = vxpose.xlu0.b32.cont [2/16] 0.0, 128
      %247 = vxpose.xlu0.b32.cont [3/16] 0.0, 128
      %248 = vxpose.xlu0.b32.cont [4/16] 0.0, 128
      %249 = vxpose.xlu0.b32.cont [5/16] 0.0, 128
      %250 = vxpose.xlu0.b32.cont [6/16] 0.0, 128
      %251 = vxpose.xlu0.b32.cont [7/16] 0.0, 128
      %252 = vxpose.xlu0.b32.cont [8/16] 0.0, 128
      %253 = vxpose.xlu0.b32.cont [9/16] 0.0, 128
      %254 = vxpose.xlu0.b32.cont [10/16] 0.0, 128
      %255 = vxpose.xlu0.b32.cont [11/16] 0.0, 128
      %256 = vxpose.xlu0.b32.cont [12/16] 0.0, 128
      %257 = vxpose.xlu0.b32.cont [13/16] 0.0, 128
      %258 = vxpose.xlu0.b32.cont [14/16] 0.0, 128
      %259 = vxpose.xlu0.b32.cont [15/16] 0.0, 128
      %260 = vxpose.xlu0.b32.end [16/16] 0.0, 128
      %v261 = vpop.trf.xlu0
      %v262 = vpop.trf.xlu0
      %v263 = vpop.trf.xlu0
      %v264 = vpop.trf.xlu0
      %v265 = vpop.trf.xlu0
      %v266 = vpop.trf.xlu0
      %v267 = vpop.trf.xlu0
      %v268 = vpop.trf.xlu0
      %v269 = vpop.trf.xlu0
      %v270 = vpop.trf.xlu0
      %v271 = vpop.trf.xlu0
      %v272 = vpop.trf.xlu0
      %v273 = vpop.trf.xlu0
      %v274 = vpop.trf.xlu0
      %v275 = vpop.trf.xlu0
      %v276 = vpop.trf.xlu0
      %v277 = vlaneseq
      %v278 = vshrl.u32 %v277, 7
      %v279 = vsub.s32 0, %v278
      %v280 = vrot.slane %v261, %v279
      %v281 = vadd.f32 %v231, %v280
      %v282 = vadd.f32 %v234, %v280
      %v283 = vadd.f32 %v237, %v280
      %v284 = vadd.f32 %v240, %v280
      %v285 = vmul.f32 %v211, 2.0
      %v286 = vmul.f32 %v214, 2.0
      %v287 = vmul.f32 %v219, 2.0
      %v288 = vmul.f32 %v222, 2.0
      %v289 = vsub.f32 %v281, %v285
      %v290 = vsub.f32 %v282, %v286
      %v291 = vsub.f32 %v283, %v287
      %v292 = vsub.f32 %v284, %v288
      %v293 = vmax.f32 %v289, 0.0
      %v294 = vmax.f32 %v290, 0.0
      %v295 = vmax.f32 %v291, 0.0
      %v296 = vmax.f32 %v292, 0.0
      %vm297 = vcmask 64512
      %v298 = vsel %vm297, %v293, inf
      %299 = vmin.xlane.f32.xlu0 %v298
      %v300 = vpop.xlane.xlu0 %299
      %v301 = vsel %vm297, %v294, inf
      %302 = vmin.xlane.f32.xlu0 %v301
      %v303 = vpop.xlane.xlu0 %302
      %v304 = vsel %vm297, %v295, inf
      %305 = vmin.xlane.f32.xlu0 %v304
      %v306 = vpop.xlane.xlu0 %305
      %v307 = vsel %vm297, %v296, inf
      %308 = vmin.xlane.f32.xlu0 %v307
      %v309 = vpop.xlane.xlu0 %308
      %v310 = vlaneseq
      %v311 = vand.u32 %v310, 127
      %v312 = vcvt.s32.f32 %v311
      %vm313 = vcmp.le.f32.partialorder %v293, %v300
      %vm314 = vcmp.le.f32.partialorder %v294, %v303
      %vm315 = vcmp.le.f32.partialorder %v295, %v306
      %vm316 = vcmp.le.f32.partialorder %v296, %v309
      %v317 = vsel %vm313, %v312, 8.0
      %v318 = vsel %vm314, %v312, 8.0
      %v319 = vsel %vm315, %v312, 8.0
      %v320 = vsel %vm316, %v312, 8.0
      %v321 = vsel %vm297, %v317, inf
      %322 = vmin.xlane.f32.xlu0 %v321
      %v323 = vpop.xlane.xlu0 %322
      %v324 = vsel %vm297, %v318, inf
      %325 = vmin.xlane.f32.xlu0 %v324
      %v326 = vpop.xlane.xlu0 %325
      %v327 = vsel %vm297, %v319, inf
      %328 = vmin.xlane.f32.xlu0 %v327
      %v329 = vpop.xlane.xlu0 %328
      %v330 = vsel %vm297, %v320, inf
      %331 = vmin.xlane.f32.xlu0 %v330
      %v332 = vpop.xlane.xlu0 %331
      %333 = vxpose.xlu0.b32.start [1/16] %v323, 128
      %334 = vxpose.xlu0.b32.cont [2/16] %v326, 128
      %335 = vxpose.xlu0.b32.cont [3/16] %v329, 128
      %336 = vxpose.xlu0.b32.cont [4/16] %v332, 128
      %337 = vxpose.xlu0.b32.cont [5/16] 0.0, 128
      %338 = vxpose.xlu0.b32.cont [6/16] 0.0, 128
      %339 = vxpose.xlu0.b32.cont [7/16] 0.0, 128
      %340 = vxpose.xlu0.b32.cont [8/16] 0.0, 128
      %341 = vxpose.xlu0.b32.cont [9/16] 0.0, 128
      %342 = vxpose.xlu0.b32.cont [10/16] 0.0, 128
      %343 = vxpose.xlu0.b32.cont [11/16] 0.0, 128
      %344 = vxpose.xlu0.b32.cont [12/16] 0.0, 128
      %345 = vxpose.xlu0.b32.cont [13/16] 0.0, 128
      %346 = vxpose.xlu0.b32.cont [14/16] 0.0, 128
      %347 = vxpose.xlu0.b32.cont [15/16] 0.0, 128
      %348 = vxpose.xlu0.b32.end [16/16] 0.0, 128
      %v349 = vpop.trf.xlu0
      %v350 = vpop.trf.xlu0
      %v351 = vpop.trf.xlu0
      %v352 = vpop.trf.xlu0
      %v353 = vpop.trf.xlu0
      %v354 = vpop.trf.xlu0
      %v355 = vpop.trf.xlu0
      %v356 = vpop.trf.xlu0
      %v357 = vpop.trf.xlu0
      %v358 = vpop.trf.xlu0
      %v359 = vpop.trf.xlu0
      %v360 = vpop.trf.xlu0
      %v361 = vpop.trf.xlu0
      %v362 = vpop.trf.xlu0
      %v363 = vpop.trf.xlu0
      %v364 = vpop.trf.xlu0
      %v365 = vcvt.f32.s32.to.zero.pseudo %v349
      %vm366 = vcmask 253952
      %367 = vst.msk [vmem:[%s156] sm:$0x1] %vm366, %v365
      %p368 = scmp.lt.s32.totalorder %s13, 1
      %s369 = scalar_select %p368, %s13, 1
      %s370 = scalar_lea.vmem %s2, %s369
      // Predicated region
      $region29: #{ctm_forward.6} parent=27 // pred_check
        %p371 = pneg %p83
      $region30: #{ctm_forward.6} parent=27 // pred_check_branch
        %373 = sbr.rel (%p371) target = $region32
      $region31: #{ctm_forward.6} parent=27 // pred_region
        _
      $region32: #{ctm_forward.6} parent=27 // pred_fallthru
        _
    $region28: #{ctm_forward.6} parent=5 // pred_fallthru
      _
    %p374 = scmp.le.s32.totalorder 2, %s8
    // Predicated region
    $region33: #{ctm_forward.6} parent=5 // pred_check
      %p375 = pneg %p374
    $region34: #{ctm_forward.6} parent=5 // pred_check_branch
      %377 = sbr.rel (%p375) target = $region36
    $region35: #{ctm_forward.6} parent=5 // pred_region
      %s378 = ssub.s32 %s8, 2
      // Predicated region
      $region37: #{ctm_forward.6} parent=35 // pred_check
        %p379 = pneg %p89
      $region38: #{ctm_forward.6} parent=35 // pred_check_branch
        %381 = sbr.rel (%p379) target = $region40
      $region39: #{ctm_forward.6} parent=35 // pred_region
        %p382 = scmp.lt.s32.totalorder %s14, 1
        %s383 = scalar_select %p382, %s14, 1
        %s384 = scalar_lea.vmem %s2, %s383
      $region40: #{ctm_forward.6} parent=35 // pred_fallthru
        _
    $region36: #{ctm_forward.6} parent=5 // pred_fallthru
      _
  $region6: #{ctm_forward.6} parent=0 // loop_footer
    %s12 = sadd.s32 1, %s8
  $region7: #{ctm_forward.6} parent=0 // loop_footer_branch
    %7 = sbr.rel target = $region3
  $region8: #{ctm_forward.6} parent=0 // loop_exit
    _

// kernel: ctm_forward.7
$region0: #{ctm_forward.7}
  #allocation0 [shape = 'u32[]', space=smem, size = 0x4, offset = 0x4, fixed_abs, tag = 'smem constant byte address 0x4 - core index']
  #allocation1 [shape = 'u32[144,128]{1,0:T(1,128)}', space=vmem, size = 0x12000, scoped, tag = 'internal scratch']
  %s0 = inlined_call_operand.vmem [shape: f32[2,32,32], index: 0, kind: input, shape index: {}]
  %s1 = inlined_call_operand.vmem [shape: s32[2,1,32], index: 1, kind: input, shape index: {}]
  %s2 = inlined_call_operand.vmem [shape: f32[2,1,32], index: 2, kind: input, shape index: {}]
  %s3 = inlined_call_operand.hbm [shape: f32[2,8,32], index: 3, kind: output, shape index: {}]
  %s4 = sld [smem:[#allocation0]]
  $region45: #{ctm_forward.7} parent=0
    _
  %s6 = ssub.s32 1, %s4
  %s7 = scalar_select 0, %s6, %s4
  $region1: #{ctm_forward.7} parent=0
    #allocation2 [shape = 'u8[8192]{0}', space=vmem, size = 0x2000, scoped, tag = 'output window, operand 0']
    #allocation3 [shape = 's32[2]{0}', space=sflag, size = 0x8, scoped, tag = 'scoped memory for ctm_forward.7']
    %8 = vsyncpa [#allocation3], 0
    %s9 = scalar_lea.sflag [#allocation3], 1
    %10 = vsyncpa %s9, 0
    loop: start=0, step=1, limit=4
    $region2: #{ctm_forward.7} parent=1 // loop_pre_header
      _
    $region3: #{ctm_forward.7} parent=1 // loop_header
      %s12 = sphi 0, %s16
      %p13 = scmp.ge.s32.totalorder %s12, 4
      %s22 = sphi 0, %s24
      %s25 = sphi 0, %s22
      %s26 = sphi 0, %s25
      %s42 = sphi 0, %s26
      %s48 = sphi 0, %s50
      %s51 = sphi 0, %s48
      %s52 = sphi 0, %s51
      %s68 = sphi 0, %s52
      %s74 = sphi 0, %s76
      %s77 = sphi 0, %s74
      %s78 = sphi 0, %s77
      %s94 = sphi 0, %s78
      %s100 = sphi 0, %s102
      %s103 = sphi 0, %s100
      %s104 = sphi 0, %s103
      %s120 = sphi 0, %s104
    $region4: #{ctm_forward.7} parent=1 // loop_header_branch
      %15 = sbr.rel (%p13) target = $region8
    $region5: #{ctm_forward.7} parent=1 // loop_body
      %s17 = ssub.s32 %s12, 1
      %s18 = ssub.s32 %s12, 2
      %s19 = sadd.s32 %s12, 1
      %s20 = ssub.s32 %s12, %s19
      %p21 = scmp.eq.s32.totalorder %s20, 0
      %s23 = sadd.s32 %s22, 1
      %s24 = scalar_select %p21, %s22, %s23
      %p27 = pneg %p21
      %p28 = scmp.eq.s32.totalorder %s12, 1
      %p29 = por %p27, %p28
      %p30 = scmp.ne.s32.totalorder %s22, %s25
      %p31 = scmp.eq.s32.totalorder %s12, 0
      %p32 = por %p30, %p31
      %p33 = scmp.ne.s32.totalorder %s22, %s25
      %p34 = scmp.eq.s32.totalorder %s17, 1
      %p35 = por %p33, %p34
      %p36 = scmp.ne.s32.totalorder %s25, %s26
      %p37 = scmp.eq.s32.totalorder %s17, 0
      %p38 = por %p36, %p37
      %p39 = scmp.ne.s32.totalorder %s25, %s26
      %p40 = scmp.eq.s32.totalorder %s18, 1
      %p41 = por %p39, %p40
      %p43 = scmp.ne.s32.totalorder %s26, %s42
      %p44 = scmp.eq.s32.totalorder %s18, 0
      %p45 = por %p43, %p44
      %s46 = ssub.s32 %s12, %s19
      %p47 = scmp.eq.s32.totalorder %s46, 0
      %s49 = sadd.s32 %s48, 1
      %s50 = scalar_select %p47, %s48, %s49
      %p53 = pneg %p47
      %p54 = scmp.eq.s32.totalorder %s12, 1
      %p55 = por %p53, %p54
      %p56 = scmp.ne.s32.totalorder %s48, %s51
      %p57 = scmp.eq.s32.totalorder %s12, 0
      %p58 = por %p56, %p57
      %p59 = scmp.ne.s32.totalorder %s48, %s51
      %p60 = scmp.eq.s32.totalorder %s17, 1
      %p61 = por %p59, %p60
      %p62 = scmp.ne.s32.totalorder %s51, %s52
      %p63 = scmp.eq.s32.totalorder %s17, 0
      %p64 = por %p62, %p63
      %p65 = scmp.ne.s32.totalorder %s51, %s52
      %p66 = scmp.eq.s32.totalorder %s18, 1
      %p67 = por %p65, %p66
      %p69 = scmp.ne.s32.totalorder %s52, %s68
      %p70 = scmp.eq.s32.totalorder %s18, 0
      %p71 = por %p69, %p70
      %s72 = ssub.s32 %s12, %s19
      %p73 = scmp.eq.s32.totalorder %s72, 0
      %s75 = sadd.s32 %s74, 1
      %s76 = scalar_select %p73, %s74, %s75
      %p79 = pneg %p73
      %p80 = scmp.eq.s32.totalorder %s12, 1
      %p81 = por %p79, %p80
      %p82 = scmp.ne.s32.totalorder %s74, %s77
      %p83 = scmp.eq.s32.totalorder %s12, 0
      %p84 = por %p82, %p83
      %p85 = scmp.ne.s32.totalorder %s74, %s77
      %p86 = scmp.eq.s32.totalorder %s17, 1
      %p87 = por %p85, %p86
      %p88 = scmp.ne.s32.totalorder %s77, %s78
      %p89 = scmp.eq.s32.totalorder %s17, 0
      %p90 = por %p88, %p89
      %p91 = scmp.ne.s32.totalorder %s77, %s78
      %p92 = scmp.eq.s32.totalorder %s18, 1
      %p93 = por %p91, %p92
      %p95 = scmp.ne.s32.totalorder %s78, %s94
      %p96 = scmp.eq.s32.totalorder %s18, 0
      %p97 = por %p95, %p96
      %s98 = ssub.s32 %s12, %s19
      %p99 = scmp.eq.s32.totalorder %s98, 0
      %s101 = sadd.s32 %s100, 1
      %s102 = scalar_select %p99, %s100, %s101
      %p105 = pneg %p99
      %p106 = scmp.eq.s32.totalorder %s12, 1
      %p107 = por %p105, %p106
      %p108 = scmp.ne.s32.totalorder %s100, %s103
      %p109 = scmp.eq.s32.totalorder %s12, 0
      %p110 = por %p108, %p109
      %p111 = scmp.ne.s32.totalorder %s100, %s103
      %p112 = scmp.eq.s32.totalorder %s17, 1
      %p113 = por %p111, %p112
      %p114 = scmp.ne.s32.totalorder %s103, %s104
      %p115 = scmp.eq.s32.totalorder %s17, 0
      %p116 = por %p114, %p115
      %p117 = scmp.ne.s32.totalorder %s103, %s104
      %p118 = scmp.eq.s32.totalorder %s18, 1
      %p119 = por %p117, %p118
      %p121 = scmp.ne.s32.totalorder %s104, %s120
      %p122 = scmp.eq.s32.totalorder %s18, 0
      %p123 = por %p121, %p122
      %p124 = scmp.le.s32.totalorder 1, %s12
      %p125 = scmp.lt.s32.totalorder %s12, 3
      %p126 = pnand %p124, %p125
      %p127 = pneg %p126
      // Predicated region
      $region9: #{ctm_forward.7} parent=5 // pred_check
        _
      $region10: #{ctm_forward.7} parent=5 // pred_check_branch
        %129 = sbr.rel (%p126) target = $region12
      $region11: #{ctm_forward.7} parent=5 // pred_region
        %s130 = ssub.s32 %s12, 1
      $region12: #{ctm_forward.7} parent=5 // pred_fallthru
        _
      %p131 = scmp.lt.s32.totalorder %s12, 2
      // Predicated region
      $region13: #{ctm_forward.7} parent=5 // pred_check
        %p132 = pneg %p131
      $region14: #{ctm_forward.7} parent=5 // pred_check_branch
        %134 = sbr.rel (%p132) target = $region16
      $region15: #{ctm_forward.7} parent=5 // pred_region
        // Predicated region
        $region17: #{ctm_forward.7} parent=15 // pred_check
          %p135 = pneg %p32
        $region18: #{ctm_forward.7} parent=15 // pred_check_branch
          %137 = sbr.rel (%p135) target = $region20
        $region19: #{ctm_forward.7} parent=15 // pred_region
          %p138 = scmp.lt.s32.totalorder %s12, 1
          %s139 = scalar_select %p138, %s12, 1
          %s140 = smul.addr %s139, 4
          %s141 = smul.addr %s140, 8
          %s142 = scalar_lea.vmem %s0, %s141
        $region20: #{ctm_forward.7} parent=15 // pred_fallthru
          _
        // Predicated region
        $region21: #{ctm_forward.7} parent=15 // pred_check
          %p143 = pneg %p58
        $region22: #{ctm_forward.7} parent=15 // pred_check_branch
          %145 = sbr.rel (%p143) target = $region24
        $region23: #{ctm_forward.7} parent=15 // pred_region
          %p146 = scmp.lt.s32.totalorder %s12, 1
          %s147 = scalar_select %p146, %s12, 1
          %s148 = scalar_lea.vmem %s1, %s147
        $region24: #{ctm_forward.7} parent=15 // pred_fallthru
          _
        // Predicated region
        $region25: #{ctm_forward.7} parent=15 // pred_check
          %p149 = pneg %p84
        $region26: #{ctm_forward.7} parent=15 // pred_check_branch
          %151 = sbr.rel (%p149) target = $region28
        $region27: #{ctm_forward.7} parent=15 // pred_region
          %p152 = scmp.lt.s32.totalorder %s12, 1
          %s153 = scalar_select %p152, %s12, 1
          %s154 = scalar_lea.vmem %s2, %s153
        $region28: #{ctm_forward.7} parent=15 // pred_fallthru
          _
      $region16: #{ctm_forward.7} parent=5 // pred_fallthru
        _
      %p155 = scmp.le.s32.totalorder 1, %s12
      %p156 = scmp.lt.s32.totalorder %s12, 3
      %p157 = pnand %p155, %p156
      %p158 = pneg %p157
      // Predicated region
      $region29: #{ctm_forward.7} parent=5 // pred_check
        _
      $region30: #{ctm_forward.7} parent=5 // pred_check_branch
        %160 = sbr.rel (%p157) target = $region32
      $region31: #{ctm_forward.7} parent=5 // pred_region
        %s161 = ssub.s32 %s12, 1
        %p162 = scmp.lt.s32.totalorder %s17, 1
        %s163 = scalar_select %p162, %s17, 1
        %s164 = smul.addr %s163, 4
        %s165 = smul.addr %s164, 8
        %s166 = scalar_lea.vmem %s0, %s165
        %p167 = pneg %p38
        %p168 = pneg %p35
        %p169 = scmp.lt.s32.totalorder %s17, 1
        %s170 = scalar_select %p169, %s17, 1
        %s171 = scalar_lea.vmem %s1, %s170
        %p172 = pneg %p64
        %p173 = pneg %p61
        %p174 = scmp.lt.s32.totalorder %s17, 1
        %s175 = scalar_select %p174, %s17, 1
        %s176 = scalar_lea.vmem %s2, %s175
        %p177 = pneg %p90
        %p178 = pneg %p87
        %p179 = pneg %p116
        %p180 = pneg %p113
        %s181 = sand.u32 %s103, 1
        %s182 = scalar_lea.sflag [#allocation3], %s181
        %s183 = sand.u32 %s103, 1
        %s184 = smul.addr %s183, 8
        %s185 = scalar_lea.vmem [#allocation2], %s184
        %p186 = scmp.lt.s32.totalorder %s17, 1
        %s187 = scalar_select %p186, %s17, 1
        %s188 = smul.addr %s187, 4
        %s189 = smul.addr %s188, 8
        %s190 = scalar_lea.vmem %s0, %s189
        %p191 = scmp.lt.s32.totalorder %s17, 1
        %s192 = scalar_select %p191, %s17, 1
        %s193 = scalar_lea.vmem %s1, %s192
        %p194 = scmp.lt.s32.totalorder %s17, 1
        %s195 = scalar_select %p194, %s17, 1
        %s196 = scalar_lea.vmem %s2, %s195
        %v197 = vld [vmem:[%s190] sm:$0xff]
        %v198 = vld [vmem:[%s190 + $0x8] sm:$0xff]
        %v199 = vld [vmem:[%s190 + $0x10] sm:$0xff]
        %v200 = vld [vmem:[%s190 + $0x18] sm:$0xff]
        %v201 = vld [vmem:[%s193] sm:$0x1]
        %v202 = vld [vmem:[%s196] sm:$0x1]
        %v203 = vlaneseq
        %v204 = vshrl.u32 %v203, 7
        %v205 = vlaneseq
        %v206 = vshrl.u32 %v205, 7
        %v207 = vsub.s32 0, %v206
        %v208 = vrot.slane %v201, %v207
        %vm209 = vcmp.eq.s32.totalorder %v204, %v208
        %v210 = vsel %vm209, 1, 0
        %v211 = vcvt.s32.f32 %v210
        %v213 = vlaneseq
        %v214 = vshrl.u32 %v213, 7
        %v215 = vsub.s32 0, %v214
        %v216 = vrot.slane %v202, %v215
        %v218 = vmul.f32 %v211, %v216
        %vm219 = vcmask 261120
        %v220 = vsel %vm219, %v218, 0.0
        %221 = vadd.xlane.f32.xlu0 %v220
        %v222 = vpop.xlane.xlu0 %221
        %v223 = vadd.f32 %v222, 1e-06
        %v225 = vsel %vm219, %v218, 0
        %227 = vmatprep.subr.mxu0 0.0
        %228 = vmatpush1.msra.mxu0 0.0
        %229 = vmatprep.subr.mxu0 0.0
        %230 = vmatpush1.msra.mxu0 0.0
        %231 = vmatprep.subr.mxu0 0.0
        %232 = vmatpush1.msra.mxu0 0.0
        %233 = vmatprep.subr.mxu0 0.0
        %234 = vmatpush1.msra.mxu0 0.0
        %235 = vmatprep.subr.mxu0 0.0
        %236 = vmatpush1.msra.mxu0 0.0
        %237 = vmatprep.subr.mxu0 0.0
        %238 = vmatpush1.msra.mxu0 0.0
        %239 = vmatprep.subr.mxu0 0.0
        %240 = vmatpush1.msra.mxu0 0.0
        %241 = vmatprep.subr.mxu0 0.0
        %242 = vmatpush1.msra.mxu0 0.0
        %243 = vmatprep.subr.mxu0 0.0
        %244 = vmatpush1.msra.mxu0 0.0
        %245 = vmatprep.subr.mxu0 0.0
        %246 = vmatpush1.msra.mxu0 0.0
        %247 = vmatprep.subr.mxu0 0.0
        %248 = vmatpush1.msra.mxu0 0.0
        %249 = vmatprep.subr.mxu0 0.0
        %250 = vmatpush1.msra.mxu0 0.0
        %251 = vmatprep.subr.mxu0 0.0
        %252 = vmatpush1.msra.mxu0 %v200
        %253 = vmatprep.subr.mxu0 0.0
        %254 = vmatpush1.msra.mxu0 %v199
        %255 = vmatprep.subr.mxu0 0.0
        %256 = vmatpush1.msra.mxu0 %v198
        %257 = vmatprep.subr.mxu0 0.0
        %258 = vmatpush1.msra.mxu0 %v197
        %259 = vmatprep.subr.mxu0 0.0
        %260 = vmatpush2.msra.mxu0 0.0
        %261 = vmatprep.subr.mxu0 0.0
        %262 = vmatpush2.msra.mxu0 0.0
        %263 = vmatprep.subr.mxu0 0.0
        %264 = vmatpush2.msra.mxu0 0.0
        %265 = vmatprep.subr.mxu0 0.0
        %266 = vmatpush2.msra.mxu0 0.0
        %267 = vmatprep.subr.mxu0 0.0
        %268 = vmatpush2.msra.mxu0 0.0
        %269 = vmatprep.subr.mxu0 0.0
        %270 = vmatpush2.msra.mxu0 0.0
        %271 = vmatprep.subr.mxu0 0.0
        %272 = vmatpush2.msra.mxu0 0.0
        %273 = vmatprep.subr.mxu0 0.0
        %274 = vmatpush2.msra.mxu0 0.0
        %275 = vmatprep.subr.mxu0 0.0
        %276 = vmatpush2.msra.mxu0 0.0
        %277 = vmatprep.subr.mxu0 0.0
        %278 = vmatpush2.msra.mxu0 0.0
        %279 = vmatprep.subr.mxu0 0.0
        %280 = vmatpush2.msra.mxu0 0.0
        %281 = vmatprep.subr.mxu0 0.0
        %282 = vmatpush2.msra.mxu0 0.0
        %283 = vmatprep.subr.mxu0 0.0
        %284 = vmatpush2.msra.mxu0 0.0
        %285 = vmatprep.subr.mxu0 0.0
        %286 = vmatpush2.msra.mxu0 0.0
        %287 = vmatprep.subr.mxu0 0.0
        %288 = vmatpush2.msra.mxu0 0.0
        %289 = vmatprep.subr.mxu0 0.0
        %290 = vmatpush2.msra.mxu0 0.0
        %291 = vmatprep.mubr.f32.mxu0 0.0
        %292 = vmatmul.mubr.f32.gmra.mxu0 %v225
        %v293 = vpop.f32.mrf.mxu0
        %v294 = vadd.f32 0.0, %v293
        %v295 = vpop.f32.mrf.mxu0
        %296 = vdwg.mxu0
        %v297 = vrcp.pop %v223
        %v298 = vmul.f32 %v294, %v297
        %299 = vst.msk [vmem:[%s185] sm:$0xff] %vm219, %v298
        %s300 = sand.u32 %s103, 1
        %s301 = scalar_lea.sflag [#allocation3], %s300
        %s302 = sand.u32 %s103, 1
        %s303 = smul.addr %s302, 8
        %s304 = scalar_lea.vmem [#allocation2], %s303
        // Predicated region
        $region33: #{ctm_forward.7} parent=31 // pred_check
          %p305 = pneg %p113
        $region34: #{ctm_forward.7} parent=31 // pred_check_branch
          %307 = sbr.rel (%p305) target = $region36
        $region35: #{ctm_forward.7} parent=31 // pred_region
          %s309 = ssub.s32 128, 128
          %310 = vsyncadd %s301, %s309
          %s311 = smul.addr %s17, 128
          %s312 = scalar_lea.hbm %s3, %s311
          %s314 = sshll.u32 %s304, 4
          %s315 = int_to_ptr.vmem [resolvable:$true] %s314
          %317 = dma.vmem_to_hbm [thread:$0]  %s315, 128, %s312, %s301
        $region36: #{ctm_forward.7} parent=31 // pred_fallthru
          _
      $region32: #{ctm_forward.7} parent=5 // pred_fallthru
        _
      %p318 = scmp.le.s32.totalorder 2, %s12
      // Predicated region
      $region37: #{ctm_forward.7} parent=5 // pred_check
        %p319 = pneg %p318
      $region38: #{ctm_forward.7} parent=5 // pred_check_branch
        %321 = sbr.rel (%p319) target = $region40
      $region39: #{ctm_forward.7} parent=5 // pred_region
        %s322 = ssub.s32 %s12, 2
        // Predicated region
        $region41: #{ctm_forward.7} parent=39 // pred_check
          %p323 = pneg %p119
        $region42: #{ctm_forward.7} parent=39 // pred_check_branch
          %325 = sbr.rel (%p323) target = $region44
        $region43: #{ctm_forward.7} parent=39 // pred_region
          %s326 = sand.u32 %s104, 1
          %s327 = scalar_lea.sflag [#allocation3], %s326
          %s328 = sand.u32 %s104, 1
          %s329 = smul.addr %s328, 8
          %s330 = scalar_lea.vmem [#allocation2], %s329
          %331 = dma.done %s327, 128
        $region44: #{ctm_forward.7} parent=39 // pred_fallthru
          _
      $region40: #{ctm_forward.7} parent=5 // pred_fallthru
        _
    $region6: #{ctm_forward.7} parent=1 // loop_footer
      %s16 = sadd.s32 1, %s12
    $region7: #{ctm_forward.7} parent=1 // loop_footer_branch
      %11 = sbr.rel target = $region3
    $region8: #{ctm_forward.7} parent=1 // loop_exit
      _
    %332 = vsyncpa [#allocation3], 1
    %s333 = scalar_lea.sflag [#allocation3], 1
    %334 = vsyncpa %s333, 1

</llo_original>
